<compile_context>
chip_gen: v6e
topology: v6e:2x2x1
jax: 0.10.0
libtpu: 0.0.40
codegen_flags: <defaults>
</compile_context>

<pallas_src>
import functools

import jax
import jax.numpy as jnp
from jax import lax
from jax.experimental import pallas as pl
from jax.experimental.pallas import tpu as pltpu


# ------------------------------ in-kernel math -------------------------------

def _layer_norm(x, g, b, eps=1e-5):
    mu = jnp.mean(x, axis=-1, keepdims=True)
    var = jnp.mean((x - mu) ** 2, axis=-1, keepdims=True)
    return (x - mu) * lax.rsqrt(var + eps) * g + b


def _gelu_tanh(x):
    # nn.GELU(): tanh approximation (EUP path).
    # TODO(synk): exact-erf nn.GELU differs by <~1e-3 abs.
    c = 0.7978845608028654  # sqrt(2/pi)
    return 0.5 * x * (1.0 + jnp.tanh(c * (x + 0.044715 * x * x * x)))


def _gelu_enformer(x):
    # enformer-pytorch GELU: x * sigmoid(1.702 * x)
    return x * jax.nn.sigmoid(1.702 * x)


def _softplus(x):
    # Numerically-stable softplus.  log1p would be marginally more accurate
    # for tiny arguments but plain log is used for guaranteed Mosaic lowering
    # (abs error bounded by f32 eps, immaterial here).
    return jnp.maximum(x, 0.0) + jnp.log(1.0 + jnp.exp(-jnp.abs(x)))


def _ffn_residual(x, g, b, w1, b1, w2, b2):
    # Residual(LayerNorm -> Linear -> (Dropout) -> ReLU -> Linear -> (Dropout))
    f32 = jnp.float32
    h = _layer_norm(x, g, b)
    h = jnp.dot(h.astype(w1.dtype), w1, preferred_element_type=f32) + b1
    h = jnp.maximum(h, 0.0)
    h = jnp.dot(h.astype(w2.dtype), w2, preferred_element_type=f32) + b2
    return x + h


def _split_heads(t, heads, width):
    # [n, heads*width] -> [heads, n, width] via static lane slices + a leading
    # axis concat (avoids relying on a lane-splitting reshape/transpose).
    return jnp.stack([t[:, h * width:(h + 1) * width] for h in range(heads)],
                     axis=0)


# ---------------------------- fused forward kernel ---------------------------

def _fused_forward_kernel(x_ref, y0_ref, vec_ref, cvec_ref,
                          res_proj_ref, wx_qv_ref, wy_kv_ref, w_o_ref,
                          w_d2_ref, w_2d_ref, w_dc_ref, gate_w_ref, os1_w1_ref,
                          logits_ref, rbp_ref,
                          *, heads, dk, dv, dim, scale, trim, tgt, rows):
    f32, bf16 = jnp.float32, jnp.bfloat16
    D = dim
    hk, hv = heads * dk, heads * dv

    x_dna = x_ref[0]                                      # [n1, 4]  f32
    y0 = y0_ref[0]                                        # [n2, Din] f32

    def vrow(name, width, off=0):
        r = rows[name] + off
        return vec_ref[r:r + 1, :width]                   # [1, width] f32

    # --- Enformer backbone stub: pointwise stem (VPU 4-term sum) + head ------
    # TODO(synk): the real Enformer trunk is external to the reference module;
    # stubbed with a deterministic per-position projection giving (logits0, x0).
    x0 = x_dna[:, 0:1] * vrow('stem', D, 0)
    for c in range(1, x_dna.shape[1]):
        x0 = x0 + x_dna[:, c:c + 1] * vrow('stem', D, c)                # [n1, D]

    x0c = x0[trim:trim + tgt, :]                                        # [tgt, D]
    logits0 = _softplus(
        jnp.dot(x0c.astype(bf16), w_dc_ref[0],
                preferred_element_type=f32) + cvec_ref[0:1, :])         # [tgt, Cp]

    # --- CrossFormerLayer (first_layer=True, exchange=True) ------------------
    # TODO(synk): config.cross_pos relative-position branch not implemented;
    # running with cross_pos=False, attn_mask=None.
    y = jnp.dot(y0.astype(bf16), res_proj_ref[...],
                preferred_element_type=f32)                              # [n2, D]
    x1 = _layer_norm(x0, vrow('ln_x_g', D), vrow('ln_x_b', D))
    y1 = _layer_norm(y, vrow('ln_y_g', D), vrow('ln_y_b', D))

    # Packed q|v1 and k|v2 projections: two wide 2-D MXU dots.
    qv = jnp.dot(x1.astype(bf16), wx_qv_ref[...],
                 preferred_element_type=f32)                             # [n1, hk+hv]
    kv = jnp.dot(y1.astype(bf16), wy_kv_ref[...],
                 preferred_element_type=f32)                             # [n2, hk+hv]

    q_h = _split_heads(qv[:, :hk] * scale, heads, dk).astype(bf16)       # [H,n1,dk]
    k_h = _split_heads(kv[:, :hk], heads, dk).astype(bf16)               # [H,n2,dk]
    v1_h = _split_heads(qv[:, hk:hk + hv], heads, dv).astype(bf16)       # [H,n1,dv]
    v2_h = _split_heads(kv[:, hk:hk + hv], heads, dv).astype(bf16)       # [H,n2,dv]

    scores = jnp.einsum('hik,hjk->hij', q_h, k_h,
                        preferred_element_type=f32)                      # [H,n1,n2]
    m = jnp.max(scores, axis=-1, keepdims=True)
    e = jnp.exp(scores - m)
    s = jnp.sum(e, axis=-1, keepdims=True)
    attn = e * pl.reciprocal(s, approx=True)                             # f32

    # Head merge folded into the output projections (batched, no per-head loop):
    #   concat_h(attn_h @ v2_h) @ Wo1 == sum_h attn_h @ (v2_h @ Wo1[h])
    p2 = jnp.einsum('hjd,hde->hje', v2_h, w_o_ref[0],
                    preferred_element_type=f32)                          # [H,n2,D]
    p1 = jnp.einsum('hid,hde->hie', v1_h, w_o_ref[1],
                    preferred_element_type=f32)                          # [H,n1,D]

    # x-branch cropped EARLY: rows outside [trim, trim+tgt) never reach output.
    attn_x = attn[:, trim:trim + tgt, :].astype(bf16)                    # [H,tgt,n2]
    attn_t = jnp.swapaxes(attn, 1, 2).astype(bf16)                       # [H,n2,n1]

    x2 = jnp.sum(jnp.einsum('hij,hje->hie', attn_x, p2.astype(bf16),
                            preferred_element_type=f32), axis=0) \
        + vrow('b_o1', D)                                                # [tgt, D]
    y2 = jnp.sum(jnp.einsum('hji,hie->hje', attn_t, p1.astype(bf16),
                            preferred_element_type=f32), axis=0) \
        + vrow('b_o2', D)                                                # [n2, D]

    x4 = x0c + x2                                   # x + dropout(to_out1(out1))
    y4 = y + y2                                     # dropout(to_out2(out2)) + y

    x5 = _ffn_residual(x4, vrow('fx_ln_g', D), vrow('fx_ln_b', D),
                       w_d2_ref[0], vrow('fx_b1', 2 * D),
                       w_2d_ref[0], vrow('fx_b2', D))                    # [tgt, D]
    y5 = _ffn_residual(y4, vrow('fy_ln_g', D), vrow('fy_ln_b', D),
                       w_d2_ref[1], vrow('fy_b1', 2 * D),
                       w_2d_ref[1], vrow('fy_b2', D))                    # [n2, D]

    # --- crop_final (already applied) + final_pointwise (eval BN folded) -----
    xb = _gelu_enformer(x5 * vrow('bn_scale', D) + vrow('bn_bias', D))
    xp = _gelu_enformer(
        jnp.dot(xb.astype(bf16), w_d2_ref[2], preferred_element_type=f32)
        + vrow('conv_b', 2 * D))                                         # [tgt, 2D]

    # --- out_stage3 + DynamicGatedFusion3D with logits0 (res_out=True) -------
    h3 = _gelu_tanh(jnp.dot(xp.astype(bf16), w_2d_ref[2],
                            preferred_element_type=f32) + vrow('os3_b1', D))
    logits1 = jnp.dot(h3.astype(bf16), w_dc_ref[1],
                      preferred_element_type=f32) + cvec_ref[1:2, :]     # [tgt, Cp]
    z = (jnp.dot(logits0.astype(bf16), gate_w_ref[0],
                 preferred_element_type=f32)
         + jnp.dot(logits1.astype(bf16), gate_w_ref[1],
                   preferred_element_type=f32)
         + cvec_ref[2:3, :])
    gate = jax.nn.sigmoid(z)
    logits_ref[0] = gate * logits0 + (1.0 - gate) * logits1              # [tgt, Cp]

    # --- out_stage1(y5).squeeze(-1): final 1-wide projection done on the VPU
    # so the rbp output can be stored lane-dense as [1, n2] ---------------------
    h1 = _gelu_tanh(jnp.dot(y5.astype(bf16), os1_w1_ref[...],
                            preferred_element_type=f32)
                    + vrow('os1_b1', D // 2))                            # [n2, D/2]
    rbp = jnp.sum(h1 * vrow('os1_w2t', D // 2), axis=-1)[None, :] \
        + vrow('os1_b2', 1)                                              # [1, n2]
    rbp_ref[0] = rbp


# ------------------------------- weight packing -------------------------------

_PACKED_ORDER = ('vecs', 'cvecs', 'res_proj_w', 'wx_qv', 'wy_kv', 'w_o_h',
                 'w_d_2d', 'w_2d_d', 'w_d_c', 'gate_w', 'os1_w1')


def pack_params(p, cfg):
    """Collapse the per-layer parameters into a few lane-dense operands."""
    D, H = cfg['dim'], cfg['heads']
    dv = D // H
    C = cfg['num_label']
    Cp = ((C + 127) // 128) * 128            # pad labels to a lane multiple
    W = 2 * D
    bf16 = jnp.bfloat16

    # Small-vector slab: one f32 [rows, 2D] array, static row slices in-kernel.
    order = [
        ('stem',     p['enf_stem_w']),                    # 4 rows x D
        ('ln_x_g',   p['ln_x_g']),  ('ln_x_b',  p['ln_x_b']),
        ('ln_y_g',   p['ln_y_g']),  ('ln_y_b',  p['ln_y_b']),
        ('b_o1',     p['b_o1']),    ('b_o2',    p['b_o2']),
        ('fx_ln_g',  p['fx_ln_g']), ('fx_ln_b', p['fx_ln_b']),
        ('fx_b1',    p['fx_b1']),   ('fx_b2',   p['fx_b2']),
        ('fy_ln_g',  p['fy_ln_g']), ('fy_ln_b', p['fy_ln_b']),
        ('fy_b1',    p['fy_b1']),   ('fy_b2',   p['fy_b2']),
        ('bn_scale', p['bn_scale']), ('bn_bias', p['bn_bias']),
        ('conv_b',   p['conv_b']),  ('os3_b1',  p['os3_b1']),
        ('os1_b1',   p['os1_b1']),  ('os1_w2t', p['os1_w2'].T),
        ('os1_b2',   p['os1_b2']),
    ]
    rows, slab_rows, r = {}, [], 0
    for name, arr in order:
        a = jnp.asarray(arr, jnp.float32)
        a = a.reshape(1, -1) if a.ndim == 1 else a.reshape(-1, a.shape[-1])
        a = jnp.pad(a, ((0, 0), (0, W - a.shape[-1])))
        rows[name] = r
        r += a.shape[0]
        slab_rows.append(a)
    vecs = jnp.concatenate(slab_rows, axis=0)

    def padc(a):
        a = jnp.asarray(a, jnp.float32)
        return jnp.pad(a, ((0, 0), (0, Cp - a.shape[-1])))

    def pad2(a):
        a = jnp.asarray(a, jnp.float32)
        return jnp.pad(a, ((0, Cp - a.shape[0]), (0, Cp - a.shape[1])))

    cvecs = jnp.concatenate([padc(p['enf_head_b'].reshape(1, -1)),
                             padc(p['os3_b2'].reshape(1, -1)),
                             padc(p['gate_b'].reshape(1, -1))], axis=0)  # [3, Cp]

    packed = {
        'cell_line_emb': p['cell_line_emb'],
        'vecs': vecs,
        'cvecs': cvecs,
        'res_proj_w': p['res_proj_w'].astype(bf16),
        # packed q|v1 and k|v2 projections (wide lanes, one dot each)
        'wx_qv': jnp.concatenate([p['w_q'], p['w_v1']], axis=1).astype(bf16),
        'wy_kv': jnp.concatenate([p['w_k'], p['w_v2']], axis=1).astype(bf16),
        'w_o_h': jnp.stack([p['w_o1'].reshape(H, dv, D),
                            p['w_o2'].reshape(H, dv, D)]).astype(bf16),
        'w_d_2d': jnp.stack([p['fx_w1'], p['fy_w1'], p['conv_w']]).astype(bf16),
        'w_2d_d': jnp.stack([p['fx_w2'], p['fy_w2'], p['os3_w1']]).astype(bf16),
        'w_d_c': jnp.stack([padc(p['enf_head_w']),
                            padc(p['os3_w2'])]).astype(bf16),
        'gate_w': jnp.stack([pad2(p['gate_w0']),
                             pad2(p['gate_w1'])]).astype(bf16),
        'os1_w1': p['os1_w1'].astype(bf16),
    }
    return packed, rows


# --------------------------------- wrapper -----------------------------------

def rbp_xformer_forward(packed, x_dna, esm2_reps, cell_line_tensor, *, cfg,
                        vec_rows):
    D, H, dk = cfg['dim'], cfg['heads'], cfg['attn_dim_key']
    dv = D // H
    C, tgt = cfg['num_label'], cfg['target_length']
    Cp = packed['w_d_c'].shape[-1]
    B, n1 = x_dna.shape[0], x_dna.shape[1]
    n2 = esm2_reps.shape[1]
    din = esm2_reps.shape[-1] + packed['cell_line_emb'].shape[-1]
    trim = (n1 - tgt) // 2

    # Host-side glue: embedding gather + concat (no per-tile BlockSpec form).
    cell_emb = jnp.take(packed['cell_line_emb'], cell_line_tensor, axis=0)
    y0 = jnp.concatenate([esm2_reps, cell_emb], axis=-1)             # [B,n2,Din]

    weights = [packed[name] for name in _PACKED_ORDER]

    def const_spec(a):
        return pl.BlockSpec(a.shape, lambda b, n=a.ndim: (0,) * n)

    kernel = functools.partial(_fused_forward_kernel, heads=H, dk=dk, dv=dv,
                               dim=D, scale=dk ** -0.5, trim=trim, tgt=tgt,
                               rows=vec_rows)

    logits_p, rbp = pl.pallas_call(
        kernel,
        grid=(B,),
        in_specs=([pl.BlockSpec((1, n1, x_dna.shape[-1]), lambda b: (b, 0, 0)),
                   pl.BlockSpec((1, n2, din), lambda b: (b, 0, 0))]
                  + [const_spec(a) for a in weights]),
        out_specs=(pl.BlockSpec((1, tgt, Cp), lambda b: (b, 0, 0)),
                   pl.BlockSpec((1, 1, n2), lambda b: (b, 0, 0))),
        out_shape=(jax.ShapeDtypeStruct((B, tgt, Cp), jnp.float32),
                   jax.ShapeDtypeStruct((B, 1, n2), jnp.float32)),
        compiler_params=pltpu.CompilerParams(
            dimension_semantics=("parallel",)),   # v7x: batch over both TCs
    )(x_dna, y0, *weights)

    # Slice the lane-padded label dim back to num_label; rbp stored lane-dense.
    return logits_p[:, :, :C], rbp.reshape(B, n2)


# ---------------------------------- params -----------------------------------

def init_params(key, cfg):
    D, H, dk = cfg['dim'], cfg['heads'], cfg['attn_dim_key']
    dv = D // H
    hk, hv = H * dk, H * dv
    din = cfg['esm_dim'] + cfg['cell_line_dim']
    C = cfg['num_label']
    keys = iter(jax.random.split(key, 32))

    def nrm(shape, scale=0.05):
        return scale * jax.random.normal(next(keys), shape, dtype=jnp.float32)

    def zeros(shape):
        return jnp.zeros(shape, jnp.float32)

    def ones(shape):
        return jnp.ones(shape, jnp.float32)

    p = {}
    p['cell_line_emb'] = nrm((cfg['n_cell_line'], cfg['cell_line_dim']), 1.0)
    # TODO(synk): Enformer backbone params are external to the reference; stub.
    p['enf_stem_w'] = nrm((4, D))
    p['enf_head_w'] = nrm((D, C))
    p['enf_head_b'] = zeros((1, C))
    # CrossFormerLayer (first_layer=True)
    p['res_proj_w'] = nrm((din, D))
    p['ln_x_g'] = ones((1, D)); p['ln_x_b'] = zeros((1, D))
    p['ln_y_g'] = ones((1, D)); p['ln_y_b'] = zeros((1, D))
    p['w_q'] = nrm((D, hk)); p['w_k'] = nrm((D, hk))
    p['w_v1'] = nrm((D, hv)); p['w_v2'] = nrm((D, hv))
    p['w_o1'] = nrm((hv, D)); p['b_o1'] = zeros((1, D))
    # NOTE: the PyTorch reference zero-inits to_out2 and OutStage3; small
    # nonzero values are used here so those code paths are exercised.
    p['w_o2'] = nrm((hv, D)); p['b_o2'] = zeros((1, D))
    p['fx_ln_g'] = ones((1, D)); p['fx_ln_b'] = zeros((1, D))
    p['fx_w1'] = nrm((D, 2 * D)); p['fx_b1'] = zeros((1, 2 * D))
    p['fx_w2'] = nrm((2 * D, D)); p['fx_b2'] = zeros((1, D))
    p['fy_ln_g'] = ones((1, D)); p['fy_ln_b'] = zeros((1, D))
    p['fy_w1'] = nrm((D, 2 * D)); p['fy_b1'] = zeros((1, 2 * D))
    p['fy_w2'] = nrm((2 * D, D)); p['fy_b2'] = zeros((1, D))
    # final_pointwise: eval-mode BatchNorm1d folded (running mean=0, var=1).
    # TODO(synk): fold real trained running stats into bn_scale/bn_bias if any.
    p['bn_scale'] = jnp.full((1, D), 1.0 / (1.0 + 1e-5) ** 0.5, jnp.float32)
    p['bn_bias'] = zeros((1, D))
    p['conv_w'] = nrm((D, 2 * D)); p['conv_b'] = zeros((1, 2 * D))
    # OutStage3
    p['os3_w1'] = nrm((2 * D, D)); p['os3_b1'] = zeros((1, D))
    p['os3_w2'] = nrm((D, C)); p['os3_b2'] = zeros((1, C))
    # DynamicGatedFusion3D(dim=166): Linear(2C, C) split into two C x C halves
    p['gate_w0'] = nrm((C, C)); p['gate_w1'] = nrm((C, C)); p['gate_b'] = zeros((1, C))
    # OutStage1
    p['os1_w1'] = nrm((D, D // 2)); p['os1_b1'] = zeros((1, D // 2))
    p['os1_w2'] = nrm((D // 2, 1)); p['os1_b2'] = zeros((1, 1))
    return p


# ----------------------------------- main -------------------------------------

if __name__ == "__main__":
    cfg = dict(dim=32, heads=4, attn_dim_key=8, esm_dim=24, cell_line_dim=8,
               n_cell_line=5, target_length=8, num_label=166)
    B, n1, n2 = 2, 16, 8

    key = jax.random.PRNGKey(0)
    kp, kx, ke, kc = jax.random.split(key, 4)
    params = init_params(kp, cfg)
    packed, vec_rows = pack_params(params, cfg)

    x_dna = jax.random.uniform(kx, (B, n1, 4), dtype=jnp.float32)
    esm2_reps = jax.random.normal(ke, (B, n2, cfg['esm_dim']), dtype=jnp.float32)
    cell_line_tensor = jax.random.randint(kc, (B, n2), 0, cfg['n_cell_line'])

    fwd = jax.jit(functools.partial(rbp_xformer_forward, cfg=cfg,
                                    vec_rows=vec_rows))
    logits, rbp_scores = fwd(packed, x_dna, esm2_reps, cell_line_tensor)
    jax.block_until_ready((logits, rbp_scores))

    assert logits.shape == (B, cfg['target_length'], cfg['num_label'])
    assert rbp_scores.shape == (B, n2)
    assert bool(jnp.all(jnp.isfinite(logits)))
    assert bool(jnp.all(jnp.isfinite(rbp_scores)))
    print("KERNEL_OK")
</pallas_src>

<mosaic_0001>
module attributes {stable_mosaic.version = 11 : i64} {
  func.func @_fused_forward_kernel(%arg0: i32, %arg1: memref<1x16x4xf32, #tpu.memory_space<vmem>>, %arg2: memref<1x8x32xf32, #tpu.memory_space<vmem>>, %arg3: memref<25x64xf32, #tpu.memory_space<vmem>>, %arg4: memref<3x256xf32, #tpu.memory_space<vmem>>, %arg5: memref<32x32xbf16, #tpu.memory_space<vmem>>, %arg6: memref<32x64xbf16, #tpu.memory_space<vmem>>, %arg7: memref<32x64xbf16, #tpu.memory_space<vmem>>, %arg8: memref<2x4x8x32xbf16, #tpu.memory_space<vmem>>, %arg9: memref<3x32x64xbf16, #tpu.memory_space<vmem>>, %arg10: memref<3x64x32xbf16, #tpu.memory_space<vmem>>, %arg11: memref<2x32x256xbf16, #tpu.memory_space<vmem>>, %arg12: memref<2x256x256xbf16, #tpu.memory_space<vmem>>, %arg13: memref<32x16xbf16, #tpu.memory_space<vmem>>, %arg14: memref<1x8x256xf32, #tpu.memory_space<vmem>>, %arg15: memref<1x1x8xf32, #tpu.memory_space<vmem>>) attributes {dimension_semantics = [#tpu.dimension_semantics<parallel>], iteration_bounds = array<i64: 2>, scalar_prefetch = 0 : i64, scratch_operands = 0 : i64, tpu.core_type = #tpu.core_type<tc>, window_params = [{transform_indices = @transform_0, window_bounds = array<i64: 1, 16, 4>}, {transform_indices = @transform_1, window_bounds = array<i64: 1, 8, 32>}, {pipeline_mode = #tpu.pipeline_mode<synchronous>, transform_indices = @transform_2, window_bounds = array<i64: 25, 64>}, {pipeline_mode = #tpu.pipeline_mode<synchronous>, transform_indices = @transform_3, window_bounds = array<i64: 3, 256>}, {pipeline_mode = #tpu.pipeline_mode<synchronous>, transform_indices = @transform_4, window_bounds = array<i64: 32, 32>}, {pipeline_mode = #tpu.pipeline_mode<synchronous>, transform_indices = @transform_5, window_bounds = array<i64: 32, 64>}, {pipeline_mode = #tpu.pipeline_mode<synchronous>, transform_indices = @transform_6, window_bounds = array<i64: 32, 64>}, {pipeline_mode = #tpu.pipeline_mode<synchronous>, transform_indices = @transform_7, window_bounds = array<i64: 2, 4, 8, 32>}, {pipeline_mode = #tpu.pipeline_mode<synchronous>, transform_indices = @transform_8, window_bounds = array<i64: 3, 32, 64>}, {pipeline_mode = #tpu.pipeline_mode<synchronous>, transform_indices = @transform_9, window_bounds = array<i64: 3, 64, 32>}, {pipeline_mode = #tpu.pipeline_mode<synchronous>, transform_indices = @transform_10, window_bounds = array<i64: 2, 32, 256>}, {pipeline_mode = #tpu.pipeline_mode<synchronous>, transform_indices = @transform_11, window_bounds = array<i64: 2, 256, 256>}, {pipeline_mode = #tpu.pipeline_mode<synchronous>, transform_indices = @transform_12, window_bounds = array<i64: 32, 16>}, {transform_indices = @transform_13, window_bounds = array<i64: 1, 8, 256>}, {transform_indices = @transform_14, window_bounds = array<i64: 1, 1, 8>}]} {
    %c0 = arith.constant 0 : index
    %c0_0 = arith.constant 0 : index
    %c0_1 = arith.constant 0 : index
    %0 = vector.load %arg1[%c0, %c0_0, %c0_1] : memref<1x16x4xf32, #tpu.memory_space<vmem>>, vector<1x16x4xf32>
    %1 = vector.shape_cast %0 : vector<1x16x4xf32> to vector<16x4xf32>
    %c0_2 = arith.constant 0 : index
    %c0_3 = arith.constant 0 : index
    %c0_4 = arith.constant 0 : index
    %2 = vector.load %arg2[%c0_2, %c0_3, %c0_4] : memref<1x8x32xf32, #tpu.memory_space<vmem>>, vector<1x8x32xf32>
    %3 = vector.shape_cast %2 : vector<1x8x32xf32> to vector<8x32xf32>
    %4 = vector.extract_strided_slice %1 {offsets = [0, 0], sizes = [16, 1], strides = [1, 1]} : vector<16x4xf32> to vector<16x1xf32>
    %c0_5 = arith.constant 0 : index
    %c0_6 = arith.constant 0 : index
    %5 = vector.load %arg3[%c0_5, %c0_6] : memref<25x64xf32, #tpu.memory_space<vmem>>, vector<1x32xf32>
    %6 = vector.broadcast %4 : vector<16x1xf32> to vector<16x32xf32>
    %7 = vector.broadcast %5 : vector<1x32xf32> to vector<16x32xf32>
    %8 = arith.mulf %6, %7 : vector<16x32xf32>
    %9 = vector.extract_strided_slice %1 {offsets = [0, 1], sizes = [16, 1], strides = [1, 1]} : vector<16x4xf32> to vector<16x1xf32>
    %c1 = arith.constant 1 : index
    %c0_7 = arith.constant 0 : index
    %10 = vector.load %arg3[%c1, %c0_7] : memref<25x64xf32, #tpu.memory_space<vmem>>, vector<1x32xf32>
    %11 = vector.broadcast %9 : vector<16x1xf32> to vector<16x32xf32>
    %12 = vector.broadcast %10 : vector<1x32xf32> to vector<16x32xf32>
    %13 = arith.mulf %11, %12 : vector<16x32xf32>
    %14 = arith.addf %8, %13 : vector<16x32xf32>
    %15 = vector.extract_strided_slice %1 {offsets = [0, 2], sizes = [16, 1], strides = [1, 1]} : vector<16x4xf32> to vector<16x1xf32>
    %c2 = arith.constant 2 : index
    %c0_8 = arith.constant 0 : index
    %16 = vector.load %arg3[%c2, %c0_8] : memref<25x64xf32, #tpu.memory_space<vmem>>, vector<1x32xf32>
    %17 = vector.broadcast %15 : vector<16x1xf32> to vector<16x32xf32>
    %18 = vector.broadcast %16 : vector<1x32xf32> to vector<16x32xf32>
    %19 = arith.mulf %17, %18 : vector<16x32xf32>
    %20 = arith.addf %14, %19 : vector<16x32xf32>
    %21 = vector.extract_strided_slice %1 {offsets = [0, 3], sizes = [16, 1], strides = [1, 1]} : vector<16x4xf32> to vector<16x1xf32>
    %c3 = arith.constant 3 : index
    %c0_9 = arith.constant 0 : index
    %22 = vector.load %arg3[%c3, %c0_9] : memref<25x64xf32, #tpu.memory_space<vmem>>, vector<1x32xf32>
    %23 = vector.broadcast %21 : vector<16x1xf32> to vector<16x32xf32>
    %24 = vector.broadcast %22 : vector<1x32xf32> to vector<16x32xf32>
    %25 = arith.mulf %23, %24 : vector<16x32xf32>
    %26 = arith.addf %20, %25 : vector<16x32xf32>
    %27 = vector.extract_strided_slice %26 {offsets = [4, 0], sizes = [8, 32], strides = [1, 1]} : vector<16x32xf32> to vector<8x32xf32>
    %28 = arith.truncf %27 : vector<8x32xf32> to vector<8x32xbf16>
    %c0_10 = arith.constant 0 : index
    %c0_11 = arith.constant 0 : index
    %c0_12 = arith.constant 0 : index
    %29 = vector.load %arg11[%c0_10, %c0_11, %c0_12] : memref<2x32x256xbf16, #tpu.memory_space<vmem>>, vector<1x32x256xbf16>
    %30 = vector.shape_cast %29 : vector<1x32x256xbf16> to vector<32x256xbf16>
    %cst = arith.constant dense<0.000000e+00> : vector<8x256xf32>
    %31 = tpu.matmul %28, %30, %cst {dimension_numbers = #tpu.dot_dimension_numbers<[1], [0], [0], [1], [0, 0, 1, 1], [], []>} : vector<8x32xbf16>, vector<32x256xbf16>, vector<8x256xf32> -> vector<8x256xf32>
    %c0_13 = arith.constant 0 : index
    %c0_14 = arith.constant 0 : index
    %32 = vector.load %arg4[%c0_13, %c0_14] : memref<3x256xf32, #tpu.memory_space<vmem>>, vector<1x256xf32>
    %33 = vector.broadcast %32 : vector<1x256xf32> to vector<8x256xf32>
    %34 = arith.addf %31, %33 : vector<8x256xf32>
    %cst_15 = arith.constant 0.000000e+00 : f32
    %35 = vector.broadcast %cst_15 : f32 to vector<8x256xf32>
    %36 = arith.maximumf %34, %35 : vector<8x256xf32>
    %37 = math.absf %34 : vector<8x256xf32>
    %cst_16 = arith.constant 0.000000e+00 : f32
    %38 = vector.broadcast %cst_16 : f32 to vector<8x256xf32>
    %39 = arith.subf %38, %37 : vector<8x256xf32>
    %40 = math.exp %39 : vector<8x256xf32>
    %cst_17 = arith.constant 1.000000e+00 : f32
    %41 = vector.broadcast %cst_17 : f32 to vector<8x256xf32>
    %42 = arith.addf %41, %40 : vector<8x256xf32>
    %43 = math.log %42 : vector<8x256xf32>
    %44 = arith.addf %36, %43 : vector<8x256xf32>
    %45 = arith.truncf %3 : vector<8x32xf32> to vector<8x32xbf16>
    %c0_18 = arith.constant 0 : index
    %c0_19 = arith.constant 0 : index
    %46 = vector.load %arg5[%c0_18, %c0_19] : memref<32x32xbf16, #tpu.memory_space<vmem>>, vector<32x32xbf16>
    %cst_20 = arith.constant dense<0.000000e+00> : vector<8x32xf32>
    %47 = tpu.matmul %45, %46, %cst_20 {dimension_numbers = #tpu.dot_dimension_numbers<[1], [0], [0], [1], [0, 0, 1, 1], [], []>} : vector<8x32xbf16>, vector<32x32xbf16>, vector<8x32xf32> -> vector<8x32xf32>
    %c4 = arith.constant 4 : index
    %c0_21 = arith.constant 0 : index
    %48 = vector.load %arg3[%c4, %c0_21] : memref<25x64xf32, #tpu.memory_space<vmem>>, vector<1x32xf32>
    %c5 = arith.constant 5 : index
    %c0_22 = arith.constant 0 : index
    %49 = vector.load %arg3[%c5, %c0_22] : memref<25x64xf32, #tpu.memory_space<vmem>>, vector<1x32xf32>
    %cst_23 = arith.constant dense<0.000000e+00> : vector<16xf32>
    %50 = vector.multi_reduction <add>, %26, %cst_23 [1] : vector<16x32xf32> to vector<16xf32>
    %51 = vector.shape_cast %50 : vector<16xf32> to vector<16x1xf32>
    %cst_24 = arith.constant 3.200000e+01 : f32
    %52 = vector.broadcast %cst_24 : f32 to vector<16x1xf32>
    %53 = arith.divf %51, %52 : vector<16x1xf32>
    %54 = vector.broadcast %53 : vector<16x1xf32> to vector<16x32xf32>
    %55 = arith.subf %26, %54 : vector<16x32xf32>
    %56 = arith.mulf %55, %55 : vector<16x32xf32>
    %cst_25 = arith.constant dense<0.000000e+00> : vector<16xf32>
    %57 = vector.multi_reduction <add>, %56, %cst_25 [1] : vector<16x32xf32> to vector<16xf32>
    %58 = vector.shape_cast %57 : vector<16xf32> to vector<16x1xf32>
    %cst_26 = arith.constant 3.200000e+01 : f32
    %59 = vector.broadcast %cst_26 : f32 to vector<16x1xf32>
    %60 = arith.divf %58, %59 : vector<16x1xf32>
    %61 = vector.broadcast %53 : vector<16x1xf32> to vector<16x32xf32>
    %62 = arith.subf %26, %61 : vector<16x32xf32>
    %cst_27 = arith.constant 9.99999974E-6 : f32
    %63 = vector.broadcast %cst_27 : f32 to vector<16x1xf32>
    %64 = arith.addf %60, %63 : vector<16x1xf32>
    %65 = math.rsqrt %64 : vector<16x1xf32>
    %66 = vector.broadcast %65 : vector<16x1xf32> to vector<16x32xf32>
    %67 = arith.mulf %62, %66 : vector<16x32xf32>
    %68 = vector.broadcast %48 : vector<1x32xf32> to vector<16x32xf32>
    %69 = arith.mulf %67, %68 : vector<16x32xf32>
    %70 = vector.broadcast %49 : vector<1x32xf32> to vector<16x32xf32>
    %71 = arith.addf %69, %70 : vector<16x32xf32>
    %c6 = arith.constant 6 : index
    %c0_28 = arith.constant 0 : index
    %72 = vector.load %arg3[%c6, %c0_28] : memref<25x64xf32, #tpu.memory_space<vmem>>, vector<1x32xf32>
    %c7 = arith.constant 7 : index
    %c0_29 = arith.constant 0 : index
    %73 = vector.load %arg3[%c7, %c0_29] : memref<25x64xf32, #tpu.memory_space<vmem>>, vector<1x32xf32>
    %cst_30 = arith.constant dense<0.000000e+00> : vector<8xf32>
    %74 = vector.multi_reduction <add>, %47, %cst_30 [1] : vector<8x32xf32> to vector<8xf32>
    %75 = vector.shape_cast %74 : vector<8xf32> to vector<8x1xf32>
    %cst_31 = arith.constant 3.200000e+01 : f32
    %76 = vector.broadcast %cst_31 : f32 to vector<8x1xf32>
    %77 = arith.divf %75, %76 : vector<8x1xf32>
    %78 = vector.broadcast %77 : vector<8x1xf32> to vector<8x32xf32>
    %79 = arith.subf %47, %78 : vector<8x32xf32>
    %80 = arith.mulf %79, %79 : vector<8x32xf32>
    %cst_32 = arith.constant dense<0.000000e+00> : vector<8xf32>
    %81 = vector.multi_reduction <add>, %80, %cst_32 [1] : vector<8x32xf32> to vector<8xf32>
    %82 = vector.shape_cast %81 : vector<8xf32> to vector<8x1xf32>
    %cst_33 = arith.constant 3.200000e+01 : f32
    %83 = vector.broadcast %cst_33 : f32 to vector<8x1xf32>
    %84 = arith.divf %82, %83 : vector<8x1xf32>
    %85 = vector.broadcast %77 : vector<8x1xf32> to vector<8x32xf32>
    %86 = arith.subf %47, %85 : vector<8x32xf32>
    %cst_34 = arith.constant 9.99999974E-6 : f32
    %87 = vector.broadcast %cst_34 : f32 to vector<8x1xf32>
    %88 = arith.addf %84, %87 : vector<8x1xf32>
    %89 = math.rsqrt %88 : vector<8x1xf32>
    %90 = vector.broadcast %89 : vector<8x1xf32> to vector<8x32xf32>
    %91 = arith.mulf %86, %90 : vector<8x32xf32>
    %92 = vector.broadcast %72 : vector<1x32xf32> to vector<8x32xf32>
    %93 = arith.mulf %91, %92 : vector<8x32xf32>
    %94 = vector.broadcast %73 : vector<1x32xf32> to vector<8x32xf32>
    %95 = arith.addf %93, %94 : vector<8x32xf32>
    %96 = arith.truncf %71 : vector<16x32xf32> to vector<16x32xbf16>
    %c0_35 = arith.constant 0 : index
    %c0_36 = arith.constant 0 : index
    %97 = vector.load %arg6[%c0_35, %c0_36] : memref<32x64xbf16, #tpu.memory_space<vmem>>, vector<32x64xbf16>
    %cst_37 = arith.constant dense<0.000000e+00> : vector<16x64xf32>
    %98 = tpu.matmul %96, %97, %cst_37 {dimension_numbers = #tpu.dot_dimension_numbers<[1], [0], [0], [1], [0, 0, 1, 1], [], []>} : vector<16x32xbf16>, vector<32x64xbf16>, vector<16x64xf32> -> vector<16x64xf32>
    %99 = arith.truncf %95 : vector<8x32xf32> to vector<8x32xbf16>
    %c0_38 = arith.constant 0 : index
    %c0_39 = arith.constant 0 : index
    %100 = vector.load %arg7[%c0_38, %c0_39] : memref<32x64xbf16, #tpu.memory_space<vmem>>, vector<32x64xbf16>
    %cst_40 = arith.constant dense<0.000000e+00> : vector<8x64xf32>
    %101 = tpu.matmul %99, %100, %cst_40 {dimension_numbers = #tpu.dot_dimension_numbers<[1], [0], [0], [1], [0, 0, 1, 1], [], []>} : vector<8x32xbf16>, vector<32x64xbf16>, vector<8x64xf32> -> vector<8x64xf32>
    %102 = vector.extract_strided_slice %98 {offsets = [0, 0], sizes = [16, 32], strides = [1, 1]} : vector<16x64xf32> to vector<16x32xf32>
    %cst_41 = arith.constant 0.353553385 : f32
    %103 = vector.broadcast %cst_41 : f32 to vector<16x32xf32>
    %104 = arith.mulf %102, %103 : vector<16x32xf32>
    %105 = vector.extract_strided_slice %104 {offsets = [0, 0], sizes = [16, 8], strides = [1, 1]} : vector<16x32xf32> to vector<16x8xf32>
    %106 = vector.extract_strided_slice %104 {offsets = [0, 8], sizes = [16, 8], strides = [1, 1]} : vector<16x32xf32> to vector<16x8xf32>
    %107 = vector.extract_strided_slice %104 {offsets = [0, 16], sizes = [16, 8], strides = [1, 1]} : vector<16x32xf32> to vector<16x8xf32>
    %108 = vector.extract_strided_slice %104 {offsets = [0, 24], sizes = [16, 8], strides = [1, 1]} : vector<16x32xf32> to vector<16x8xf32>
    %109 = vector.shape_cast %105 : vector<16x8xf32> to vector<1x16x8xf32>
    %110 = vector.shape_cast %106 : vector<16x8xf32> to vector<1x16x8xf32>
    %111 = vector.shape_cast %107 : vector<16x8xf32> to vector<1x16x8xf32>
    %112 = vector.shape_cast %108 : vector<16x8xf32> to vector<1x16x8xf32>
    %113 = tpu.concatenate %109, %110, %111, %112 in 0 : vector<1x16x8xf32>, vector<1x16x8xf32>, vector<1x16x8xf32>, vector<1x16x8xf32> -> vector<4x16x8xf32>
    %114 = arith.truncf %113 : vector<4x16x8xf32> to vector<4x16x8xbf16>
    %115 = vector.extract_strided_slice %101 {offsets = [0, 0], sizes = [8, 32], strides = [1, 1]} : vector<8x64xf32> to vector<8x32xf32>
    %116 = vector.extract_strided_slice %115 {offsets = [0, 0], sizes = [8, 8], strides = [1, 1]} : vector<8x32xf32> to vector<8x8xf32>
    %117 = vector.extract_strided_slice %115 {offsets = [0, 8], sizes = [8, 8], strides = [1, 1]} : vector<8x32xf32> to vector<8x8xf32>
    %118 = vector.extract_strided_slice %115 {offsets = [0, 16], sizes = [8, 8], strides = [1, 1]} : vector<8x32xf32> to vector<8x8xf32>
    %119 = vector.extract_strided_slice %115 {offsets = [0, 24], sizes = [8, 8], strides = [1, 1]} : vector<8x32xf32> to vector<8x8xf32>
    %120 = vector.shape_cast %116 : vector<8x8xf32> to vector<1x8x8xf32>
    %121 = vector.shape_cast %117 : vector<8x8xf32> to vector<1x8x8xf32>
    %122 = vector.shape_cast %118 : vector<8x8xf32> to vector<1x8x8xf32>
    %123 = vector.shape_cast %119 : vector<8x8xf32> to vector<1x8x8xf32>
    %124 = tpu.concatenate %120, %121, %122, %123 in 0 : vector<1x8x8xf32>, vector<1x8x8xf32>, vector<1x8x8xf32>, vector<1x8x8xf32> -> vector<4x8x8xf32>
    %125 = arith.truncf %124 : vector<4x8x8xf32> to vector<4x8x8xbf16>
    %126 = vector.extract_strided_slice %98 {offsets = [0, 32], sizes = [16, 32], strides = [1, 1]} : vector<16x64xf32> to vector<16x32xf32>
    %127 = vector.extract_strided_slice %126 {offsets = [0, 0], sizes = [16, 8], strides = [1, 1]} : vector<16x32xf32> to vector<16x8xf32>
    %128 = vector.extract_strided_slice %126 {offsets = [0, 8], sizes = [16, 8], strides = [1, 1]} : vector<16x32xf32> to vector<16x8xf32>
    %129 = vector.extract_strided_slice %126 {offsets = [0, 16], sizes = [16, 8], strides = [1, 1]} : vector<16x32xf32> to vector<16x8xf32>
    %130 = vector.extract_strided_slice %126 {offsets = [0, 24], sizes = [16, 8], strides = [1, 1]} : vector<16x32xf32> to vector<16x8xf32>
    %131 = vector.shape_cast %127 : vector<16x8xf32> to vector<1x16x8xf32>
    %132 = vector.shape_cast %128 : vector<16x8xf32> to vector<1x16x8xf32>
    %133 = vector.shape_cast %129 : vector<16x8xf32> to vector<1x16x8xf32>
    %134 = vector.shape_cast %130 : vector<16x8xf32> to vector<1x16x8xf32>
    %135 = tpu.concatenate %131, %132, %133, %134 in 0 : vector<1x16x8xf32>, vector<1x16x8xf32>, vector<1x16x8xf32>, vector<1x16x8xf32> -> vector<4x16x8xf32>
    %136 = arith.truncf %135 : vector<4x16x8xf32> to vector<4x16x8xbf16>
    %137 = vector.extract_strided_slice %101 {offsets = [0, 32], sizes = [8, 32], strides = [1, 1]} : vector<8x64xf32> to vector<8x32xf32>
    %138 = vector.extract_strided_slice %137 {offsets = [0, 0], sizes = [8, 8], strides = [1, 1]} : vector<8x32xf32> to vector<8x8xf32>
    %139 = vector.extract_strided_slice %137 {offsets = [0, 8], sizes = [8, 8], strides = [1, 1]} : vector<8x32xf32> to vector<8x8xf32>
    %140 = vector.extract_strided_slice %137 {offsets = [0, 16], sizes = [8, 8], strides = [1, 1]} : vector<8x32xf32> to vector<8x8xf32>
    %141 = vector.extract_strided_slice %137 {offsets = [0, 24], sizes = [8, 8], strides = [1, 1]} : vector<8x32xf32> to vector<8x8xf32>
    %142 = vector.shape_cast %138 : vector<8x8xf32> to vector<1x8x8xf32>
    %143 = vector.shape_cast %139 : vector<8x8xf32> to vector<1x8x8xf32>
    %144 = vector.shape_cast %140 : vector<8x8xf32> to vector<1x8x8xf32>
    %145 = vector.shape_cast %141 : vector<8x8xf32> to vector<1x8x8xf32>
    %146 = tpu.concatenate %142, %143, %144, %145 in 0 : vector<1x8x8xf32>, vector<1x8x8xf32>, vector<1x8x8xf32>, vector<1x8x8xf32> -> vector<4x8x8xf32>
    %147 = arith.truncf %146 : vector<4x8x8xf32> to vector<4x8x8xbf16>
    "tpu.trace_start"() <{level = 10 : i32, message = "hik,hjk->hij"}> : () -> ()
    %cst_42 = arith.constant dense<0.000000e+00> : vector<4x16x8xf32>
    %148 = tpu.matmul %114, %125, %cst_42 {dimension_numbers = #tpu.dot_dimension_numbers<[2], [2], [1], [1], [0, 0, 0, 1, 1, 1], [0], [0]>} : vector<4x16x8xbf16>, vector<4x8x8xbf16>, vector<4x16x8xf32> -> vector<4x16x8xf32>
    "tpu.trace_stop"() : () -> ()
    %cst_43 = arith.constant dense<0xFF800000> : vector<4x16xf32>
    %149 = vector.multi_reduction <maximumf>, %148, %cst_43 [2] : vector<4x16x8xf32> to vector<4x16xf32>
    %150 = vector.shape_cast %149 : vector<4x16xf32> to vector<4x16x1xf32>
    %151 = vector.broadcast %150 : vector<4x16x1xf32> to vector<4x16x8xf32>
    %152 = arith.subf %148, %151 : vector<4x16x8xf32>
    %153 = math.exp %152 : vector<4x16x8xf32>
    %cst_44 = arith.constant dense<0.000000e+00> : vector<4x16xf32>
    %154 = vector.multi_reduction <add>, %153, %cst_44 [2] : vector<4x16x8xf32> to vector<4x16xf32>
    %155 = vector.shape_cast %154 : vector<4x16xf32> to vector<4x16x1xf32>
    %156 = tpu.reciprocal %155 {approx = true} : vector<4x16x1xf32> -> vector<4x16x1xf32>
    %157 = vector.broadcast %156 : vector<4x16x1xf32> to vector<4x16x8xf32>
    %158 = arith.mulf %153, %157 : vector<4x16x8xf32>
    %c0_45 = arith.constant 0 : index
    %c0_46 = arith.constant 0 : index
    %c0_47 = arith.constant 0 : index
    %c0_48 = arith.constant 0 : index
    %159 = vector.load %arg8[%c0_45, %c0_46, %c0_47, %c0_48] : memref<2x4x8x32xbf16, #tpu.memory_space<vmem>>, vector<1x4x8x32xbf16>
    %160 = vector.shape_cast %159 : vector<1x4x8x32xbf16> to vector<4x8x32xbf16>
    "tpu.trace_start"() <{level = 10 : i32, message = "hjd,hde->hje"}> : () -> ()
    %cst_49 = arith.constant dense<0.000000e+00> : vector<4x8x32xf32>
    %161 = tpu.matmul %147, %160, %cst_49 {dimension_numbers = #tpu.dot_dimension_numbers<[2], [1], [1], [2], [0, 0, 0, 1, 1, 2], [0], [0]>} : vector<4x8x8xbf16>, vector<4x8x32xbf16>, vector<4x8x32xf32> -> vector<4x8x32xf32>
    "tpu.trace_stop"() : () -> ()
    %c1_50 = arith.constant 1 : index
    %c0_51 = arith.constant 0 : index
    %c0_52 = arith.constant 0 : index
    %c0_53 = arith.constant 0 : index
    %162 = vector.load %arg8[%c1_50, %c0_51, %c0_52, %c0_53] : memref<2x4x8x32xbf16, #tpu.memory_space<vmem>>, vector<1x4x8x32xbf16>
    %163 = vector.shape_cast %162 : vector<1x4x8x32xbf16> to vector<4x8x32xbf16>
    "tpu.trace_start"() <{level = 10 : i32, message = "hid,hde->hie"}> : () -> ()
    %cst_54 = arith.constant dense<0.000000e+00> : vector<4x16x32xf32>
    %164 = tpu.matmul %136, %163, %cst_54 {dimension_numbers = #tpu.dot_dimension_numbers<[2], [1], [1], [2], [0, 0, 0, 1, 1, 2], [0], [0]>} : vector<4x16x8xbf16>, vector<4x8x32xbf16>, vector<4x16x32xf32> -> vector<4x16x32xf32>
    "tpu.trace_stop"() : () -> ()
    %165 = vector.extract_strided_slice %158 {offsets = [0, 4, 0], sizes = [4, 8, 8], strides = [1, 1, 1]} : vector<4x16x8xf32> to vector<4x8x8xf32>
    %166 = arith.truncf %165 : vector<4x8x8xf32> to vector<4x8x8xbf16>
    %167 = tpu.transpose %158, [0, 2, 1] : vector<4x16x8xf32> -> vector<4x8x16xf32>
    %168 = arith.truncf %167 : vector<4x8x16xf32> to vector<4x8x16xbf16>
    %169 = arith.truncf %161 : vector<4x8x32xf32> to vector<4x8x32xbf16>
    "tpu.trace_start"() <{level = 10 : i32, message = "hij,hje->hie"}> : () -> ()
    %cst_55 = arith.constant dense<0.000000e+00> : vector<4x8x32xf32>
    %170 = tpu.matmul %166, %169, %cst_55 {dimension_numbers = #tpu.dot_dimension_numbers<[2], [1], [1], [2], [0, 0, 0, 1, 1, 2], [0], [0]>} : vector<4x8x8xbf16>, vector<4x8x32xbf16>, vector<4x8x32xf32> -> vector<4x8x32xf32>
    "tpu.trace_stop"() : () -> ()
    %cst_56 = arith.constant dense<0.000000e+00> : vector<8x32xf32>
    %171 = vector.multi_reduction <add>, %170, %cst_56 [0] : vector<4x8x32xf32> to vector<8x32xf32>
    %c8 = arith.constant 8 : index
    %c0_57 = arith.constant 0 : index
    %172 = vector.load %arg3[%c8, %c0_57] : memref<25x64xf32, #tpu.memory_space<vmem>>, vector<1x32xf32>
    %173 = vector.broadcast %172 : vector<1x32xf32> to vector<8x32xf32>
    %174 = arith.addf %171, %173 : vector<8x32xf32>
    %175 = arith.truncf %164 : vector<4x16x32xf32> to vector<4x16x32xbf16>
    "tpu.trace_start"() <{level = 10 : i32, message = "hji,hie->hje"}> : () -> ()
    %cst_58 = arith.constant dense<0.000000e+00> : vector<4x8x32xf32>
    %176 = tpu.matmul %168, %175, %cst_58 {dimension_numbers = #tpu.dot_dimension_numbers<[2], [1], [1], [2], [0, 0, 0, 1, 1, 2], [0], [0]>} : vector<4x8x16xbf16>, vector<4x16x32xbf16>, vector<4x8x32xf32> -> vector<4x8x32xf32>
    "tpu.trace_stop"() : () -> ()
    %cst_59 = arith.constant dense<0.000000e+00> : vector<8x32xf32>
    %177 = vector.multi_reduction <add>, %176, %cst_59 [0] : vector<4x8x32xf32> to vector<8x32xf32>
    %c9 = arith.constant 9 : index
    %c0_60 = arith.constant 0 : index
    %178 = vector.load %arg3[%c9, %c0_60] : memref<25x64xf32, #tpu.memory_space<vmem>>, vector<1x32xf32>
    %179 = vector.broadcast %178 : vector<1x32xf32> to vector<8x32xf32>
    %180 = arith.addf %177, %179 : vector<8x32xf32>
    %181 = arith.addf %27, %174 : vector<8x32xf32>
    %182 = arith.addf %47, %180 : vector<8x32xf32>
    %c10 = arith.constant 10 : index
    %c0_61 = arith.constant 0 : index
    %183 = vector.load %arg3[%c10, %c0_61] : memref<25x64xf32, #tpu.memory_space<vmem>>, vector<1x32xf32>
    %c11 = arith.constant 11 : index
    %c0_62 = arith.constant 0 : index
    %184 = vector.load %arg3[%c11, %c0_62] : memref<25x64xf32, #tpu.memory_space<vmem>>, vector<1x32xf32>
    %c0_63 = arith.constant 0 : index
    %c0_64 = arith.constant 0 : index
    %c0_65 = arith.constant 0 : index
    %185 = vector.load %arg9[%c0_63, %c0_64, %c0_65] : memref<3x32x64xbf16, #tpu.memory_space<vmem>>, vector<1x32x64xbf16>
    %186 = vector.shape_cast %185 : vector<1x32x64xbf16> to vector<32x64xbf16>
    %c12 = arith.constant 12 : index
    %c0_66 = arith.constant 0 : index
    %187 = vector.load %arg3[%c12, %c0_66] : memref<25x64xf32, #tpu.memory_space<vmem>>, vector<1x64xf32>
    %c0_67 = arith.constant 0 : index
    %c0_68 = arith.constant 0 : index
    %c0_69 = arith.constant 0 : index
    %188 = vector.load %arg10[%c0_67, %c0_68, %c0_69] : memref<3x64x32xbf16, #tpu.memory_space<vmem>>, vector<1x64x32xbf16>
    %189 = vector.shape_cast %188 : vector<1x64x32xbf16> to vector<64x32xbf16>
    %c13 = arith.constant 13 : index
    %c0_70 = arith.constant 0 : index
    %190 = vector.load %arg3[%c13, %c0_70] : memref<25x64xf32, #tpu.memory_space<vmem>>, vector<1x32xf32>
    %cst_71 = arith.constant dense<0.000000e+00> : vector<8xf32>
    %191 = vector.multi_reduction <add>, %181, %cst_71 [1] : vector<8x32xf32> to vector<8xf32>
    %192 = vector.shape_cast %191 : vector<8xf32> to vector<8x1xf32>
    %cst_72 = arith.constant 3.200000e+01 : f32
    %193 = vector.broadcast %cst_72 : f32 to vector<8x1xf32>
    %194 = arith.divf %192, %193 : vector<8x1xf32>
    %195 = vector.broadcast %194 : vector<8x1xf32> to vector<8x32xf32>
    %196 = arith.subf %181, %195 : vector<8x32xf32>
    %197 = arith.mulf %196, %196 : vector<8x32xf32>
    %cst_73 = arith.constant dense<0.000000e+00> : vector<8xf32>
    %198 = vector.multi_reduction <add>, %197, %cst_73 [1] : vector<8x32xf32> to vector<8xf32>
    %199 = vector.shape_cast %198 : vector<8xf32> to vector<8x1xf32>
    %cst_74 = arith.constant 3.200000e+01 : f32
    %200 = vector.broadcast %cst_74 : f32 to vector<8x1xf32>
    %201 = arith.divf %199, %200 : vector<8x1xf32>
    %202 = vector.broadcast %194 : vector<8x1xf32> to vector<8x32xf32>
    %203 = arith.subf %181, %202 : vector<8x32xf32>
    %cst_75 = arith.constant 9.99999974E-6 : f32
    %204 = vector.broadcast %cst_75 : f32 to vector<8x1xf32>
    %205 = arith.addf %201, %204 : vector<8x1xf32>
    %206 = math.rsqrt %205 : vector<8x1xf32>
    %207 = vector.broadcast %206 : vector<8x1xf32> to vector<8x32xf32>
    %208 = arith.mulf %203, %207 : vector<8x32xf32>
    %209 = vector.broadcast %183 : vector<1x32xf32> to vector<8x32xf32>
    %210 = arith.mulf %208, %209 : vector<8x32xf32>
    %211 = vector.broadcast %184 : vector<1x32xf32> to vector<8x32xf32>
    %212 = arith.addf %210, %211 : vector<8x32xf32>
    %213 = arith.truncf %212 : vector<8x32xf32> to vector<8x32xbf16>
    %cst_76 = arith.constant dense<0.000000e+00> : vector<8x64xf32>
    %214 = tpu.matmul %213, %186, %cst_76 {dimension_numbers = #tpu.dot_dimension_numbers<[1], [0], [0], [1], [0, 0, 1, 1], [], []>} : vector<8x32xbf16>, vector<32x64xbf16>, vector<8x64xf32> -> vector<8x64xf32>
    %215 = vector.broadcast %187 : vector<1x64xf32> to vector<8x64xf32>
    %216 = arith.addf %214, %215 : vector<8x64xf32>
    %cst_77 = arith.constant 0.000000e+00 : f32
    %217 = vector.broadcast %cst_77 : f32 to vector<8x64xf32>
    %218 = arith.maximumf %216, %217 : vector<8x64xf32>
    %219 = arith.truncf %218 : vector<8x64xf32> to vector<8x64xbf16>
    %cst_78 = arith.constant dense<0.000000e+00> : vector<8x32xf32>
    %220 = tpu.matmul %219, %189, %cst_78 {dimension_numbers = #tpu.dot_dimension_numbers<[1], [0], [0], [1], [0, 0, 1, 1], [], []>} : vector<8x64xbf16>, vector<64x32xbf16>, vector<8x32xf32> -> vector<8x32xf32>
    %221 = vector.broadcast %190 : vector<1x32xf32> to vector<8x32xf32>
    %222 = arith.addf %220, %221 : vector<8x32xf32>
    %223 = arith.addf %181, %222 : vector<8x32xf32>
    %c14 = arith.constant 14 : index
    %c0_79 = arith.constant 0 : index
    %224 = vector.load %arg3[%c14, %c0_79] : memref<25x64xf32, #tpu.memory_space<vmem>>, vector<1x32xf32>
    %c15 = arith.constant 15 : index
    %c0_80 = arith.constant 0 : index
    %225 = vector.load %arg3[%c15, %c0_80] : memref<25x64xf32, #tpu.memory_space<vmem>>, vector<1x32xf32>
    %c1_81 = arith.constant 1 : index
    %c0_82 = arith.constant 0 : index
    %c0_83 = arith.constant 0 : index
    %226 = vector.load %arg9[%c1_81, %c0_82, %c0_83] : memref<3x32x64xbf16, #tpu.memory_space<vmem>>, vector<1x32x64xbf16>
    %227 = vector.shape_cast %226 : vector<1x32x64xbf16> to vector<32x64xbf16>
    %c16 = arith.constant 16 : index
    %c0_84 = arith.constant 0 : index
    %228 = vector.load %arg3[%c16, %c0_84] : memref<25x64xf32, #tpu.memory_space<vmem>>, vector<1x64xf32>
    %c1_85 = arith.constant 1 : index
    %c0_86 = arith.constant 0 : index
    %c0_87 = arith.constant 0 : index
    %229 = vector.load %arg10[%c1_85, %c0_86, %c0_87] : memref<3x64x32xbf16, #tpu.memory_space<vmem>>, vector<1x64x32xbf16>
    %230 = vector.shape_cast %229 : vector<1x64x32xbf16> to vector<64x32xbf16>
    %c17 = arith.constant 17 : index
    %c0_88 = arith.constant 0 : index
    %231 = vector.load %arg3[%c17, %c0_88] : memref<25x64xf32, #tpu.memory_space<vmem>>, vector<1x32xf32>
    %cst_89 = arith.constant dense<0.000000e+00> : vector<8xf32>
    %232 = vector.multi_reduction <add>, %182, %cst_89 [1] : vector<8x32xf32> to vector<8xf32>
    %233 = vector.shape_cast %232 : vector<8xf32> to vector<8x1xf32>
    %cst_90 = arith.constant 3.200000e+01 : f32
    %234 = vector.broadcast %cst_90 : f32 to vector<8x1xf32>
    %235 = arith.divf %233, %234 : vector<8x1xf32>
    %236 = vector.broadcast %235 : vector<8x1xf32> to vector<8x32xf32>
    %237 = arith.subf %182, %236 : vector<8x32xf32>
    %238 = arith.mulf %237, %237 : vector<8x32xf32>
    %cst_91 = arith.constant dense<0.000000e+00> : vector<8xf32>
    %239 = vector.multi_reduction <add>, %238, %cst_91 [1] : vector<8x32xf32> to vector<8xf32>
    %240 = vector.shape_cast %239 : vector<8xf32> to vector<8x1xf32>
    %cst_92 = arith.constant 3.200000e+01 : f32
    %241 = vector.broadcast %cst_92 : f32 to vector<8x1xf32>
    %242 = arith.divf %240, %241 : vector<8x1xf32>
    %243 = vector.broadcast %235 : vector<8x1xf32> to vector<8x32xf32>
    %244 = arith.subf %182, %243 : vector<8x32xf32>
    %cst_93 = arith.constant 9.99999974E-6 : f32
    %245 = vector.broadcast %cst_93 : f32 to vector<8x1xf32>
    %246 = arith.addf %242, %245 : vector<8x1xf32>
    %247 = math.rsqrt %246 : vector<8x1xf32>
    %248 = vector.broadcast %247 : vector<8x1xf32> to vector<8x32xf32>
    %249 = arith.mulf %244, %248 : vector<8x32xf32>
    %250 = vector.broadcast %224 : vector<1x32xf32> to vector<8x32xf32>
    %251 = arith.mulf %249, %250 : vector<8x32xf32>
    %252 = vector.broadcast %225 : vector<1x32xf32> to vector<8x32xf32>
    %253 = arith.addf %251, %252 : vector<8x32xf32>
    %254 = arith.truncf %253 : vector<8x32xf32> to vector<8x32xbf16>
    %cst_94 = arith.constant dense<0.000000e+00> : vector<8x64xf32>
    %255 = tpu.matmul %254, %227, %cst_94 {dimension_numbers = #tpu.dot_dimension_numbers<[1], [0], [0], [1], [0, 0, 1, 1], [], []>} : vector<8x32xbf16>, vector<32x64xbf16>, vector<8x64xf32> -> vector<8x64xf32>
    %256 = vector.broadcast %228 : vector<1x64xf32> to vector<8x64xf32>
    %257 = arith.addf %255, %256 : vector<8x64xf32>
    %cst_95 = arith.constant 0.000000e+00 : f32
    %258 = vector.broadcast %cst_95 : f32 to vector<8x64xf32>
    %259 = arith.maximumf %257, %258 : vector<8x64xf32>
    %260 = arith.truncf %259 : vector<8x64xf32> to vector<8x64xbf16>
    %cst_96 = arith.constant dense<0.000000e+00> : vector<8x32xf32>
    %261 = tpu.matmul %260, %230, %cst_96 {dimension_numbers = #tpu.dot_dimension_numbers<[1], [0], [0], [1], [0, 0, 1, 1], [], []>} : vector<8x64xbf16>, vector<64x32xbf16>, vector<8x32xf32> -> vector<8x32xf32>
    %262 = vector.broadcast %231 : vector<1x32xf32> to vector<8x32xf32>
    %263 = arith.addf %261, %262 : vector<8x32xf32>
    %264 = arith.addf %182, %263 : vector<8x32xf32>
    %c18 = arith.constant 18 : index
    %c0_97 = arith.constant 0 : index
    %265 = vector.load %arg3[%c18, %c0_97] : memref<25x64xf32, #tpu.memory_space<vmem>>, vector<1x32xf32>
    %266 = vector.broadcast %265 : vector<1x32xf32> to vector<8x32xf32>
    %267 = arith.mulf %223, %266 : vector<8x32xf32>
    %c19 = arith.constant 19 : index
    %c0_98 = arith.constant 0 : index
    %268 = vector.load %arg3[%c19, %c0_98] : memref<25x64xf32, #tpu.memory_space<vmem>>, vector<1x32xf32>
    %269 = vector.broadcast %268 : vector<1x32xf32> to vector<8x32xf32>
    %270 = arith.addf %267, %269 : vector<8x32xf32>
    %cst_99 = arith.constant 1.702000e+00 : f32
    %271 = vector.broadcast %cst_99 : f32 to vector<8x32xf32>
    %272 = arith.mulf %271, %270 : vector<8x32xf32>
    %273 = arith.negf %272 : vector<8x32xf32>
    %274 = math.exp %273 : vector<8x32xf32>
    %cst_100 = arith.constant 1.000000e+00 : f32
    %275 = vector.broadcast %cst_100 : f32 to vector<8x32xf32>
    %276 = arith.addf %275, %274 : vector<8x32xf32>
    %277 = arith.divf %275, %276 : vector<8x32xf32>
    %278 = arith.mulf %270, %277 : vector<8x32xf32>
    %279 = arith.truncf %278 : vector<8x32xf32> to vector<8x32xbf16>
    %c2_101 = arith.constant 2 : index
    %c0_102 = arith.constant 0 : index
    %c0_103 = arith.constant 0 : index
    %280 = vector.load %arg9[%c2_101, %c0_102, %c0_103] : memref<3x32x64xbf16, #tpu.memory_space<vmem>>, vector<1x32x64xbf16>
    %281 = vector.shape_cast %280 : vector<1x32x64xbf16> to vector<32x64xbf16>
    %cst_104 = arith.constant dense<0.000000e+00> : vector<8x64xf32>
    %282 = tpu.matmul %279, %281, %cst_104 {dimension_numbers = #tpu.dot_dimension_numbers<[1], [0], [0], [1], [0, 0, 1, 1], [], []>} : vector<8x32xbf16>, vector<32x64xbf16>, vector<8x64xf32> -> vector<8x64xf32>
    %c20 = arith.constant 20 : index
    %c0_105 = arith.constant 0 : index
    %283 = vector.load %arg3[%c20, %c0_105] : memref<25x64xf32, #tpu.memory_space<vmem>>, vector<1x64xf32>
    %284 = vector.broadcast %283 : vector<1x64xf32> to vector<8x64xf32>
    %285 = arith.addf %282, %284 : vector<8x64xf32>
    %cst_106 = arith.constant 1.702000e+00 : f32
    %286 = vector.broadcast %cst_106 : f32 to vector<8x64xf32>
    %287 = arith.mulf %286, %285 : vector<8x64xf32>
    %288 = arith.negf %287 : vector<8x64xf32>
    %289 = math.exp %288 : vector<8x64xf32>
    %cst_107 = arith.constant 1.000000e+00 : f32
    %290 = vector.broadcast %cst_107 : f32 to vector<8x64xf32>
    %291 = arith.addf %290, %289 : vector<8x64xf32>
    %292 = arith.divf %290, %291 : vector<8x64xf32>
    %293 = arith.mulf %285, %292 : vector<8x64xf32>
    %294 = arith.truncf %293 : vector<8x64xf32> to vector<8x64xbf16>
    %c2_108 = arith.constant 2 : index
    %c0_109 = arith.constant 0 : index
    %c0_110 = arith.constant 0 : index
    %295 = vector.load %arg10[%c2_108, %c0_109, %c0_110] : memref<3x64x32xbf16, #tpu.memory_space<vmem>>, vector<1x64x32xbf16>
    %296 = vector.shape_cast %295 : vector<1x64x32xbf16> to vector<64x32xbf16>
    %cst_111 = arith.constant dense<0.000000e+00> : vector<8x32xf32>
    %297 = tpu.matmul %294, %296, %cst_111 {dimension_numbers = #tpu.dot_dimension_numbers<[1], [0], [0], [1], [0, 0, 1, 1], [], []>} : vector<8x64xbf16>, vector<64x32xbf16>, vector<8x32xf32> -> vector<8x32xf32>
    %c21 = arith.constant 21 : index
    %c0_112 = arith.constant 0 : index
    %298 = vector.load %arg3[%c21, %c0_112] : memref<25x64xf32, #tpu.memory_space<vmem>>, vector<1x32xf32>
    %299 = vector.broadcast %298 : vector<1x32xf32> to vector<8x32xf32>
    %300 = arith.addf %297, %299 : vector<8x32xf32>
    %cst_113 = arith.constant 5.000000e-01 : f32
    %301 = vector.broadcast %cst_113 : f32 to vector<8x32xf32>
    %302 = arith.mulf %301, %300 : vector<8x32xf32>
    %cst_114 = arith.constant 4.471500e-02 : f32
    %303 = vector.broadcast %cst_114 : f32 to vector<8x32xf32>
    %304 = arith.mulf %303, %300 : vector<8x32xf32>
    %305 = arith.mulf %304, %300 : vector<8x32xf32>
    %306 = arith.mulf %305, %300 : vector<8x32xf32>
    %307 = arith.addf %300, %306 : vector<8x32xf32>
    %cst_115 = arith.constant 0.797884583 : f32
    %308 = vector.broadcast %cst_115 : f32 to vector<8x32xf32>
    %309 = arith.mulf %308, %307 : vector<8x32xf32>
    %310 = math.tanh %309 : vector<8x32xf32>
    %cst_116 = arith.constant 1.000000e+00 : f32
    %311 = vector.broadcast %cst_116 : f32 to vector<8x32xf32>
    %312 = arith.addf %311, %310 : vector<8x32xf32>
    %313 = arith.mulf %302, %312 : vector<8x32xf32>
    %314 = arith.truncf %313 : vector<8x32xf32> to vector<8x32xbf16>
    %c1_117 = arith.constant 1 : index
    %c0_118 = arith.constant 0 : index
    %c0_119 = arith.constant 0 : index
    %315 = vector.load %arg11[%c1_117, %c0_118, %c0_119] : memref<2x32x256xbf16, #tpu.memory_space<vmem>>, vector<1x32x256xbf16>
    %316 = vector.shape_cast %315 : vector<1x32x256xbf16> to vector<32x256xbf16>
    %cst_120 = arith.constant dense<0.000000e+00> : vector<8x256xf32>
    %317 = tpu.matmul %314, %316, %cst_120 {dimension_numbers = #tpu.dot_dimension_numbers<[1], [0], [0], [1], [0, 0, 1, 1], [], []>} : vector<8x32xbf16>, vector<32x256xbf16>, vector<8x256xf32> -> vector<8x256xf32>
    %c1_121 = arith.constant 1 : index
    %c0_122 = arith.constant 0 : index
    %318 = vector.load %arg4[%c1_121, %c0_122] : memref<3x256xf32, #tpu.memory_space<vmem>>, vector<1x256xf32>
    %319 = vector.broadcast %318 : vector<1x256xf32> to vector<8x256xf32>
    %320 = arith.addf %317, %319 : vector<8x256xf32>
    %321 = arith.truncf %44 : vector<8x256xf32> to vector<8x256xbf16>
    %c0_123 = arith.constant 0 : index
    %c0_124 = arith.constant 0 : index
    %c0_125 = arith.constant 0 : index
    %322 = vector.load %arg12[%c0_123, %c0_124, %c0_125] : memref<2x256x256xbf16, #tpu.memory_space<vmem>>, vector<1x256x256xbf16>
    %323 = vector.shape_cast %322 : vector<1x256x256xbf16> to vector<256x256xbf16>
    %cst_126 = arith.constant dense<0.000000e+00> : vector<8x256xf32>
    %324 = tpu.matmul %321, %323, %cst_126 {dimension_numbers = #tpu.dot_dimension_numbers<[1], [0], [0], [1], [0, 0, 1, 1], [], []>} : vector<8x256xbf16>, vector<256x256xbf16>, vector<8x256xf32> -> vector<8x256xf32>
    %325 = arith.truncf %320 : vector<8x256xf32> to vector<8x256xbf16>
    %c1_127 = arith.constant 1 : index
    %c0_128 = arith.constant 0 : index
    %c0_129 = arith.constant 0 : index
    %326 = vector.load %arg12[%c1_127, %c0_128, %c0_129] : memref<2x256x256xbf16, #tpu.memory_space<vmem>>, vector<1x256x256xbf16>
    %327 = vector.shape_cast %326 : vector<1x256x256xbf16> to vector<256x256xbf16>
    %cst_130 = arith.constant dense<0.000000e+00> : vector<8x256xf32>
    %328 = tpu.matmul %325, %327, %cst_130 {dimension_numbers = #tpu.dot_dimension_numbers<[1], [0], [0], [1], [0, 0, 1, 1], [], []>} : vector<8x256xbf16>, vector<256x256xbf16>, vector<8x256xf32> -> vector<8x256xf32>
    %329 = arith.addf %324, %328 : vector<8x256xf32>
    %c2_131 = arith.constant 2 : index
    %c0_132 = arith.constant 0 : index
    %330 = vector.load %arg4[%c2_131, %c0_132] : memref<3x256xf32, #tpu.memory_space<vmem>>, vector<1x256xf32>
    %331 = vector.broadcast %330 : vector<1x256xf32> to vector<8x256xf32>
    %332 = arith.addf %329, %331 : vector<8x256xf32>
    %333 = arith.negf %332 : vector<8x256xf32>
    %334 = math.exp %333 : vector<8x256xf32>
    %cst_133 = arith.constant 1.000000e+00 : f32
    %335 = vector.broadcast %cst_133 : f32 to vector<8x256xf32>
    %336 = arith.addf %335, %334 : vector<8x256xf32>
    %337 = arith.divf %335, %336 : vector<8x256xf32>
    %338 = arith.mulf %337, %44 : vector<8x256xf32>
    %cst_134 = arith.constant 1.000000e+00 : f32
    %339 = vector.broadcast %cst_134 : f32 to vector<8x256xf32>
    %340 = arith.subf %339, %337 : vector<8x256xf32>
    %341 = arith.mulf %340, %320 : vector<8x256xf32>
    %342 = arith.addf %338, %341 : vector<8x256xf32>
    %c0_135 = arith.constant 0 : index
    %c0_136 = arith.constant 0 : index
    %c0_137 = arith.constant 0 : index
    %343 = vector.load %arg14[%c0_135, %c0_136, %c0_137] : memref<1x8x256xf32, #tpu.memory_space<vmem>>, vector<1x8x256xf32>
    %344 = vector.shape_cast %343 : vector<1x8x256xf32> to vector<8x256xf32>
    %345 = vector.shape_cast %342 : vector<8x256xf32> to vector<1x8x256xf32>
    tpu.vector_store %arg14[%c0_135, %c0_136, %c0_137], %345 {strides = array<i32>} : memref<1x8x256xf32, #tpu.memory_space<vmem>>, vector<1x8x256xf32>,
    %346 = arith.truncf %264 : vector<8x32xf32> to vector<8x32xbf16>
    %c0_138 = arith.constant 0 : index
    %c0_139 = arith.constant 0 : index
    %347 = vector.load %arg13[%c0_138, %c0_139] : memref<32x16xbf16, #tpu.memory_space<vmem>>, vector<32x16xbf16>
    %cst_140 = arith.constant dense<0.000000e+00> : vector<8x16xf32>
    %348 = tpu.matmul %346, %347, %cst_140 {dimension_numbers = #tpu.dot_dimension_numbers<[1], [0], [0], [1], [0, 0, 1, 1], [], []>} : vector<8x32xbf16>, vector<32x16xbf16>, vector<8x16xf32> -> vector<8x16xf32>
    %c22 = arith.constant 22 : index
    %c0_141 = arith.constant 0 : index
    %349 = vector.load %arg3[%c22, %c0_141] : memref<25x64xf32, #tpu.memory_space<vmem>>, vector<1x16xf32>
    %350 = vector.broadcast %349 : vector<1x16xf32> to vector<8x16xf32>
    %351 = arith.addf %348, %350 : vector<8x16xf32>
    %cst_142 = arith.constant 5.000000e-01 : f32
    %352 = vector.broadcast %cst_142 : f32 to vector<8x16xf32>
    %353 = arith.mulf %352, %351 : vector<8x16xf32>
    %cst_143 = arith.constant 4.471500e-02 : f32
    %354 = vector.broadcast %cst_143 : f32 to vector<8x16xf32>
    %355 = arith.mulf %354, %351 : vector<8x16xf32>
    %356 = arith.mulf %355, %351 : vector<8x16xf32>
    %357 = arith.mulf %356, %351 : vector<8x16xf32>
    %358 = arith.addf %351, %357 : vector<8x16xf32>
    %cst_144 = arith.constant 0.797884583 : f32
    %359 = vector.broadcast %cst_144 : f32 to vector<8x16xf32>
    %360 = arith.mulf %359, %358 : vector<8x16xf32>
    %361 = math.tanh %360 : vector<8x16xf32>
    %cst_145 = arith.constant 1.000000e+00 : f32
    %362 = vector.broadcast %cst_145 : f32 to vector<8x16xf32>
    %363 = arith.addf %362, %361 : vector<8x16xf32>
    %364 = arith.mulf %353, %363 : vector<8x16xf32>
    %c23 = arith.constant 23 : index
    %c0_146 = arith.constant 0 : index
    %365 = vector.load %arg3[%c23, %c0_146] : memref<25x64xf32, #tpu.memory_space<vmem>>, vector<1x16xf32>
    %366 = vector.broadcast %365 : vector<1x16xf32> to vector<8x16xf32>
    %367 = arith.mulf %364, %366 : vector<8x16xf32>
    %cst_147 = arith.constant dense<0.000000e+00> : vector<8xf32>
    %368 = vector.multi_reduction <add>, %367, %cst_147 [1] : vector<8x16xf32> to vector<8xf32>
    %369 = vector.shape_cast %368 : vector<8xf32> to vector<1x8xf32>
    %c24 = arith.constant 24 : index
    %c0_148 = arith.constant 0 : index
    %370 = vector.load %arg3[%c24, %c0_148] : memref<25x64xf32, #tpu.memory_space<vmem>>, vector<1x1xf32>
    %371 = vector.broadcast %370 : vector<1x1xf32> to vector<1x8xf32>
    %372 = arith.addf %369, %371 : vector<1x8xf32>
    %c0_149 = arith.constant 0 : index
    %c0_150 = arith.constant 0 : index
    %c0_151 = arith.constant 0 : index
    %373 = vector.load %arg15[%c0_149, %c0_150, %c0_151] : memref<1x1x8xf32, #tpu.memory_space<vmem>>, vector<1x1x8xf32>
    %374 = vector.shape_cast %373 : vector<1x1x8xf32> to vector<1x8xf32>
    %375 = vector.shape_cast %372 : vector<1x8xf32> to vector<1x1x8xf32>
    tpu.vector_store %arg15[%c0_149, %c0_150, %c0_151], %375 {strides = array<i32>} : memref<1x1x8xf32, #tpu.memory_space<vmem>>, vector<1x1x8xf32>,
    return
  }
  func.func @transform_0(%arg0: i32) -> (i32, i32, i32) {
    %c0_i32 = arith.constant 0 : i32
    %c0_i32_0 = arith.constant 0 : i32
    %c0_i32_1 = arith.constant 0 : i32
    return %arg0, %c0_i32, %c0_i32_0 : i32, i32, i32
  }
  func.func @transform_1(%arg0: i32) -> (i32, i32, i32) {
    %c0_i32 = arith.constant 0 : i32
    %c0_i32_0 = arith.constant 0 : i32
    %c0_i32_1 = arith.constant 0 : i32
    return %arg0, %c0_i32, %c0_i32_0 : i32, i32, i32
  }
  func.func @transform_2(%arg0: i32) -> (i32, i32) {
    %c0_i32 = arith.constant 0 : i32
    %c0_i32_0 = arith.constant 0 : i32
    %c0_i32_1 = arith.constant 0 : i32
    return %c0_i32, %c0_i32_0 : i32, i32
  }
  func.func @transform_3(%arg0: i32) -> (i32, i32) {
    %c0_i32 = arith.constant 0 : i32
    %c0_i32_0 = arith.constant 0 : i32
    %c0_i32_1 = arith.constant 0 : i32
    return %c0_i32, %c0_i32_0 : i32, i32
  }
  func.func @transform_4(%arg0: i32) -> (i32, i32) {
    %c0_i32 = arith.constant 0 : i32
    %c0_i32_0 = arith.constant 0 : i32
    %c0_i32_1 = arith.constant 0 : i32
    return %c0_i32, %c0_i32_0 : i32, i32
  }
  func.func @transform_5(%arg0: i32) -> (i32, i32) {
    %c0_i32 = arith.constant 0 : i32
    %c0_i32_0 = arith.constant 0 : i32
    %c0_i32_1 = arith.constant 0 : i32
    return %c0_i32, %c0_i32_0 : i32, i32
  }
  func.func @transform_6(%arg0: i32) -> (i32, i32) {
    %c0_i32 = arith.constant 0 : i32
    %c0_i32_0 = arith.constant 0 : i32
    %c0_i32_1 = arith.constant 0 : i32
    return %c0_i32, %c0_i32_0 : i32, i32
  }
  func.func @transform_7(%arg0: i32) -> (i32, i32, i32, i32) {
    %c0_i32 = arith.constant 0 : i32
    %c0_i32_0 = arith.constant 0 : i32
    %c0_i32_1 = arith.constant 0 : i32
    %c0_i32_2 = arith.constant 0 : i32
    %c0_i32_3 = arith.constant 0 : i32
    return %c0_i32, %c0_i32_0, %c0_i32_1, %c0_i32_2 : i32, i32, i32, i32
  }
  func.func @transform_8(%arg0: i32) -> (i32, i32, i32) {
    %c0_i32 = arith.constant 0 : i32
    %c0_i32_0 = arith.constant 0 : i32
    %c0_i32_1 = arith.constant 0 : i32
    %c0_i32_2 = arith.constant 0 : i32
    return %c0_i32, %c0_i32_0, %c0_i32_1 : i32, i32, i32
  }
  func.func @transform_9(%arg0: i32) -> (i32, i32, i32) {
    %c0_i32 = arith.constant 0 : i32
    %c0_i32_0 = arith.constant 0 : i32
    %c0_i32_1 = arith.constant 0 : i32
    %c0_i32_2 = arith.constant 0 : i32
    return %c0_i32, %c0_i32_0, %c0_i32_1 : i32, i32, i32
  }
  func.func @transform_10(%arg0: i32) -> (i32, i32, i32) {
    %c0_i32 = arith.constant 0 : i32
    %c0_i32_0 = arith.constant 0 : i32
    %c0_i32_1 = arith.constant 0 : i32
    %c0_i32_2 = arith.constant 0 : i32
    return %c0_i32, %c0_i32_0, %c0_i32_1 : i32, i32, i32
  }
  func.func @transform_11(%arg0: i32) -> (i32, i32, i32) {
    %c0_i32 = arith.constant 0 : i32
    %c0_i32_0 = arith.constant 0 : i32
    %c0_i32_1 = arith.constant 0 : i32
    %c0_i32_2 = arith.constant 0 : i32
    return %c0_i32, %c0_i32_0, %c0_i32_1 : i32, i32, i32
  }
  func.func @transform_12(%arg0: i32) -> (i32, i32) {
    %c0_i32 = arith.constant 0 : i32
    %c0_i32_0 = arith.constant 0 : i32
    %c0_i32_1 = arith.constant 0 : i32
    return %c0_i32, %c0_i32_0 : i32, i32
  }
  func.func @transform_13(%arg0: i32) -> (i32, i32, i32) {
    %c0_i32 = arith.constant 0 : i32
    %c0_i32_0 = arith.constant 0 : i32
    %c0_i32_1 = arith.constant 0 : i32
    return %arg0, %c0_i32, %c0_i32_0 : i32, i32, i32
  }
  func.func @transform_14(%arg0: i32) -> (i32, i32, i32) {
    %c0_i32 = arith.constant 0 : i32
    %c0_i32_0 = arith.constant 0 : i32
    %c0_i32_1 = arith.constant 0 : i32
    return %arg0, %c0_i32, %c0_i32_0 : i32, i32, i32
  }
}

</mosaic_0001>

<llo_original>
// kernel: rbp_xformer_forward.1
$region0: #{rbp_xformer_forward.1}
  #allocation0 [shape = 'u32[]', space=smem, size = 0x4, offset = 0x4, fixed_abs, tag = 'smem constant byte address 0x4 - core index']
  #allocation1 [shape = 'u32[144,128]{1,0:T(1,128)}', space=vmem, size = 0x12000, scoped, tag = 'internal scratch']
  %s0 = inlined_call_operand.vmem [shape: f32[2,16,4], index: 0, kind: input, shape index: {}]
  %s1 = inlined_call_operand.vmem [shape: f32[2,8,32], index: 1, kind: input, shape index: {}]
  %s2 = inlined_call_operand.vmem [shape: f32[25,64], index: 2, kind: input, shape index: {}]
  %s3 = inlined_call_operand.vmem [shape: f32[3,256], index: 3, kind: input, shape index: {}]
  %s4 = inlined_call_operand.vmem [shape: bf16[32,32], index: 4, kind: input, shape index: {}]
  %s5 = inlined_call_operand.vmem [shape: bf16[32,64], index: 5, kind: input, shape index: {}]
  %s6 = inlined_call_operand.vmem [shape: bf16[32,64], index: 6, kind: input, shape index: {}]
  %s7 = inlined_call_operand.vmem [shape: bf16[2,4,8,32], index: 7, kind: input, shape index: {}]
  %s8 = inlined_call_operand.vmem [shape: bf16[3,32,64], index: 8, kind: input, shape index: {}]
  %s9 = inlined_call_operand.vmem [shape: bf16[3,64,32], index: 9, kind: input, shape index: {}]
  %s10 = inlined_call_operand.vmem [shape: bf16[2,32,256], index: 10, kind: input, shape index: {}]
  %s11 = inlined_call_operand.hbm [shape: bf16[2,256,256], index: 11, kind: input, shape index: {}]
  %s12 = inlined_call_operand.vmem [shape: bf16[32,16], index: 12, kind: input, shape index: {}]
  %s13 = inlined_call_operand.hbm [shape: f32[2,8,256], index: 13, kind: output, shape index: {0}]
  %s14 = inlined_call_operand.hbm [shape: f32[2,1,8], index: 14, kind: output, shape index: {1}]
  %15 = xla_tuple %s13, %s14
  %s16 = sld [smem:[#allocation0]]
  $region97: #{rbp_xformer_forward.1} parent=0
    _
  %s18 = ssub.s32 1, %s16
  %s19 = scalar_select 0, %s18, %s16
  $region1: #{rbp_xformer_forward.1} parent=0
    #allocation2 [shape = 'u8[262144]{0}', space=vmem, size = 0x40000, scoped, tag = 'input window, operand 11, single buffered']
    #allocation3 [shape = 's32[2]{0}', space=sflag, size = 0x8, scoped, tag = 'scoped memory for rbp_xformer_forward.1']
    #allocation4 [shape = 's32[2]{0}', space=sflag, size = 0x8, scoped, tag = 'scoped memory for rbp_xformer_forward.1']
    #allocation5 [shape = 'u8[16384]{0}', space=vmem, size = 0x4000, scoped, tag = 'output window, operand 0']
    #allocation6 [shape = 'u8[1024]{0}', space=vmem, size = 0x400, scoped, tag = 'output window, operand 1']
    #allocation7 [shape = 's32[2]{0}', space=sflag, size = 0x8, scoped, tag = 'scoped memory for rbp_xformer_forward.1']
    %20 = vsyncpa [#allocation3], 0
    %21 = vsyncpa [#allocation4], 0
    %s22 = scalar_lea.sflag [#allocation4], 1
    %23 = vsyncpa %s22, 0
    %24 = vsyncpa [#allocation7], 0
    %s25 = scalar_lea.sflag [#allocation7], 1
    %26 = vsyncpa %s25, 0
    loop: start=0, step=1, limit=4
    $region2: #{rbp_xformer_forward.1} parent=1 // loop_pre_header
      _
    $region3: #{rbp_xformer_forward.1} parent=1 // loop_header
      %s28 = sphi 0, %s32
      %p29 = scmp.ge.s32.totalorder %s28, 4
      %s38 = sphi 0, %s40
      %s41 = sphi 0, %s38
      %s42 = sphi 0, %s41
      %s58 = sphi 0, %s42
      %s64 = sphi 0, %s66
      %s67 = sphi 0, %s64
      %s68 = sphi 0, %s67
      %s84 = sphi 0, %s68
      %s88 = sphi 0, %s88
      %s90 = sphi 0, %s88
      %s91 = sphi 0, %s90
      %s105 = sphi 0, %s91
      %s109 = sphi 0, %s109
      %s111 = sphi 0, %s109
      %s112 = sphi 0, %s111
      %s126 = sphi 0, %s112
      %s130 = sphi 0, %s130
      %s132 = sphi 0, %s130
      %s133 = sphi 0, %s132
      %s147 = sphi 0, %s133
      %s151 = sphi 0, %s151
      %s153 = sphi 0, %s151
      %s154 = sphi 0, %s153
      %s168 = sphi 0, %s154
      %s172 = sphi 0, %s172
      %s174 = sphi 0, %s172
      %s175 = sphi 0, %s174
      %s189 = sphi 0, %s175
      %s193 = sphi 0, %s193
      %s195 = sphi 0, %s193
      %s196 = sphi 0, %s195
      %s210 = sphi 0, %s196
      %s214 = sphi 0, %s214
      %s216 = sphi 0, %s214
      %s217 = sphi 0, %s216
      %s231 = sphi 0, %s217
      %s235 = sphi 0, %s235
      %s237 = sphi 0, %s235
      %s238 = sphi 0, %s237
      %s252 = sphi 0, %s238
      %s256 = sphi 0, %s256
      %s258 = sphi 0, %s256
      %s259 = sphi 0, %s258
      %s273 = sphi 0, %s259
      %s277 = sphi 0, %s277
      %s279 = sphi 0, %s277
      %s280 = sphi 0, %s279
      %s294 = sphi 0, %s280
      %s298 = sphi 0, %s298
      %s300 = sphi 0, %s298
      %s301 = sphi 0, %s300
      %s315 = sphi 0, %s301
      %s321 = sphi 0, %s323
      %s324 = sphi 0, %s321
      %s325 = sphi 0, %s324
      %s341 = sphi 0, %s325
      %s347 = sphi 0, %s349
      %s350 = sphi 0, %s347
      %s351 = sphi 0, %s350
      %s367 = sphi 0, %s351
    $region4: #{rbp_xformer_forward.1} parent=1 // loop_header_branch
      %31 = sbr.rel (%p29) target = $region8
    $region5: #{rbp_xformer_forward.1} parent=1 // loop_body
      %s33 = ssub.s32 %s28, 1
      %s34 = ssub.s32 %s28, 2
      %s35 = sadd.s32 %s28, 1
      %s36 = ssub.s32 %s28, %s35
      %p37 = scmp.eq.s32.totalorder %s36, 0
      %s39 = sadd.s32 %s38, 1
      %s40 = scalar_select %p37, %s38, %s39
      %p43 = pneg %p37
      %p44 = scmp.eq.s32.totalorder %s28, 1
      %p45 = por %p43, %p44
      %p46 = scmp.ne.s32.totalorder %s38, %s41
      %p47 = scmp.eq.s32.totalorder %s28, 0
      %p48 = por %p46, %p47
      %p49 = scmp.ne.s32.totalorder %s38, %s41
      %p50 = scmp.eq.s32.totalorder %s33, 1
      %p51 = por %p49, %p50
      %p52 = scmp.ne.s32.totalorder %s41, %s42
      %p53 = scmp.eq.s32.totalorder %s33, 0
      %p54 = por %p52, %p53
      %p55 = scmp.ne.s32.totalorder %s41, %s42
      %p56 = scmp.eq.s32.totalorder %s34, 1
      %p57 = por %p55, %p56
      %p59 = scmp.ne.s32.totalorder %s42, %s58
      %p60 = scmp.eq.s32.totalorder %s34, 0
      %p61 = por %p59, %p60
      %s62 = ssub.s32 %s28, %s35
      %p63 = scmp.eq.s32.totalorder %s62, 0
      %s65 = sadd.s32 %s64, 1
      %s66 = scalar_select %p63, %s64, %s65
      %p69 = pneg %p63
      %p70 = scmp.eq.s32.totalorder %s28, 1
      %p71 = por %p69, %p70
      %p72 = scmp.ne.s32.totalorder %s64, %s67
      %p73 = scmp.eq.s32.totalorder %s28, 0
      %p74 = por %p72, %p73
      %p75 = scmp.ne.s32.totalorder %s64, %s67
      %p76 = scmp.eq.s32.totalorder %s33, 1
      %p77 = por %p75, %p76
      %p78 = scmp.ne.s32.totalorder %s67, %s68
      %p79 = scmp.eq.s32.totalorder %s33, 0
      %p80 = por %p78, %p79
      %p81 = scmp.ne.s32.totalorder %s67, %s68
      %p82 = scmp.eq.s32.totalorder %s34, 1
      %p83 = por %p81, %p82
      %p85 = scmp.ne.s32.totalorder %s68, %s84
      %p86 = scmp.eq.s32.totalorder %s34, 0
      %p87 = por %p85, %p86
      %s89 = sadd.s32 %s88, 1
      %p92 = scmp.eq.s32.totalorder %s28, 1
      %p93 = scmp.ne.s32.totalorder %s88, %s90
      %p94 = scmp.eq.s32.totalorder %s28, 0
      %p95 = por %p93, %p94
      %p96 = scmp.ne.s32.totalorder %s88, %s90
      %p97 = scmp.eq.s32.totalorder %s33, 1
      %p98 = por %p96, %p97
      %p99 = scmp.ne.s32.totalorder %s90, %s91
      %p100 = scmp.eq.s32.totalorder %s33, 0
      %p101 = por %p99, %p100
      %p102 = scmp.ne.s32.totalorder %s90, %s91
      %p103 = scmp.eq.s32.totalorder %s34, 1
      %p104 = por %p102, %p103
      %p106 = scmp.ne.s32.totalorder %s91, %s105
      %p107 = scmp.eq.s32.totalorder %s34, 0
      %p108 = por %p106, %p107
      %s110 = sadd.s32 %s109, 1
      %p113 = scmp.eq.s32.totalorder %s28, 1
      %p114 = scmp.ne.s32.totalorder %s109, %s111
      %p115 = scmp.eq.s32.totalorder %s28, 0
      %p116 = por %p114, %p115
      %p117 = scmp.ne.s32.totalorder %s109, %s111
      %p118 = scmp.eq.s32.totalorder %s33, 1
      %p119 = por %p117, %p118
      %p120 = scmp.ne.s32.totalorder %s111, %s112
      %p121 = scmp.eq.s32.totalorder %s33, 0
      %p122 = por %p120, %p121
      %p123 = scmp.ne.s32.totalorder %s111, %s112
      %p124 = scmp.eq.s32.totalorder %s34, 1
      %p125 = por %p123, %p124
      %p127 = scmp.ne.s32.totalorder %s112, %s126
      %p128 = scmp.eq.s32.totalorder %s34, 0
      %p129 = por %p127, %p128
      %s131 = sadd.s32 %s130, 1
      %p134 = scmp.eq.s32.totalorder %s28, 1
      %p135 = scmp.ne.s32.totalorder %s130, %s132
      %p136 = scmp.eq.s32.totalorder %s28, 0
      %p137 = por %p135, %p136
      %p138 = scmp.ne.s32.totalorder %s130, %s132
      %p139 = scmp.eq.s32.totalorder %s33, 1
      %p140 = por %p138, %p139
      %p141 = scmp.ne.s32.totalorder %s132, %s133
      %p142 = scmp.eq.s32.totalorder %s33, 0
      %p143 = por %p141, %p142
      %p144 = scmp.ne.s32.totalorder %s132, %s133
      %p145 = scmp.eq.s32.totalorder %s34, 1
      %p146 = por %p144, %p145
      %p148 = scmp.ne.s32.totalorder %s133, %s147
      %p149 = scmp.eq.s32.totalorder %s34, 0
      %p150 = por %p148, %p149
      %s152 = sadd.s32 %s151, 1
      %p155 = scmp.eq.s32.totalorder %s28, 1
      %p156 = scmp.ne.s32.totalorder %s151, %s153
      %p157 = scmp.eq.s32.totalorder %s28, 0
      %p158 = por %p156, %p157
      %p159 = scmp.ne.s32.totalorder %s151, %s153
      %p160 = scmp.eq.s32.totalorder %s33, 1
      %p161 = por %p159, %p160
      %p162 = scmp.ne.s32.totalorder %s153, %s154
      %p163 = scmp.eq.s32.totalorder %s33, 0
      %p164 = por %p162, %p163
      %p165 = scmp.ne.s32.totalorder %s153, %s154
      %p166 = scmp.eq.s32.totalorder %s34, 1
      %p167 = por %p165, %p166
      %p169 = scmp.ne.s32.totalorder %s154, %s168
      %p170 = scmp.eq.s32.totalorder %s34, 0
      %p171 = por %p169, %p170
      %s173 = sadd.s32 %s172, 1
      %p176 = scmp.eq.s32.totalorder %s28, 1
      %p177 = scmp.ne.s32.totalorder %s172, %s174
      %p178 = scmp.eq.s32.totalorder %s28, 0
      %p179 = por %p177, %p178
      %p180 = scmp.ne.s32.totalorder %s172, %s174
      %p181 = scmp.eq.s32.totalorder %s33, 1
      %p182 = por %p180, %p181
      %p183 = scmp.ne.s32.totalorder %s174, %s175
      %p184 = scmp.eq.s32.totalorder %s33, 0
      %p185 = por %p183, %p184
      %p186 = scmp.ne.s32.totalorder %s174, %s175
      %p187 = scmp.eq.s32.totalorder %s34, 1
      %p188 = por %p186, %p187
      %p190 = scmp.ne.s32.totalorder %s175, %s189
      %p191 = scmp.eq.s32.totalorder %s34, 0
      %p192 = por %p190, %p191
      %s194 = sadd.s32 %s193, 1
      %p197 = scmp.eq.s32.totalorder %s28, 1
      %p198 = scmp.ne.s32.totalorder %s193, %s195
      %p199 = scmp.eq.s32.totalorder %s28, 0
      %p200 = por %p198, %p199
      %p201 = scmp.ne.s32.totalorder %s193, %s195
      %p202 = scmp.eq.s32.totalorder %s33, 1
      %p203 = por %p201, %p202
      %p204 = scmp.ne.s32.totalorder %s195, %s196
      %p205 = scmp.eq.s32.totalorder %s33, 0
      %p206 = por %p204, %p205
      %p207 = scmp.ne.s32.totalorder %s195, %s196
      %p208 = scmp.eq.s32.totalorder %s34, 1
      %p209 = por %p207, %p208
      %p211 = scmp.ne.s32.totalorder %s196, %s210
      %p212 = scmp.eq.s32.totalorder %s34, 0
      %p213 = por %p211, %p212
      %s215 = sadd.s32 %s214, 1
      %p218 = scmp.eq.s32.totalorder %s28, 1
      %p219 = scmp.ne.s32.totalorder %s214, %s216
      %p220 = scmp.eq.s32.totalorder %s28, 0
      %p221 = por %p219, %p220
      %p222 = scmp.ne.s32.totalorder %s214, %s216
      %p223 = scmp.eq.s32.totalorder %s33, 1
      %p224 = por %p222, %p223
      %p225 = scmp.ne.s32.totalorder %s216, %s217
      %p226 = scmp.eq.s32.totalorder %s33, 0
      %p227 = por %p225, %p226
      %p228 = scmp.ne.s32.totalorder %s216, %s217
      %p229 = scmp.eq.s32.totalorder %s34, 1
      %p230 = por %p228, %p229
      %p232 = scmp.ne.s32.totalorder %s217, %s231
      %p233 = scmp.eq.s32.totalorder %s34, 0
      %p234 = por %p232, %p233
      %s236 = sadd.s32 %s235, 1
      %p239 = scmp.eq.s32.totalorder %s28, 1
      %p240 = scmp.ne.s32.totalorder %s235, %s237
      %p241 = scmp.eq.s32.totalorder %s28, 0
      %p242 = por %p240, %p241
      %p243 = scmp.ne.s32.totalorder %s235, %s237
      %p244 = scmp.eq.s32.totalorder %s33, 1
      %p245 = por %p243, %p244
      %p246 = scmp.ne.s32.totalorder %s237, %s238
      %p247 = scmp.eq.s32.totalorder %s33, 0
      %p248 = por %p246, %p247
      %p249 = scmp.ne.s32.totalorder %s237, %s238
      %p250 = scmp.eq.s32.totalorder %s34, 1
      %p251 = por %p249, %p250
      %p253 = scmp.ne.s32.totalorder %s238, %s252
      %p254 = scmp.eq.s32.totalorder %s34, 0
      %p255 = por %p253, %p254
      %s257 = sadd.s32 %s256, 1
      %p260 = scmp.eq.s32.totalorder %s28, 1
      %p261 = scmp.ne.s32.totalorder %s256, %s258
      %p262 = scmp.eq.s32.totalorder %s28, 0
      %p263 = por %p261, %p262
      %p264 = scmp.ne.s32.totalorder %s256, %s258
      %p265 = scmp.eq.s32.totalorder %s33, 1
      %p266 = por %p264, %p265
      %p267 = scmp.ne.s32.totalorder %s258, %s259
      %p268 = scmp.eq.s32.totalorder %s33, 0
      %p269 = por %p267, %p268
      %p270 = scmp.ne.s32.totalorder %s258, %s259
      %p271 = scmp.eq.s32.totalorder %s34, 1
      %p272 = por %p270, %p271
      %p274 = scmp.ne.s32.totalorder %s259, %s273
      %p275 = scmp.eq.s32.totalorder %s34, 0
      %p276 = por %p274, %p275
      %s278 = sadd.s32 %s277, 1
      %p281 = scmp.eq.s32.totalorder %s28, 1
      %p282 = scmp.ne.s32.totalorder %s277, %s279
      %p283 = scmp.eq.s32.totalorder %s28, 0
      %p284 = por %p282, %p283
      %p285 = scmp.ne.s32.totalorder %s277, %s279
      %p286 = scmp.eq.s32.totalorder %s33, 1
      %p287 = por %p285, %p286
      %p288 = scmp.ne.s32.totalorder %s279, %s280
      %p289 = scmp.eq.s32.totalorder %s33, 0
      %p290 = por %p288, %p289
      %p291 = scmp.ne.s32.totalorder %s279, %s280
      %p292 = scmp.eq.s32.totalorder %s34, 1
      %p293 = por %p291, %p292
      %p295 = scmp.ne.s32.totalorder %s280, %s294
      %p296 = scmp.eq.s32.totalorder %s34, 0
      %p297 = por %p295, %p296
      %s299 = sadd.s32 %s298, 1
      %p302 = scmp.eq.s32.totalorder %s28, 1
      %p303 = scmp.ne.s32.totalorder %s298, %s300
      %p304 = scmp.eq.s32.totalorder %s28, 0
      %p305 = por %p303, %p304
      %p306 = scmp.ne.s32.totalorder %s298, %s300
      %p307 = scmp.eq.s32.totalorder %s33, 1
      %p308 = por %p306, %p307
      %p309 = scmp.ne.s32.totalorder %s300, %s301
      %p310 = scmp.eq.s32.totalorder %s33, 0
      %p311 = por %p309, %p310
      %p312 = scmp.ne.s32.totalorder %s300, %s301
      %p313 = scmp.eq.s32.totalorder %s34, 1
      %p314 = por %p312, %p313
      %p316 = scmp.ne.s32.totalorder %s301, %s315
      %p317 = scmp.eq.s32.totalorder %s34, 0
      %p318 = por %p316, %p317
      %s319 = ssub.s32 %s28, %s35
      %p320 = scmp.eq.s32.totalorder %s319, 0
      %s322 = sadd.s32 %s321, 1
      %s323 = scalar_select %p320, %s321, %s322
      %p326 = pneg %p320
      %p327 = scmp.eq.s32.totalorder %s28, 1
      %p328 = por %p326, %p327
      %p329 = scmp.ne.s32.totalorder %s321, %s324
      %p330 = scmp.eq.s32.totalorder %s28, 0
      %p331 = por %p329, %p330
      %p332 = scmp.ne.s32.totalorder %s321, %s324
      %p333 = scmp.eq.s32.totalorder %s33, 1
      %p334 = por %p332, %p333
      %p335 = scmp.ne.s32.totalorder %s324, %s325
      %p336 = scmp.eq.s32.totalorder %s33, 0
      %p337 = por %p335, %p336
      %p338 = scmp.ne.s32.totalorder %s324, %s325
      %p339 = scmp.eq.s32.totalorder %s34, 1
      %p340 = por %p338, %p339
      %p342 = scmp.ne.s32.totalorder %s325, %s341
      %p343 = scmp.eq.s32.totalorder %s34, 0
      %p344 = por %p342, %p343
      %s345 = ssub.s32 %s28, %s35
      %p346 = scmp.eq.s32.totalorder %s345, 0
      %s348 = sadd.s32 %s347, 1
      %s349 = scalar_select %p346, %s347, %s348
      %p352 = pneg %p346
      %p353 = scmp.eq.s32.totalorder %s28, 1
      %p354 = por %p352, %p353
      %p355 = scmp.ne.s32.totalorder %s347, %s350
      %p356 = scmp.eq.s32.totalorder %s28, 0
      %p357 = por %p355, %p356
      %p358 = scmp.ne.s32.totalorder %s347, %s350
      %p359 = scmp.eq.s32.totalorder %s33, 1
      %p360 = por %p358, %p359
      %p361 = scmp.ne.s32.totalorder %s350, %s351
      %p362 = scmp.eq.s32.totalorder %s33, 0
      %p363 = por %p361, %p362
      %p364 = scmp.ne.s32.totalorder %s350, %s351
      %p365 = scmp.eq.s32.totalorder %s34, 1
      %p366 = por %p364, %p365
      %p368 = scmp.ne.s32.totalorder %s351, %s367
      %p369 = scmp.eq.s32.totalorder %s34, 0
      %p370 = por %p368, %p369
      %p371 = scmp.le.s32.totalorder 1, %s28
      %p372 = scmp.lt.s32.totalorder %s28, 3
      %p373 = pnand %p371, %p372
      %p374 = pneg %p373
      // Predicated region
      $region9: #{rbp_xformer_forward.1} parent=5 // pred_check
        _
      $region10: #{rbp_xformer_forward.1} parent=5 // pred_check_branch
        %376 = sbr.rel (%p373) target = $region12
      $region11: #{rbp_xformer_forward.1} parent=5 // pred_region
        %s377 = ssub.s32 %s28, 1
        // Predicated region
        $region13: #{rbp_xformer_forward.1} parent=11 // pred_check
          %p378 = pneg %p101
        $region14: #{rbp_xformer_forward.1} parent=11 // pred_check_branch
          %380 = sbr.rel (%p378) target = $region16
        $region15: #{rbp_xformer_forward.1} parent=11 // pred_region
          _
        $region16: #{rbp_xformer_forward.1} parent=11 // pred_fallthru
          _
        // Predicated region
        $region17: #{rbp_xformer_forward.1} parent=11 // pred_check
          %p381 = pneg %p122
        $region18: #{rbp_xformer_forward.1} parent=11 // pred_check_branch
          %383 = sbr.rel (%p381) target = $region20
        $region19: #{rbp_xformer_forward.1} parent=11 // pred_region
          _
        $region20: #{rbp_xformer_forward.1} parent=11 // pred_fallthru
          _
        // Predicated region
        $region21: #{rbp_xformer_forward.1} parent=11 // pred_check
          %p384 = pneg %p143
        $region22: #{rbp_xformer_forward.1} parent=11 // pred_check_branch
          %386 = sbr.rel (%p384) target = $region24
        $region23: #{rbp_xformer_forward.1} parent=11 // pred_region
          _
        $region24: #{rbp_xformer_forward.1} parent=11 // pred_fallthru
          _
        // Predicated region
        $region25: #{rbp_xformer_forward.1} parent=11 // pred_check
          %p387 = pneg %p164
        $region26: #{rbp_xformer_forward.1} parent=11 // pred_check_branch
          %389 = sbr.rel (%p387) target = $region28
        $region27: #{rbp_xformer_forward.1} parent=11 // pred_region
          _
        $region28: #{rbp_xformer_forward.1} parent=11 // pred_fallthru
          _
        // Predicated region
        $region29: #{rbp_xformer_forward.1} parent=11 // pred_check
          %p390 = pneg %p185
        $region30: #{rbp_xformer_forward.1} parent=11 // pred_check_branch
          %392 = sbr.rel (%p390) target = $region32
        $region31: #{rbp_xformer_forward.1} parent=11 // pred_region
          _
        $region32: #{rbp_xformer_forward.1} parent=11 // pred_fallthru
          _
        // Predicated region
        $region33: #{rbp_xformer_forward.1} parent=11 // pred_check
          %p393 = pneg %p206
        $region34: #{rbp_xformer_forward.1} parent=11 // pred_check_branch
          %395 = sbr.rel (%p393) target = $region36
        $region35: #{rbp_xformer_forward.1} parent=11 // pred_region
          _
        $region36: #{rbp_xformer_forward.1} parent=11 // pred_fallthru
          _
        // Predicated region
        $region37: #{rbp_xformer_forward.1} parent=11 // pred_check
          %p396 = pneg %p227
        $region38: #{rbp_xformer_forward.1} parent=11 // pred_check_branch
          %398 = sbr.rel (%p396) target = $region40
        $region39: #{rbp_xformer_forward.1} parent=11 // pred_region
          _
        $region40: #{rbp_xformer_forward.1} parent=11 // pred_fallthru
          _
        // Predicated region
        $region41: #{rbp_xformer_forward.1} parent=11 // pred_check
          %p399 = pneg %p248
        $region42: #{rbp_xformer_forward.1} parent=11 // pred_check_branch
          %401 = sbr.rel (%p399) target = $region44
        $region43: #{rbp_xformer_forward.1} parent=11 // pred_region
          _
        $region44: #{rbp_xformer_forward.1} parent=11 // pred_fallthru
          _
        // Predicated region
        $region45: #{rbp_xformer_forward.1} parent=11 // pred_check
          %p402 = pneg %p269
        $region46: #{rbp_xformer_forward.1} parent=11 // pred_check_branch
          %404 = sbr.rel (%p402) target = $region48
        $region47: #{rbp_xformer_forward.1} parent=11 // pred_region
          _
        $region48: #{rbp_xformer_forward.1} parent=11 // pred_fallthru
          _
        // Predicated region
        $region49: #{rbp_xformer_forward.1} parent=11 // pred_check
          %p405 = pneg %p290
        $region50: #{rbp_xformer_forward.1} parent=11 // pred_check_branch
          %407 = sbr.rel (%p405) target = $region52
        $region51: #{rbp_xformer_forward.1} parent=11 // pred_region
          %s409 = ssub.s32 8192, 8192
          %410 = vsyncadd [#allocation3], %s409
          %s411 = sshll.u32 [#allocation2], 4
          %s412 = int_to_ptr.vmem [resolvable:$true] %s411
          %417 = dma.hbm_to_vmem [thread:$0]  %s11, 8192, %s412, [#allocation3], 128, 128, 8
        $region52: #{rbp_xformer_forward.1} parent=11 // pred_fallthru
          _
        // Predicated region
        $region53: #{rbp_xformer_forward.1} parent=11 // pred_check
          %p418 = pneg %p311
        $region54: #{rbp_xformer_forward.1} parent=11 // pred_check_branch
          %420 = sbr.rel (%p418) target = $region56
        $region55: #{rbp_xformer_forward.1} parent=11 // pred_region
          _
        $region56: #{rbp_xformer_forward.1} parent=11 // pred_fallthru
          _
      $region12: #{rbp_xformer_forward.1} parent=5 // pred_fallthru
        _
      %p421 = scmp.lt.s32.totalorder %s28, 2
      // Predicated region
      $region57: #{rbp_xformer_forward.1} parent=5 // pred_check
        %p422 = pneg %p421
      $region58: #{rbp_xformer_forward.1} parent=5 // pred_check_branch
        %424 = sbr.rel (%p422) target = $region60
      $region59: #{rbp_xformer_forward.1} parent=5 // pred_region
        // Predicated region
        $region61: #{rbp_xformer_forward.1} parent=59 // pred_check
          %p425 = pneg %p48
        $region62: #{rbp_xformer_forward.1} parent=59 // pred_check_branch
          %427 = sbr.rel (%p425) target = $region64
        $region63: #{rbp_xformer_forward.1} parent=59 // pred_region
          %p428 = scmp.lt.s32.totalorder %s28, 1
          %s429 = scalar_select %p428, %s28, 1
          %s430 = smul.addr %s429, 2
          %s431 = smul.addr %s430, 8
          %s432 = scalar_lea.vmem %s0, %s431
        $region64: #{rbp_xformer_forward.1} parent=59 // pred_fallthru
          _
        // Predicated region
        $region65: #{rbp_xformer_forward.1} parent=59 // pred_check
          %p433 = pneg %p74
        $region66: #{rbp_xformer_forward.1} parent=59 // pred_check_branch
          %435 = sbr.rel (%p433) target = $region68
        $region67: #{rbp_xformer_forward.1} parent=59 // pred_region
          %p436 = scmp.lt.s32.totalorder %s28, 1
          %s437 = scalar_select %p436, %s28, 1
          %s438 = smul.addr %s437, 8
          %s439 = scalar_lea.vmem %s1, %s438
        $region68: #{rbp_xformer_forward.1} parent=59 // pred_fallthru
          _
      $region60: #{rbp_xformer_forward.1} parent=5 // pred_fallthru
        _
      %p440 = scmp.le.s32.totalorder 1, %s28
      %p441 = scmp.lt.s32.totalorder %s28, 3
      %p442 = pnand %p440, %p441
      %p443 = pneg %p442
      // Predicated region
      $region69: #{rbp_xformer_forward.1} parent=5 // pred_check
        _
      $region70: #{rbp_xformer_forward.1} parent=5 // pred_check_branch
        %445 = sbr.rel (%p442) target = $region72
      $region71: #{rbp_xformer_forward.1} parent=5 // pred_region
        %s446 = ssub.s32 %s28, 1
        // Predicated region
        $region73: #{rbp_xformer_forward.1} parent=71 // pred_check
          %p447 = pneg %p290
        $region74: #{rbp_xformer_forward.1} parent=71 // pred_check_branch
          %449 = sbr.rel (%p447) target = $region76
        $region75: #{rbp_xformer_forward.1} parent=71 // pred_region
          %450 = dma.done [#allocation3], 8192
        $region76: #{rbp_xformer_forward.1} parent=71 // pred_fallthru
          _
        %p451 = scmp.lt.s32.totalorder %s33, 1
        %s452 = scalar_select %p451, %s33, 1
        %s453 = smul.addr %s452, 2
        %s454 = smul.addr %s453, 8
        %s455 = scalar_lea.vmem %s0, %s454
        %p456 = pneg %p54
        %p457 = pneg %p51
        %p458 = scmp.lt.s32.totalorder %s33, 1
        %s459 = scalar_select %p458, %s33, 1
        %s460 = smul.addr %s459, 8
        %s461 = scalar_lea.vmem %s1, %s460
        %p462 = pneg %p80
        %p463 = pneg %p77
        %p464 = pneg %p101
        %p465 = pneg %p98
        %p466 = pneg %p122
        %p467 = pneg %p119
        %p468 = pneg %p143
        %p469 = pneg %p140
        %p470 = pneg %p164
        %p471 = pneg %p161
        %p472 = pneg %p185
        %p473 = pneg %p182
        %p474 = pneg %p206
        %p475 = pneg %p203
        %p476 = pneg %p227
        %p477 = pneg %p224
        %p478 = pneg %p248
        %p479 = pneg %p245
        %p480 = pneg %p269
        %p481 = pneg %p266
        %p482 = pneg %p290
        %p483 = pneg %p287
        %p484 = pneg %p311
        %p485 = pneg %p308
        %p486 = pneg %p337
        %p487 = pneg %p334
        %s488 = sand.u32 %s324, 1
        %s489 = scalar_lea.sflag [#allocation4], %s488
        %s490 = sand.u32 %s324, 1
        %s491 = smul.addr %s490, 16
        %s492 = scalar_lea.vmem [#allocation5], %s491
        %p493 = pneg %p363
        %p494 = pneg %p360
        %s495 = sand.u32 %s350, 1
        %s496 = scalar_lea.sflag [#allocation7], %s495
        %s497 = sand.u32 %s350, 1
        %s498 = scalar_lea.vmem [#allocation6], %s497
        %p499 = scmp.lt.s32.totalorder %s33, 1
        %s500 = scalar_select %p499, %s33, 1
        %s501 = smul.addr %s500, 2
        %s502 = smul.addr %s501, 8
        %s503 = scalar_lea.vmem %s0, %s502
        %p504 = scmp.lt.s32.totalorder %s33, 1
        %s505 = scalar_select %p504, %s33, 1
        %s506 = smul.addr %s505, 8
        %s507 = scalar_lea.vmem %s1, %s506
        %v509 = vld [vmem:[%s503] sm:$0xff]
        %v510 = vld [vmem:[%s503 + $0x8] sm:$0xff]
        %v511 = vld [vmem:[%s507] sm:$0xff]
        %v512 = vld [vmem:[%s2] sm:$0x1]
        %514 = vset.pattern.permute.xlu0 0
        %515 = vperm.xlu0 %514, %v509
        %v516 = vpop.permute.xlu0 %515
        %519 = vset.pattern.permute.xlu0 0
        %520 = vperm.xlu0 %519, %v510
        %v521 = vpop.permute.xlu0 %520
        %v523 = vlaneseq
        %v524 = vshrl.u32 %v523, 7
        %v525 = vsub.s32 0, %v524
        %v526 = vrot.slane %v512, %v525
        %v527 = vmul.f32 %v516, %v526
        %v528 = vmul.f32 %v521, %v526
        %v529 = vld [vmem:[%s2 + $0x1] sm:$0x1]
        %530 = vset.pattern.permute.xlu0 1
        %531 = vperm.xlu0 %530, %v509
        %v532 = vpop.permute.xlu0 %531
        %534 = vset.pattern.permute.xlu0 1
        %535 = vperm.xlu0 %534, %v510
        %v536 = vpop.permute.xlu0 %535
        %v538 = vlaneseq
        %v539 = vshrl.u32 %v538, 7
        %v540 = vsub.s32 0, %v539
        %v541 = vrot.slane %v529, %v540
        %v542 = vmul.f32 %v532, %v541
        %v543 = vmul.f32 %v536, %v541
        %v544 = vadd.f32 %v527, %v542
        %v545 = vadd.f32 %v528, %v543
        %v546 = vld [vmem:[%s2 + $0x2] sm:$0x1]
        %547 = vset.pattern.permute.xlu0 2
        %548 = vperm.xlu0 %547, %v509
        %v549 = vpop.permute.xlu0 %548
        %551 = vset.pattern.permute.xlu0 2
        %552 = vperm.xlu0 %551, %v510
        %v553 = vpop.permute.xlu0 %552
        %v555 = vlaneseq
        %v556 = vshrl.u32 %v555, 7
        %v557 = vsub.s32 0, %v556
        %v558 = vrot.slane %v546, %v557
        %v559 = vmul.f32 %v549, %v558
        %v560 = vmul.f32 %v553, %v558
        %v561 = vadd.f32 %v544, %v559
        %v562 = vadd.f32 %v545, %v560
        %v563 = vld [vmem:[%s2 + $0x3] sm:$0x1]
        %564 = vset.pattern.permute.xlu0 3
        %565 = vperm.xlu0 %564, %v509
        %v566 = vpop.permute.xlu0 %565
        %568 = vset.pattern.permute.xlu0 3
        %569 = vperm.xlu0 %568, %v510
        %v570 = vpop.permute.xlu0 %569
        %v572 = vlaneseq
        %v573 = vshrl.u32 %v572, 7
        %v574 = vsub.s32 0, %v573
        %v575 = vrot.slane %v563, %v574
        %v576 = vmul.f32 %v566, %v575
        %v577 = vmul.f32 %v570, %v575
        %v578 = vadd.f32 %v561, %v576
        %v579 = vadd.f32 %v562, %v577
        %v580 = vpack.c.bf16 %v579, %v578
        %v581 = vld [vmem:[%s10] sm:$0xff]
        %v582 = vld [vmem:[%s10 + $0x8] sm:$0xff]
        %v583 = vld [vmem:[%s10 + $0x10] sm:$0xff]
        %v584 = vld [vmem:[%s10 + $0x18] sm:$0xff]
        %v585 = vld [vmem:[%s3] ss:$4 sm:$0x3]
        %v587 = vlaneseq
        %v588 = vshrl.u32 %v587, 7
        %v589 = vsub.s32 0, %v588
        %v590 = vrot.slane %v585, %v589
        %v591 = vlaneseq
        %v592 = vshrl.u32 %v591, 7
        %v593 = vsub.s32 1, %v592
        %v594 = vrot.slane %v585, %v593
        %v598 = vrot.slane %v580, 2
        %v603 = vunpack.c.l.b16 %v581
        %v604 = vunpack.c.h.b16 %v581
        %v605 = vunpack.c.l.b16 %v582
        %v606 = vunpack.c.h.b16 %v582
        %v607 = vunpack.c.l.b16 %v583
        %v608 = vunpack.c.h.b16 %v583
        %v609 = vunpack.c.l.b16 %v584
        %v610 = vunpack.c.h.b16 %v584
        %v611 = vpack.c.b16 %v605, %v603
        %v612 = vpack.c.b16 %v606, %v604
        %v613 = vpack.c.b16 %v609, %v607
        %v614 = vpack.c.b16 %v610, %v608
        %vm619 = vcmask 261120
        %v621 = vsel %vm619, %v598, 0
        %623 = vmatprep.subr.bf16.mxu0 0
        %624 = vmatpush1.bf16.msra.mxu0 0
        %625 = vmatprep.subr.bf16.mxu0 0
        %626 = vmatpush1.bf16.msra.mxu0 0
        %627 = vmatprep.subr.bf16.mxu0 0
        %628 = vmatpush1.bf16.msra.mxu0 0
        %629 = vmatprep.subr.bf16.mxu0 0
        %630 = vmatpush1.bf16.msra.mxu0 0
        %631 = vmatprep.subr.bf16.mxu0 0
        %632 = vmatpush1.bf16.msra.mxu0 0
        %633 = vmatprep.subr.bf16.mxu0 0
        %634 = vmatpush1.bf16.msra.mxu0 0
        %635 = vmatprep.subr.bf16.mxu0 %v614
        %636 = vmatpush1.bf16.msra.mxu0 %v613
        %637 = vmatprep.subr.bf16.mxu0 %v612
        %638 = vmatpush1.bf16.msra.mxu0 %v611
        %639 = vmatprep.subr.bf16.mxu0 0
        %640 = vmatpush2.bf16.msra.mxu0 0
        %641 = vmatprep.subr.bf16.mxu0 0
        %642 = vmatpush2.bf16.msra.mxu0 0
        %643 = vmatprep.subr.bf16.mxu0 0
        %644 = vmatpush2.bf16.msra.mxu0 0
        %645 = vmatprep.subr.bf16.mxu0 0
        %646 = vmatpush2.bf16.msra.mxu0 0
        %647 = vmatprep.subr.bf16.mxu0 0
        %648 = vmatpush2.bf16.msra.mxu0 0
        %649 = vmatprep.subr.bf16.mxu0 0
        %650 = vmatpush2.bf16.msra.mxu0 0
        %651 = vmatprep.subr.bf16.mxu0 0
        %652 = vmatpush2.bf16.msra.mxu0 0
        %653 = vmatprep.subr.bf16.mxu0 0
        %654 = vmatpush2.bf16.msra.mxu0 0
        %655 = vmatprep.mubr.bf16.mxu0 0
        %656 = vmatmul.mubr.bf16.gmra.mxu0 %v621
        %v657 = vpop.f32.mrf.mxu0
        %v658 = vadd.f32 %v590, %v657
        %v659 = vpop.f32.mrf.mxu0
        %v660 = vadd.f32 %v594, %v659
        %v661 = vpop.f32.mrf.mxu0
        %v662 = vpop.f32.mrf.mxu0
        %663 = vdwg.mxu0
        %v664 = vmax.f32 %v658, 0.0
        %v665 = vmax.f32 %v660, 0.0
        %v666 = vand.u32 2147483647, %v658
        %v667 = vand.u32 2147483647, %v660
        %v668 = vsub.f32 0.0, %v666
        %v669 = vsub.f32 0.0, %v667
        %v670 = vmul.f32 %v668, 1.442695
        %v671 = vpow.pop %v670
        %v672 = vmul.f32 %v669, 1.442695
        %v673 = vpow.pop %v672
        %v674 = vadd.f32 %v671, 1.0
        %v675 = vadd.f32 %v673, 1.0
        %v676 = vlog2.pop %v674
        %v677 = vmul.f32 %v676, 0.6931472
        %v678 = vlog2.pop %v675
        %v679 = vmul.f32 %v678, 0.6931472
        %v680 = vadd.f32 %v664, %v677
        %v681 = vadd.f32 %v665, %v679
        %v682 = vpack.c.bf16 %v511, %v511
        %v683 = vld [vmem:[%s4] sm:$0xf]
        %v684 = vld [vmem:[%s4 + $0x4] sm:$0xf]
        %v685 = vld [vmem:[%s4 + $0x8] sm:$0xf]
        %v686 = vld [vmem:[%s4 + $0xc] sm:$0xf]
        %v691 = vunpack.c.l.b16 %v683
        %v692 = vunpack.c.l.b16 %v684
        %v693 = vunpack.c.l.b16 %v685
        %v694 = vunpack.c.l.b16 %v686
        %v695 = vpack.c.b16 %v692, %v691
        %v696 = vpack.c.b16 %v694, %v693
        %v700 = vsel %vm619, %v682, 0
        %702 = vmatprep.subr.bf16.mxu0 0
        %703 = vmatpush1.bf16.msra.mxu0 0
        %704 = vmatprep.subr.bf16.mxu0 0
        %705 = vmatpush1.bf16.msra.mxu0 0
        %706 = vmatprep.subr.bf16.mxu0 0
        %707 = vmatpush1.bf16.msra.mxu0 0
        %708 = vmatprep.subr.bf16.mxu0 0
        %709 = vmatpush1.bf16.msra.mxu0 0
        %710 = vmatprep.subr.bf16.mxu0 0
        %711 = vmatpush1.bf16.msra.mxu0 0
        %712 = vmatprep.subr.bf16.mxu0 0
        %713 = vmatpush1.bf16.msra.mxu0 0
        %714 = vmatprep.subr.bf16.mxu0 0
        %715 = vmatpush1.bf16.msra.mxu0 %v696
        %716 = vmatprep.subr.bf16.mxu0 0
        %717 = vmatpush1.bf16.msra.mxu0 %v695
        %718 = vmatprep.subr.bf16.mxu0 0
        %719 = vmatpush2.bf16.msra.mxu0 0
        %720 = vmatprep.subr.bf16.mxu0 0
        %721 = vmatpush2.bf16.msra.mxu0 0
        %722 = vmatprep.subr.bf16.mxu0 0
        %723 = vmatpush2.bf16.msra.mxu0 0
        %724 = vmatprep.subr.bf16.mxu0 0
        %725 = vmatpush2.bf16.msra.mxu0 0
        %726 = vmatprep.subr.bf16.mxu0 0
        %727 = vmatpush2.bf16.msra.mxu0 0
        %728 = vmatprep.subr.bf16.mxu0 0
        %729 = vmatpush2.bf16.msra.mxu0 0
        %730 = vmatprep.subr.bf16.mxu0 0
        %731 = vmatpush2.bf16.msra.mxu0 0
        %732 = vmatprep.subr.bf16.mxu0 0
        %733 = vmatpush2.bf16.msra.mxu0 0
        %734 = vmatprep.mubr.bf16.mxu0 0
        %735 = vmatmul.mubr.bf16.gmra.mxu0 %v700
        %v736 = vpop.f32.mrf.mxu0
        %v737 = vadd.f32 0.0, %v736
        %v738 = vpop.f32.mrf.mxu0
        %v739 = vpop.f32.mrf.mxu0
        %v740 = vpop.f32.mrf.mxu0
        %741 = vdwg.mxu0
        %v742 = vld [vmem:[%s2 + $0x4] sm:$0x1]
        %v743 = vld [vmem:[%s2 + $0x5] sm:$0x1]
        %v744 = vsel %vm619, %v578, 0.0
        %745 = vadd.xlane.f32.xlu0 %v744
        %v746 = vpop.xlane.xlu0 %745
        %v747 = vsel %vm619, %v579, 0.0
        %748 = vadd.xlane.f32.xlu0 %v747
        %v749 = vpop.xlane.xlu0 %748
        %v750 = vrcp.pop 32.0
        %v751 = vmul.f32 %v746, %v750
        %v752 = vmul.f32 %v749, %v750
        %v753 = vsub.f32 %v578, %v751
        %v754 = vsub.f32 %v579, %v752
        %v755 = vmul.f32 %v753, %v753
        %v756 = vmul.f32 %v754, %v754
        %v757 = vsel %vm619, %v755, 0.0
        %758 = vadd.xlane.f32.xlu0 %v757
        %v759 = vpop.xlane.xlu0 %758
        %v760 = vsel %vm619, %v756, 0.0
        %761 = vadd.xlane.f32.xlu0 %v760
        %v762 = vpop.xlane.xlu0 %761
        %v763 = vmul.f32 %v759, %v750
        %v764 = vmul.f32 %v762, %v750
        %v765 = vadd.f32 %v763, 1e-05
        %v766 = vadd.f32 %v764, 1e-05
        %v767 = vrsqrt.pop %v765
        %v768 = vrsqrt.pop %v766
        %v769 = vmul.f32 %v753, %v767
        %v770 = vmul.f32 %v754, %v768
        %v771 = vlaneseq
        %v772 = vshrl.u32 %v771, 7
        %v773 = vsub.s32 0, %v772
        %v774 = vrot.slane %v742, %v773
        %v775 = vmul.f32 %v769, %v774
        %v776 = vmul.f32 %v770, %v774
        %v777 = vlaneseq
        %v778 = vshrl.u32 %v777, 7
        %v779 = vsub.s32 0, %v778
        %v780 = vrot.slane %v743, %v779
        %v781 = vadd.f32 %v775, %v780
        %v782 = vadd.f32 %v776, %v780
        %v783 = vld [vmem:[%s2 + $0x6] sm:$0x1]
        %v784 = vld [vmem:[%s2 + $0x7] sm:$0x1]
        %v785 = vsel %vm619, %v737, 0.0
        %786 = vadd.xlane.f32.xlu0 %v785
        %v787 = vpop.xlane.xlu0 %786
        %v788 = vmul.f32 %v787, %v750
        %v789 = vsub.f32 %v737, %v788
        %v790 = vmul.f32 %v789, %v789
        %v791 = vsel %vm619, %v790, 0.0
        %792 = vadd.xlane.f32.xlu0 %v791
        %v793 = vpop.xlane.xlu0 %792
        %v794 = vmul.f32 %v793, %v750
        %v795 = vadd.f32 %v794, 1e-05
        %v796 = vrsqrt.pop %v795
        %v797 = vmul.f32 %v789, %v796
        %v798 = vlaneseq
        %v799 = vshrl.u32 %v798, 7
        %v800 = vsub.s32 0, %v799
        %v801 = vrot.slane %v783, %v800
        %v802 = vmul.f32 %v797, %v801
        %v803 = vlaneseq
        %v804 = vshrl.u32 %v803, 7
        %v805 = vsub.s32 0, %v804
        %v806 = vrot.slane %v784, %v805
        %v807 = vadd.f32 %v802, %v806
        %v808 = vpack.c.bf16 %v782, %v781
        %v809 = vld [vmem:[%s5] sm:$0xf]
        %v810 = vld [vmem:[%s5 + $0x4] sm:$0xf]
        %v811 = vld [vmem:[%s5 + $0x8] sm:$0xf]
        %v812 = vld [vmem:[%s5 + $0xc] sm:$0xf]
        %v817 = vunpack.c.l.b16 %v809
        %v818 = vunpack.c.l.b16 %v810
        %v819 = vunpack.c.l.b16 %v811
        %v820 = vunpack.c.l.b16 %v812
        %v821 = vpack.c.b16 %v818, %v817
        %v822 = vpack.c.b16 %v820, %v819
        %v826 = vsel %vm619, %v808, 0
        %828 = vmatprep.subr.bf16.mxu0 0
        %829 = vmatpush1.bf16.msra.mxu0 0
        %830 = vmatprep.subr.bf16.mxu0 0
        %831 = vmatpush1.bf16.msra.mxu0 0
        %832 = vmatprep.subr.bf16.mxu0 0
        %833 = vmatpush1.bf16.msra.mxu0 0
        %834 = vmatprep.subr.bf16.mxu0 0
        %835 = vmatpush1.bf16.msra.mxu0 0
        %836 = vmatprep.subr.bf16.mxu0 0
        %837 = vmatpush1.bf16.msra.mxu0 0
        %838 = vmatprep.subr.bf16.mxu0 0
        %839 = vmatpush1.bf16.msra.mxu0 0
        %840 = vmatprep.subr.bf16.mxu0 0
        %841 = vmatpush1.bf16.msra.mxu0 %v822
        %842 = vmatprep.subr.bf16.mxu0 0
        %843 = vmatpush1.bf16.msra.mxu0 %v821
        %844 = vmatprep.subr.bf16.mxu0 0
        %845 = vmatpush2.bf16.msra.mxu0 0
        %846 = vmatprep.subr.bf16.mxu0 0
        %847 = vmatpush2.bf16.msra.mxu0 0
        %848 = vmatprep.subr.bf16.mxu0 0
        %849 = vmatpush2.bf16.msra.mxu0 0
        %850 = vmatprep.subr.bf16.mxu0 0
        %851 = vmatpush2.bf16.msra.mxu0 0
        %852 = vmatprep.subr.bf16.mxu0 0
        %853 = vmatpush2.bf16.msra.mxu0 0
        %854 = vmatprep.subr.bf16.mxu0 0
        %855 = vmatpush2.bf16.msra.mxu0 0
        %856 = vmatprep.subr.bf16.mxu0 0
        %857 = vmatpush2.bf16.msra.mxu0 0
        %858 = vmatprep.subr.bf16.mxu0 0
        %859 = vmatpush2.bf16.msra.mxu0 0
        %860 = vmatprep.mubr.bf16.mxu0 0
        %861 = vmatmul.mubr.bf16.gmra.mxu0 %v826
        %v862 = vpop.f32.mrf.mxu0
        %v863 = vadd.f32 0.0, %v862
        %v864 = vpop.f32.mrf.mxu0
        %v865 = vpop.f32.mrf.mxu0
        %v866 = vadd.f32 0.0, %v865
        %v867 = vpop.f32.mrf.mxu0
        %868 = vdwg.mxu0
        %v869 = vpack.c.bf16 %v807, %v807
        %v870 = vld [vmem:[%s6] sm:$0xf]
        %v871 = vld [vmem:[%s6 + $0x4] sm:$0xf]
        %v872 = vld [vmem:[%s6 + $0x8] sm:$0xf]
        %v873 = vld [vmem:[%s6 + $0xc] sm:$0xf]
        %v878 = vunpack.c.l.b16 %v870
        %v879 = vunpack.c.l.b16 %v871
        %v880 = vunpack.c.l.b16 %v872
        %v881 = vunpack.c.l.b16 %v873
        %v882 = vpack.c.b16 %v879, %v878
        %v883 = vpack.c.b16 %v881, %v880
        %v887 = vsel %vm619, %v869, 0
        %889 = vmatprep.subr.bf16.mxu0 0
        %890 = vmatpush1.bf16.msra.mxu0 0
        %891 = vmatprep.subr.bf16.mxu0 0
        %892 = vmatpush1.bf16.msra.mxu0 0
        %893 = vmatprep.subr.bf16.mxu0 0
        %894 = vmatpush1.bf16.msra.mxu0 0
        %895 = vmatprep.subr.bf16.mxu0 0
        %896 = vmatpush1.bf16.msra.mxu0 0
        %897 = vmatprep.subr.bf16.mxu0 0
        %898 = vmatpush1.bf16.msra.mxu0 0
        %899 = vmatprep.subr.bf16.mxu0 0
        %900 = vmatpush1.bf16.msra.mxu0 0
        %901 = vmatprep.subr.bf16.mxu0 0
        %902 = vmatpush1.bf16.msra.mxu0 %v883
        %903 = vmatprep.subr.bf16.mxu0 0
        %904 = vmatpush1.bf16.msra.mxu0 %v882
        %905 = vmatprep.subr.bf16.mxu0 0
        %906 = vmatpush2.bf16.msra.mxu0 0
        %907 = vmatprep.subr.bf16.mxu0 0
        %908 = vmatpush2.bf16.msra.mxu0 0
        %909 = vmatprep.subr.bf16.mxu0 0
        %910 = vmatpush2.bf16.msra.mxu0 0
        %911 = vmatprep.subr.bf16.mxu0 0
        %912 = vmatpush2.bf16.msra.mxu0 0
        %913 = vmatprep.subr.bf16.mxu0 0
        %914 = vmatpush2.bf16.msra.mxu0 0
        %915 = vmatprep.subr.bf16.mxu0 0
        %916 = vmatpush2.bf16.msra.mxu0 0
        %917 = vmatprep.subr.bf16.mxu0 0
        %918 = vmatpush2.bf16.msra.mxu0 0
        %919 = vmatprep.subr.bf16.mxu0 0
        %920 = vmatpush2.bf16.msra.mxu0 0
        %921 = vmatprep.mubr.bf16.mxu0 0
        %922 = vmatmul.mubr.bf16.gmra.mxu0 %v887
        %v923 = vpop.f32.mrf.mxu0
        %v924 = vadd.f32 0.0, %v923
        %v925 = vpop.f32.mrf.mxu0
        %v926 = vpop.f32.mrf.mxu0
        %v927 = vpop.f32.mrf.mxu0
        %928 = vdwg.mxu0
        %v929 = vmul.f32 %v863, 0.35355338
        %v930 = vmul.f32 %v866, 0.35355338
        %933 = vrot.lane.b32.xlu0 %v929, 120
        %v934 = vpop.permute.xlu0 %933
        %935 = vrot.lane.b32.xlu0 %v930, 120
        %v936 = vpop.permute.xlu0 %935
        %939 = vrot.lane.b32.xlu0 %v929, 112
        %v940 = vpop.permute.xlu0 %939
        %941 = vrot.lane.b32.xlu0 %v930, 112
        %v942 = vpop.permute.xlu0 %941
        %945 = vrot.lane.b32.xlu0 %v929, 104
        %v946 = vpop.permute.xlu0 %945
        %947 = vrot.lane.b32.xlu0 %v930, 104
        %v948 = vpop.permute.xlu0 %947
        %v951 = vpack.c.bf16 %v930, %v929
        %v952 = vpack.c.bf16 %v936, %v934
        %v953 = vpack.c.bf16 %v942, %v940
        %v954 = vpack.c.bf16 %v948, %v946
        %956 = vrot.lane.b32.xlu0 %v924, 120
        %v957 = vpop.permute.xlu0 %956
        %959 = vrot.lane.b32.xlu0 %v924, 112
        %v960 = vpop.permute.xlu0 %959
        %962 = vrot.lane.b32.xlu0 %v924, 104
        %v963 = vpop.permute.xlu0 %962
        %v965 = vpack.c.bf16 %v924, %v924
        %v966 = vpack.c.bf16 %v957, %v957
        %v967 = vpack.c.bf16 %v960, %v960
        %v968 = vpack.c.bf16 %v963, %v963
        %971 = vrot.lane.b32.xlu0 %v863, 120
        %v972 = vpop.permute.xlu0 %971
        %973 = vrot.lane.b32.xlu0 %v866, 120
        %v974 = vpop.permute.xlu0 %973
        %977 = vrot.lane.b32.xlu0 %v863, 112
        %v978 = vpop.permute.xlu0 %977
        %979 = vrot.lane.b32.xlu0 %v866, 112
        %v980 = vpop.permute.xlu0 %979
        %983 = vrot.lane.b32.xlu0 %v863, 104
        %v984 = vpop.permute.xlu0 %983
        %985 = vrot.lane.b32.xlu0 %v866, 104
        %v986 = vpop.permute.xlu0 %985
        %v989 = vpack.c.bf16 %v866, %v863
        %v990 = vpack.c.bf16 %v974, %v972
        %v991 = vpack.c.bf16 %v980, %v978
        %v992 = vpack.c.bf16 %v986, %v984
        %vm993 = vcmask 64512
        %v995 = vsel %vm993, %v951, 0
        %v998 = vsel %vm993, %v965, 0
        %1000 = vmatprep.subr.bf16.mxu0 0
        %1001 = vmatpush1.bf16.xpose.msra.mxu0 0
        %1002 = vmatprep.subr.bf16.mxu0 0
        %1003 = vmatpush1.bf16.xpose.msra.mxu0 0
        %1004 = vmatprep.subr.bf16.mxu0 0
        %1005 = vmatpush1.bf16.xpose.msra.mxu0 0
        %1006 = vmatprep.subr.bf16.mxu0 0
        %1007 = vmatpush1.bf16.xpose.msra.mxu0 0
        %1008 = vmatprep.subr.bf16.mxu0 0
        %1009 = vmatpush1.bf16.xpose.msra.mxu0 0
        %1010 = vmatprep.subr.bf16.mxu0 0
        %1011 = vmatpush1.bf16.xpose.msra.mxu0 0
        %1012 = vmatprep.subr.bf16.mxu0 0
        %1013 = vmatpush1.bf16.xpose.msra.mxu0 0
        %1014 = vmatprep.subr.bf16.mxu0 0
        %1015 = vmatpush1.bf16.xpose.msra.mxu0 %v998
        %1016 = vmatprep.subr.bf16.mxu0 0
        %1017 = vmatpush2.bf16.xpose.msra.mxu0 0
        %1018 = vmatprep.subr.bf16.mxu0 0
        %1019 = vmatpush2.bf16.xpose.msra.mxu0 0
        %1020 = vmatprep.subr.bf16.mxu0 0
        %1021 = vmatpush2.bf16.xpose.msra.mxu0 0
        %1022 = vmatprep.subr.bf16.mxu0 0
        %1023 = vmatpush2.bf16.xpose.msra.mxu0 0
        %1024 = vmatprep.subr.bf16.mxu0 0
        %1025 = vmatpush2.bf16.xpose.msra.mxu0 0
        %1026 = vmatprep.subr.bf16.mxu0 0
        %1027 = vmatpush2.bf16.xpose.msra.mxu0 0
        %1028 = vmatprep.subr.bf16.mxu0 0
        %1029 = vmatpush2.bf16.xpose.msra.mxu0 0
        %1030 = vmatprep.subr.bf16.mxu0 0
        %1031 = vmatpush2.bf16.xpose.msra.mxu0 0
        %1032 = vmatprep.mubr.bf16.mxu0 0
        %1033 = vmatmul.mubr.bf16.gmra.mxu0 %v995
        %v1034 = vpop.f32.mrf.mxu0
        %v1035 = vadd.f32 0.0, %v1034
        %v1036 = vpop.f32.mrf.mxu0
        %v1037 = vpop.f32.mrf.mxu0
        %v1038 = vadd.f32 0.0, %v1037
        %v1039 = vpop.f32.mrf.mxu0
        %1040 = vdwg.mxu0
        %v1042 = vsel %vm993, %v952, 0
        %v1045 = vsel %vm993, %v966, 0
        %1047 = vmatprep.subr.bf16.mxu0 0
        %1048 = vmatpush1.bf16.xpose.msra.mxu0 0
        %1049 = vmatprep.subr.bf16.mxu0 0
        %1050 = vmatpush1.bf16.xpose.msra.mxu0 0
        %1051 = vmatprep.subr.bf16.mxu0 0
        %1052 = vmatpush1.bf16.xpose.msra.mxu0 0
        %1053 = vmatprep.subr.bf16.mxu0 0
        %1054 = vmatpush1.bf16.xpose.msra.mxu0 0
        %1055 = vmatprep.subr.bf16.mxu0 0
        %1056 = vmatpush1.bf16.xpose.msra.mxu0 0
        %1057 = vmatprep.subr.bf16.mxu0 0
        %1058 = vmatpush1.bf16.xpose.msra.mxu0 0
        %1059 = vmatprep.subr.bf16.mxu0 0
        %1060 = vmatpush1.bf16.xpose.msra.mxu0 0
        %1061 = vmatprep.subr.bf16.mxu0 0
        %1062 = vmatpush1.bf16.xpose.msra.mxu0 %v1045
        %1063 = vmatprep.subr.bf16.mxu0 0
        %1064 = vmatpush2.bf16.xpose.msra.mxu0 0
        %1065 = vmatprep.subr.bf16.mxu0 0
        %1066 = vmatpush2.bf16.xpose.msra.mxu0 0
        %1067 = vmatprep.subr.bf16.mxu0 0
        %1068 = vmatpush2.bf16.xpose.msra.mxu0 0
        %1069 = vmatprep.subr.bf16.mxu0 0
        %1070 = vmatpush2.bf16.xpose.msra.mxu0 0
        %1071 = vmatprep.subr.bf16.mxu0 0
        %1072 = vmatpush2.bf16.xpose.msra.mxu0 0
        %1073 = vmatprep.subr.bf16.mxu0 0
        %1074 = vmatpush2.bf16.xpose.msra.mxu0 0
        %1075 = vmatprep.subr.bf16.mxu0 0
        %1076 = vmatpush2.bf16.xpose.msra.mxu0 0
        %1077 = vmatprep.subr.bf16.mxu0 0
        %1078 = vmatpush2.bf16.xpose.msra.mxu0 0
        %1079 = vmatprep.mubr.bf16.mxu0 0
        %1080 = vmatmul.mubr.bf16.gmra.mxu0 %v1042
        %v1081 = vpop.f32.mrf.mxu0
        %v1082 = vadd.f32 0.0, %v1081
        %v1083 = vpop.f32.mrf.mxu0
        %v1084 = vpop.f32.mrf.mxu0
        %v1085 = vadd.f32 0.0, %v1084
        %v1086 = vpop.f32.mrf.mxu0
        %1087 = vdwg.mxu0
        %v1089 = vsel %vm993, %v953, 0
        %v1092 = vsel %vm993, %v967, 0
        %1094 = vmatprep.subr.bf16.mxu0 0
        %1095 = vmatpush1.bf16.xpose.msra.mxu0 0
        %1096 = vmatprep.subr.bf16.mxu0 0
        %1097 = vmatpush1.bf16.xpose.msra.mxu0 0
        %1098 = vmatprep.subr.bf16.mxu0 0
        %1099 = vmatpush1.bf16.xpose.msra.mxu0 0
        %1100 = vmatprep.subr.bf16.mxu0 0
        %1101 = vmatpush1.bf16.xpose.msra.mxu0 0
        %1102 = vmatprep.subr.bf16.mxu0 0
        %1103 = vmatpush1.bf16.xpose.msra.mxu0 0
        %1104 = vmatprep.subr.bf16.mxu0 0
        %1105 = vmatpush1.bf16.xpose.msra.mxu0 0
        %1106 = vmatprep.subr.bf16.mxu0 0
        %1107 = vmatpush1.bf16.xpose.msra.mxu0 0
        %1108 = vmatprep.subr.bf16.mxu0 0
        %1109 = vmatpush1.bf16.xpose.msra.mxu0 %v1092
        %1110 = vmatprep.subr.bf16.mxu0 0
        %1111 = vmatpush2.bf16.xpose.msra.mxu0 0
        %1112 = vmatprep.subr.bf16.mxu0 0
        %1113 = vmatpush2.bf16.xpose.msra.mxu0 0
        %1114 = vmatprep.subr.bf16.mxu0 0
        %1115 = vmatpush2.bf16.xpose.msra.mxu0 0
        %1116 = vmatprep.subr.bf16.mxu0 0
        %1117 = vmatpush2.bf16.xpose.msra.mxu0 0
        %1118 = vmatprep.subr.bf16.mxu0 0
        %1119 = vmatpush2.bf16.xpose.msra.mxu0 0
        %1120 = vmatprep.subr.bf16.mxu0 0
        %1121 = vmatpush2.bf16.xpose.msra.mxu0 0
        %1122 = vmatprep.subr.bf16.mxu0 0
        %1123 = vmatpush2.bf16.xpose.msra.mxu0 0
        %1124 = vmatprep.subr.bf16.mxu0 0
        %1125 = vmatpush2.bf16.xpose.msra.mxu0 0
        %1126 = vmatprep.mubr.bf16.mxu0 0
        %1127 = vmatmul.mubr.bf16.gmra.mxu0 %v1089
        %v1128 = vpop.f32.mrf.mxu0
        %v1129 = vadd.f32 0.0, %v1128
        %v1130 = vpop.f32.mrf.mxu0
        %v1131 = vpop.f32.mrf.mxu0
        %v1132 = vadd.f32 0.0, %v1131
        %v1133 = vpop.f32.mrf.mxu0
        %1134 = vdwg.mxu0
        %v1136 = vsel %vm993, %v954, 0
        %v1139 = vsel %vm993, %v968, 0
        %1141 = vmatprep.subr.bf16.mxu0 0
        %1142 = vmatpush1.bf16.xpose.msra.mxu0 0
        %1143 = vmatprep.subr.bf16.mxu0 0
        %1144 = vmatpush1.bf16.xpose.msra.mxu0 0
        %1145 = vmatprep.subr.bf16.mxu0 0
        %1146 = vmatpush1.bf16.xpose.msra.mxu0 0
        %1147 = vmatprep.subr.bf16.mxu0 0
        %1148 = vmatpush1.bf16.xpose.msra.mxu0 0
        %1149 = vmatprep.subr.bf16.mxu0 0
        %1150 = vmatpush1.bf16.xpose.msra.mxu0 0
        %1151 = vmatprep.subr.bf16.mxu0 0
        %1152 = vmatpush1.bf16.xpose.msra.mxu0 0
        %1153 = vmatprep.subr.bf16.mxu0 0
        %1154 = vmatpush1.bf16.xpose.msra.mxu0 0
        %1155 = vmatprep.subr.bf16.mxu0 0
        %1156 = vmatpush1.bf16.xpose.msra.mxu0 %v1139
        %1157 = vmatprep.subr.bf16.mxu0 0
        %1158 = vmatpush2.bf16.xpose.msra.mxu0 0
        %1159 = vmatprep.subr.bf16.mxu0 0
        %1160 = vmatpush2.bf16.xpose.msra.mxu0 0
        %1161 = vmatprep.subr.bf16.mxu0 0
        %1162 = vmatpush2.bf16.xpose.msra.mxu0 0
        %1163 = vmatprep.subr.bf16.mxu0 0
        %1164 = vmatpush2.bf16.xpose.msra.mxu0 0
        %1165 = vmatprep.subr.bf16.mxu0 0
        %1166 = vmatpush2.bf16.xpose.msra.mxu0 0
        %1167 = vmatprep.subr.bf16.mxu0 0
        %1168 = vmatpush2.bf16.xpose.msra.mxu0 0
        %1169 = vmatprep.subr.bf16.mxu0 0
        %1170 = vmatpush2.bf16.xpose.msra.mxu0 0
        %1171 = vmatprep.subr.bf16.mxu0 0
        %1172 = vmatpush2.bf16.xpose.msra.mxu0 0
        %1173 = vmatprep.mubr.bf16.mxu0 0
        %1174 = vmatmul.mubr.bf16.gmra.mxu0 %v1136
        %v1175 = vpop.f32.mrf.mxu0
        %v1176 = vadd.f32 0.0, %v1175
        %v1177 = vpop.f32.mrf.mxu0
        %v1178 = vpop.f32.mrf.mxu0
        %v1179 = vadd.f32 0.0, %v1178
        %v1180 = vpop.f32.mrf.mxu0
        %1181 = vdwg.mxu0
        %v1182 = vsel %vm993, %v1035, -inf
        %1183 = vmax.xlane.f32.xlu0 %v1182
        %v1184 = vpop.xlane.xlu0 %1183
        %v1185 = vsel %vm993, %v1038, -inf
        %1186 = vmax.xlane.f32.xlu0 %v1185
        %v1187 = vpop.xlane.xlu0 %1186
        %v1188 = vsel %vm993, %v1082, -inf
        %1189 = vmax.xlane.f32.xlu0 %v1188
        %v1190 = vpop.xlane.xlu0 %1189
        %v1191 = vsel %vm993, %v1085, -inf
        %1192 = vmax.xlane.f32.xlu0 %v1191
        %v1193 = vpop.xlane.xlu0 %1192
        %v1194 = vsel %vm993, %v1129, -inf
        %1195 = vmax.xlane.f32.xlu0 %v1194
        %v1196 = vpop.xlane.xlu0 %1195
        %v1197 = vsel %vm993, %v1132, -inf
        %1198 = vmax.xlane.f32.xlu0 %v1197
        %v1199 = vpop.xlane.xlu0 %1198
        %v1200 = vsel %vm993, %v1176, -inf
        %1201 = vmax.xlane.f32.xlu0 %v1200
        %v1202 = vpop.xlane.xlu0 %1201
        %v1203 = vsel %vm993, %v1179, -inf
        %1204 = vmax.xlane.f32.xlu0 %v1203
        %v1205 = vpop.xlane.xlu0 %1204
        %v1206 = vsub.f32 %v1035, %v1184
        %v1207 = vsub.f32 %v1038, %v1187
        %v1208 = vsub.f32 %v1082, %v1190
        %v1209 = vsub.f32 %v1085, %v1193
        %v1210 = vsub.f32 %v1129, %v1196
        %v1211 = vsub.f32 %v1132, %v1199
        %v1212 = vsub.f32 %v1176, %v1202
        %v1213 = vsub.f32 %v1179, %v1205
        %v1214 = vmul.f32 %v1206, 1.442695
        %v1215 = vpow.pop %v1214
        %v1216 = vmul.f32 %v1207, 1.442695
        %v1217 = vpow.pop %v1216
        %v1218 = vmul.f32 %v1208, 1.442695
        %v1219 = vpow.pop %v1218
        %v1220 = vmul.f32 %v1209, 1.442695
        %v1221 = vpow.pop %v1220
        %v1222 = vmul.f32 %v1210, 1.442695
        %v1223 = vpow.pop %v1222
        %v1224 = vmul.f32 %v1211, 1.442695
        %v1225 = vpow.pop %v1224
        %v1226 = vmul.f32 %v1212, 1.442695
        %v1227 = vpow.pop %v1226
        %v1228 = vmul.f32 %v1213, 1.442695
        %v1229 = vpow.pop %v1228
        %v1230 = vsel %vm993, %v1215, 0.0
        %1231 = vadd.xlane.f32.xlu0 %v1230
        %v1232 = vpop.xlane.xlu0 %1231
        %v1233 = vsel %vm993, %v1217, 0.0
        %1234 = vadd.xlane.f32.xlu0 %v1233
        %v1235 = vpop.xlane.xlu0 %1234
        %v1236 = vsel %vm993, %v1219, 0.0
        %1237 = vadd.xlane.f32.xlu0 %v1236
        %v1238 = vpop.xlane.xlu0 %1237
        %v1239 = vsel %vm993, %v1221, 0.0
        %1240 = vadd.xlane.f32.xlu0 %v1239
        %v1241 = vpop.xlane.xlu0 %1240
        %v1242 = vsel %vm993, %v1223, 0.0
        %1243 = vadd.xlane.f32.xlu0 %v1242
        %v1244 = vpop.xlane.xlu0 %1243
        %v1245 = vsel %vm993, %v1225, 0.0
        %1246 = vadd.xlane.f32.xlu0 %v1245
        %v1247 = vpop.xlane.xlu0 %1246
        %v1248 = vsel %vm993, %v1227, 0.0
        %1249 = vadd.xlane.f32.xlu0 %v1248
        %v1250 = vpop.xlane.xlu0 %1249
        %v1251 = vsel %vm993, %v1229, 0.0
        %1252 = vadd.xlane.f32.xlu0 %v1251
        %v1253 = vpop.xlane.xlu0 %1252
        %v1254 = vrcp.pop %v1232
        %v1255 = vrcp.pop %v1235
        %v1256 = vrcp.pop %v1238
        %v1257 = vrcp.pop %v1241
        %v1258 = vrcp.pop %v1244
        %v1259 = vrcp.pop %v1247
        %v1260 = vrcp.pop %v1250
        %v1261 = vrcp.pop %v1253
        %v1262 = vmul.f32 %v1215, %v1254
        %v1263 = vmul.f32 %v1217, %v1255
        %v1264 = vmul.f32 %v1219, %v1256
        %v1265 = vmul.f32 %v1221, %v1257
        %v1266 = vmul.f32 %v1223, %v1258
        %v1267 = vmul.f32 %v1225, %v1259
        %v1268 = vmul.f32 %v1227, %v1260
        %v1269 = vmul.f32 %v1229, %v1261
        %v1270 = vld [vmem:[%s7] sm:$0xf]
        %v1271 = vld [vmem:[%s7 + $0x4] sm:$0xf]
        %v1272 = vld [vmem:[%s7 + $0x8] sm:$0xf]
        %v1273 = vld [vmem:[%s7 + $0xc] sm:$0xf]
        %1275 = vrot.lane.b32.xlu0 %v965, 96
        %v1276 = vpop.permute.xlu0 %1275
        %v1278 = vsel %vm993, %v1276, 0
        %vm1280 = vcmask 1043456
        %v1282 = vsel %vm1280, %v1270, 0
        %1284 = vmatprep.subr.bf16.mxu0 0
        %1285 = vmatpush1.bf16.msra.mxu0 0
        %1286 = vmatprep.subr.bf16.mxu0 0
        %1287 = vmatpush1.bf16.msra.mxu0 0
        %1288 = vmatprep.subr.bf16.mxu0 0
        %1289 = vmatpush1.bf16.msra.mxu0 0
        %1290 = vmatprep.subr.bf16.mxu0 0
        %1291 = vmatpush1.bf16.msra.mxu0 0
        %1292 = vmatprep.subr.bf16.mxu0 0
        %1293 = vmatpush1.bf16.msra.mxu0 0
        %1294 = vmatprep.subr.bf16.mxu0 0
        %1295 = vmatpush1.bf16.msra.mxu0 0
        %1296 = vmatprep.subr.bf16.mxu0 0
        %1297 = vmatpush1.bf16.msra.mxu0 0
        %1298 = vmatprep.subr.bf16.mxu0 0
        %1299 = vmatpush1.bf16.msra.mxu0 %v1282
        %1300 = vmatprep.subr.bf16.mxu0 0
        %1301 = vmatpush2.bf16.msra.mxu0 0
        %1302 = vmatprep.subr.bf16.mxu0 0
        %1303 = vmatpush2.bf16.msra.mxu0 0
        %1304 = vmatprep.subr.bf16.mxu0 0
        %1305 = vmatpush2.bf16.msra.mxu0 0
        %1306 = vmatprep.subr.bf16.mxu0 0
        %1307 = vmatpush2.bf16.msra.mxu0 0
        %1308 = vmatprep.subr.bf16.mxu0 0
        %1309 = vmatpush2.bf16.msra.mxu0 0
        %1310 = vmatprep.subr.bf16.mxu0 0
        %1311 = vmatpush2.bf16.msra.mxu0 0
        %1312 = vmatprep.subr.bf16.mxu0 0
        %1313 = vmatpush2.bf16.msra.mxu0 0
        %1314 = vmatprep.subr.bf16.mxu0 0
        %1315 = vmatpush2.bf16.msra.mxu0 0
        %1316 = vmatprep.mubr.bf16.mxu0 0
        %1317 = vmatmul.mubr.bf16.gmra.mxu0 %v1278
        %v1318 = vpop.f32.mrf.mxu0
        %v1319 = vadd.f32 0.0, %v1318
        %v1320 = vpop.f32.mrf.mxu0
        %v1321 = vpop.f32.mrf.mxu0
        %v1322 = vpop.f32.mrf.mxu0
        %1323 = vdwg.mxu0
        %1325 = vrot.lane.b32.xlu0 %v966, 96
        %v1326 = vpop.permute.xlu0 %1325
        %v1328 = vsel %vm993, %v1326, 0
        %v1331 = vsel %vm1280, %v1271, 0
        %1333 = vmatprep.subr.bf16.mxu0 0
        %1334 = vmatpush1.bf16.msra.mxu0 0
        %1335 = vmatprep.subr.bf16.mxu0 0
        %1336 = vmatpush1.bf16.msra.mxu0 0
        %1337 = vmatprep.subr.bf16.mxu0 0
        %1338 = vmatpush1.bf16.msra.mxu0 0
        %1339 = vmatprep.subr.bf16.mxu0 0
        %1340 = vmatpush1.bf16.msra.mxu0 0
        %1341 = vmatprep.subr.bf16.mxu0 0
        %1342 = vmatpush1.bf16.msra.mxu0 0
        %1343 = vmatprep.subr.bf16.mxu0 0
        %1344 = vmatpush1.bf16.msra.mxu0 0
        %1345 = vmatprep.subr.bf16.mxu0 0
        %1346 = vmatpush1.bf16.msra.mxu0 0
        %1347 = vmatprep.subr.bf16.mxu0 0
        %1348 = vmatpush1.bf16.msra.mxu0 %v1331
        %1349 = vmatprep.subr.bf16.mxu0 0
        %1350 = vmatpush2.bf16.msra.mxu0 0
        %1351 = vmatprep.subr.bf16.mxu0 0
        %1352 = vmatpush2.bf16.msra.mxu0 0
        %1353 = vmatprep.subr.bf16.mxu0 0
        %1354 = vmatpush2.bf16.msra.mxu0 0
        %1355 = vmatprep.subr.bf16.mxu0 0
        %1356 = vmatpush2.bf16.msra.mxu0 0
        %1357 = vmatprep.subr.bf16.mxu0 0
        %1358 = vmatpush2.bf16.msra.mxu0 0
        %1359 = vmatprep.subr.bf16.mxu0 0
        %1360 = vmatpush2.bf16.msra.mxu0 0
        %1361 = vmatprep.subr.bf16.mxu0 0
        %1362 = vmatpush2.bf16.msra.mxu0 0
        %1363 = vmatprep.subr.bf16.mxu0 0
        %1364 = vmatpush2.bf16.msra.mxu0 0
        %1365 = vmatprep.mubr.bf16.mxu0 0
        %1366 = vmatmul.mubr.bf16.gmra.mxu0 %v1328
        %v1367 = vpop.f32.mrf.mxu0
        %v1368 = vadd.f32 0.0, %v1367
        %v1369 = vpop.f32.mrf.mxu0
        %v1370 = vpop.f32.mrf.mxu0
        %v1371 = vpop.f32.mrf.mxu0
        %1372 = vdwg.mxu0
        %1374 = vrot.lane.b32.xlu0 %v967, 96
        %v1375 = vpop.permute.xlu0 %1374
        %v1377 = vsel %vm993, %v1375, 0
        %v1380 = vsel %vm1280, %v1272, 0
        %1382 = vmatprep.subr.bf16.mxu0 0
        %1383 = vmatpush1.bf16.msra.mxu0 0
        %1384 = vmatprep.subr.bf16.mxu0 0
        %1385 = vmatpush1.bf16.msra.mxu0 0
        %1386 = vmatprep.subr.bf16.mxu0 0
        %1387 = vmatpush1.bf16.msra.mxu0 0
        %1388 = vmatprep.subr.bf16.mxu0 0
        %1389 = vmatpush1.bf16.msra.mxu0 0
        %1390 = vmatprep.subr.bf16.mxu0 0
        %1391 = vmatpush1.bf16.msra.mxu0 0
        %1392 = vmatprep.subr.bf16.mxu0 0
        %1393 = vmatpush1.bf16.msra.mxu0 0
        %1394 = vmatprep.subr.bf16.mxu0 0
        %1395 = vmatpush1.bf16.msra.mxu0 0
        %1396 = vmatprep.subr.bf16.mxu0 0
        %1397 = vmatpush1.bf16.msra.mxu0 %v1380
        %1398 = vmatprep.subr.bf16.mxu0 0
        %1399 = vmatpush2.bf16.msra.mxu0 0
        %1400 = vmatprep.subr.bf16.mxu0 0
        %1401 = vmatpush2.bf16.msra.mxu0 0
        %1402 = vmatprep.subr.bf16.mxu0 0
        %1403 = vmatpush2.bf16.msra.mxu0 0
        %1404 = vmatprep.subr.bf16.mxu0 0
        %1405 = vmatpush2.bf16.msra.mxu0 0
        %1406 = vmatprep.subr.bf16.mxu0 0
        %1407 = vmatpush2.bf16.msra.mxu0 0
        %1408 = vmatprep.subr.bf16.mxu0 0
        %1409 = vmatpush2.bf16.msra.mxu0 0
        %1410 = vmatprep.subr.bf16.mxu0 0
        %1411 = vmatpush2.bf16.msra.mxu0 0
        %1412 = vmatprep.subr.bf16.mxu0 0
        %1413 = vmatpush2.bf16.msra.mxu0 0
        %1414 = vmatprep.mubr.bf16.mxu0 0
        %1415 = vmatmul.mubr.bf16.gmra.mxu0 %v1377
        %v1416 = vpop.f32.mrf.mxu0
        %v1417 = vadd.f32 0.0, %v1416
        %v1418 = vpop.f32.mrf.mxu0
        %v1419 = vpop.f32.mrf.mxu0
        %v1420 = vpop.f32.mrf.mxu0
        %1421 = vdwg.mxu0
        %1423 = vrot.lane.b32.xlu0 %v968, 96
        %v1424 = vpop.permute.xlu0 %1423
        %v1426 = vsel %vm993, %v1424, 0
        %v1429 = vsel %vm1280, %v1273, 0
        %1431 = vmatprep.subr.bf16.mxu0 0
        %1432 = vmatpush1.bf16.msra.mxu0 0
        %1433 = vmatprep.subr.bf16.mxu0 0
        %1434 = vmatpush1.bf16.msra.mxu0 0
        %1435 = vmatprep.subr.bf16.mxu0 0
        %1436 = vmatpush1.bf16.msra.mxu0 0
        %1437 = vmatprep.subr.bf16.mxu0 0
        %1438 = vmatpush1.bf16.msra.mxu0 0
        %1439 = vmatprep.subr.bf16.mxu0 0
        %1440 = vmatpush1.bf16.msra.mxu0 0
        %1441 = vmatprep.subr.bf16.mxu0 0
        %1442 = vmatpush1.bf16.msra.mxu0 0
        %1443 = vmatprep.subr.bf16.mxu0 0
        %1444 = vmatpush1.bf16.msra.mxu0 0
        %1445 = vmatprep.subr.bf16.mxu0 0
        %1446 = vmatpush1.bf16.msra.mxu0 %v1429
        %1447 = vmatprep.subr.bf16.mxu0 0
        %1448 = vmatpush2.bf16.msra.mxu0 0
        %1449 = vmatprep.subr.bf16.mxu0 0
        %1450 = vmatpush2.bf16.msra.mxu0 0
        %1451 = vmatprep.subr.bf16.mxu0 0
        %1452 = vmatpush2.bf16.msra.mxu0 0
        %1453 = vmatprep.subr.bf16.mxu0 0
        %1454 = vmatpush2.bf16.msra.mxu0 0
        %1455 = vmatprep.subr.bf16.mxu0 0
        %1456 = vmatpush2.bf16.msra.mxu0 0
        %1457 = vmatprep.subr.bf16.mxu0 0
        %1458 = vmatpush2.bf16.msra.mxu0 0
        %1459 = vmatprep.subr.bf16.mxu0 0
        %1460 = vmatpush2.bf16.msra.mxu0 0
        %1461 = vmatprep.subr.bf16.mxu0 0
        %1462 = vmatpush2.bf16.msra.mxu0 0
        %1463 = vmatprep.mubr.bf16.mxu0 0
        %1464 = vmatmul.mubr.bf16.gmra.mxu0 %v1426
        %v1465 = vpop.f32.mrf.mxu0
        %v1466 = vadd.f32 0.0, %v1465
        %v1467 = vpop.f32.mrf.mxu0
        %v1468 = vpop.f32.mrf.mxu0
        %v1469 = vpop.f32.mrf.mxu0
        %1470 = vdwg.mxu0
        %s1471 = scalar_lea.vmem %s7, 16
        %v1472 = vld [vmem:[%s1471] sm:$0xf]
        %v1473 = vld [vmem:[%s1471 + $0x4] sm:$0xf]
        %v1474 = vld [vmem:[%s1471 + $0x8] sm:$0xf]
        %v1475 = vld [vmem:[%s1471 + $0xc] sm:$0xf]
        %1477 = vrot.lane.b32.xlu0 %v989, 96
        %v1478 = vpop.permute.xlu0 %1477
        %v1480 = vsel %vm993, %v1478, 0
        %v1483 = vsel %vm1280, %v1472, 0
        %1485 = vmatprep.subr.bf16.mxu0 0
        %1486 = vmatpush1.bf16.msra.mxu0 0
        %1487 = vmatprep.subr.bf16.mxu0 0
        %1488 = vmatpush1.bf16.msra.mxu0 0
        %1489 = vmatprep.subr.bf16.mxu0 0
        %1490 = vmatpush1.bf16.msra.mxu0 0
        %1491 = vmatprep.subr.bf16.mxu0 0
        %1492 = vmatpush1.bf16.msra.mxu0 0
        %1493 = vmatprep.subr.bf16.mxu0 0
        %1494 = vmatpush1.bf16.msra.mxu0 0
        %1495 = vmatprep.subr.bf16.mxu0 0
        %1496 = vmatpush1.bf16.msra.mxu0 0
        %1497 = vmatprep.subr.bf16.mxu0 0
        %1498 = vmatpush1.bf16.msra.mxu0 0
        %1499 = vmatprep.subr.bf16.mxu0 0
        %1500 = vmatpush1.bf16.msra.mxu0 %v1483
        %1501 = vmatprep.subr.bf16.mxu0 0
        %1502 = vmatpush2.bf16.msra.mxu0 0
        %1503 = vmatprep.subr.bf16.mxu0 0
        %1504 = vmatpush2.bf16.msra.mxu0 0
        %1505 = vmatprep.subr.bf16.mxu0 0
        %1506 = vmatpush2.bf16.msra.mxu0 0
        %1507 = vmatprep.subr.bf16.mxu0 0
        %1508 = vmatpush2.bf16.msra.mxu0 0
        %1509 = vmatprep.subr.bf16.mxu0 0
        %1510 = vmatpush2.bf16.msra.mxu0 0
        %1511 = vmatprep.subr.bf16.mxu0 0
        %1512 = vmatpush2.bf16.msra.mxu0 0
        %1513 = vmatprep.subr.bf16.mxu0 0
        %1514 = vmatpush2.bf16.msra.mxu0 0
        %1515 = vmatprep.subr.bf16.mxu0 0
        %1516 = vmatpush2.bf16.msra.mxu0 0
        %1517 = vmatprep.mubr.bf16.mxu0 0
        %1518 = vmatmul.mubr.bf16.gmra.mxu0 %v1480
        %v1519 = vpop.f32.mrf.mxu0
        %v1520 = vadd.f32 0.0, %v1519
        %v1521 = vpop.f32.mrf.mxu0
        %v1522 = vpop.f32.mrf.mxu0
        %v1523 = vadd.f32 0.0, %v1522
        %v1524 = vpop.f32.mrf.mxu0
        %1525 = vdwg.mxu0
        %1527 = vrot.lane.b32.xlu0 %v990, 96
        %v1528 = vpop.permute.xlu0 %1527
        %v1530 = vsel %vm993, %v1528, 0
        %v1533 = vsel %vm1280, %v1473, 0
        %1535 = vmatprep.subr.bf16.mxu0 0
        %1536 = vmatpush1.bf16.msra.mxu0 0
        %1537 = vmatprep.subr.bf16.mxu0 0
        %1538 = vmatpush1.bf16.msra.mxu0 0
        %1539 = vmatprep.subr.bf16.mxu0 0
        %1540 = vmatpush1.bf16.msra.mxu0 0
        %1541 = vmatprep.subr.bf16.mxu0 0
        %1542 = vmatpush1.bf16.msra.mxu0 0
        %1543 = vmatprep.subr.bf16.mxu0 0
        %1544 = vmatpush1.bf16.msra.mxu0 0
        %1545 = vmatprep.subr.bf16.mxu0 0
        %1546 = vmatpush1.bf16.msra.mxu0 0
        %1547 = vmatprep.subr.bf16.mxu0 0
        %1548 = vmatpush1.bf16.msra.mxu0 0
        %1549 = vmatprep.subr.bf16.mxu0 0
        %1550 = vmatpush1.bf16.msra.mxu0 %v1533
        %1551 = vmatprep.subr.bf16.mxu0 0
        %1552 = vmatpush2.bf16.msra.mxu0 0
        %1553 = vmatprep.subr.bf16.mxu0 0
        %1554 = vmatpush2.bf16.msra.mxu0 0
        %1555 = vmatprep.subr.bf16.mxu0 0
        %1556 = vmatpush2.bf16.msra.mxu0 0
        %1557 = vmatprep.subr.bf16.mxu0 0
        %1558 = vmatpush2.bf16.msra.mxu0 0
        %1559 = vmatprep.subr.bf16.mxu0 0
        %1560 = vmatpush2.bf16.msra.mxu0 0
        %1561 = vmatprep.subr.bf16.mxu0 0
        %1562 = vmatpush2.bf16.msra.mxu0 0
        %1563 = vmatprep.subr.bf16.mxu0 0
        %1564 = vmatpush2.bf16.msra.mxu0 0
        %1565 = vmatprep.subr.bf16.mxu0 0
        %1566 = vmatpush2.bf16.msra.mxu0 0
        %1567 = vmatprep.mubr.bf16.mxu0 0
        %1568 = vmatmul.mubr.bf16.gmra.mxu0 %v1530
        %v1569 = vpop.f32.mrf.mxu0
        %v1570 = vadd.f32 0.0, %v1569
        %v1571 = vpop.f32.mrf.mxu0
        %v1572 = vpop.f32.mrf.mxu0
        %v1573 = vadd.f32 0.0, %v1572
        %v1574 = vpop.f32.mrf.mxu0
        %1575 = vdwg.mxu0
        %1577 = vrot.lane.b32.xlu0 %v991, 96
        %v1578 = vpop.permute.xlu0 %1577
        %v1580 = vsel %vm993, %v1578, 0
        %v1583 = vsel %vm1280, %v1474, 0
        %1585 = vmatprep.subr.bf16.mxu0 0
        %1586 = vmatpush1.bf16.msra.mxu0 0
        %1587 = vmatprep.subr.bf16.mxu0 0
        %1588 = vmatpush1.bf16.msra.mxu0 0
        %1589 = vmatprep.subr.bf16.mxu0 0
        %1590 = vmatpush1.bf16.msra.mxu0 0
        %1591 = vmatprep.subr.bf16.mxu0 0
        %1592 = vmatpush1.bf16.msra.mxu0 0
        %1593 = vmatprep.subr.bf16.mxu0 0
        %1594 = vmatpush1.bf16.msra.mxu0 0
        %1595 = vmatprep.subr.bf16.mxu0 0
        %1596 = vmatpush1.bf16.msra.mxu0 0
        %1597 = vmatprep.subr.bf16.mxu0 0
        %1598 = vmatpush1.bf16.msra.mxu0 0
        %1599 = vmatprep.subr.bf16.mxu0 0
        %1600 = vmatpush1.bf16.msra.mxu0 %v1583
        %1601 = vmatprep.subr.bf16.mxu0 0
        %1602 = vmatpush2.bf16.msra.mxu0 0
        %1603 = vmatprep.subr.bf16.mxu0 0
        %1604 = vmatpush2.bf16.msra.mxu0 0
        %1605 = vmatprep.subr.bf16.mxu0 0
        %1606 = vmatpush2.bf16.msra.mxu0 0
        %1607 = vmatprep.subr.bf16.mxu0 0
        %1608 = vmatpush2.bf16.msra.mxu0 0
        %1609 = vmatprep.subr.bf16.mxu0 0
        %1610 = vmatpush2.bf16.msra.mxu0 0
        %1611 = vmatprep.subr.bf16.mxu0 0
        %1612 = vmatpush2.bf16.msra.mxu0 0
        %1613 = vmatprep.subr.bf16.mxu0 0
        %1614 = vmatpush2.bf16.msra.mxu0 0
        %1615 = vmatprep.subr.bf16.mxu0 0
        %1616 = vmatpush2.bf16.msra.mxu0 0
        %1617 = vmatprep.mubr.bf16.mxu0 0
        %1618 = vmatmul.mubr.bf16.gmra.mxu0 %v1580
        %v1619 = vpop.f32.mrf.mxu0
        %v1620 = vadd.f32 0.0, %v1619
        %v1621 = vpop.f32.mrf.mxu0
        %v1622 = vpop.f32.mrf.mxu0
        %v1623 = vadd.f32 0.0, %v1622
        %v1624 = vpop.f32.mrf.mxu0
        %1625 = vdwg.mxu0
        %1627 = vrot.lane.b32.xlu0 %v992, 96
        %v1628 = vpop.permute.xlu0 %1627
        %v1630 = vsel %vm993, %v1628, 0
        %v1633 = vsel %vm1280, %v1475, 0
        %1635 = vmatprep.subr.bf16.mxu0 0
        %1636 = vmatpush1.bf16.msra.mxu0 0
        %1637 = vmatprep.subr.bf16.mxu0 0
        %1638 = vmatpush1.bf16.msra.mxu0 0
        %1639 = vmatprep.subr.bf16.mxu0 0
        %1640 = vmatpush1.bf16.msra.mxu0 0
        %1641 = vmatprep.subr.bf16.mxu0 0
        %1642 = vmatpush1.bf16.msra.mxu0 0
        %1643 = vmatprep.subr.bf16.mxu0 0
        %1644 = vmatpush1.bf16.msra.mxu0 0
        %1645 = vmatprep.subr.bf16.mxu0 0
        %1646 = vmatpush1.bf16.msra.mxu0 0
        %1647 = vmatprep.subr.bf16.mxu0 0
        %1648 = vmatpush1.bf16.msra.mxu0 0
        %1649 = vmatprep.subr.bf16.mxu0 0
        %1650 = vmatpush1.bf16.msra.mxu0 %v1633
        %1651 = vmatprep.subr.bf16.mxu0 0
        %1652 = vmatpush2.bf16.msra.mxu0 0
        %1653 = vmatprep.subr.bf16.mxu0 0
        %1654 = vmatpush2.bf16.msra.mxu0 0
        %1655 = vmatprep.subr.bf16.mxu0 0
        %1656 = vmatpush2.bf16.msra.mxu0 0
        %1657 = vmatprep.subr.bf16.mxu0 0
        %1658 = vmatpush2.bf16.msra.mxu0 0
        %1659 = vmatprep.subr.bf16.mxu0 0
        %1660 = vmatpush2.bf16.msra.mxu0 0
        %1661 = vmatprep.subr.bf16.mxu0 0
        %1662 = vmatpush2.bf16.msra.mxu0 0
        %1663 = vmatprep.subr.bf16.mxu0 0
        %1664 = vmatpush2.bf16.msra.mxu0 0
        %1665 = vmatprep.subr.bf16.mxu0 0
        %1666 = vmatpush2.bf16.msra.mxu0 0
        %1667 = vmatprep.mubr.bf16.mxu0 0
        %1668 = vmatmul.mubr.bf16.gmra.mxu0 %v1630
        %v1669 = vpop.f32.mrf.mxu0
        %v1670 = vadd.f32 0.0, %v1669
        %v1671 = vpop.f32.mrf.mxu0
        %v1672 = vpop.f32.mrf.mxu0
        %v1673 = vadd.f32 0.0, %v1672
        %v1674 = vpop.f32.mrf.mxu0
        %1675 = vdwg.mxu0
        %v1676 = vpack.c.bf16 %v1263, %v1262
        %v1677 = vpack.c.bf16 %v1265, %v1264
        %v1678 = vpack.c.bf16 %v1267, %v1266
        %v1679 = vpack.c.bf16 %v1269, %v1268
        %1680 = vxpose.xlu0.b32.start [1/16] %v1262, 128
        %1681 = vxpose.xlu0.b32.cont [2/16] %v1263, 128
        %1682 = vxpose.xlu0.b32.cont [3/16] 0.0, 128
        %1683 = vxpose.xlu0.b32.cont [4/16] 0.0, 128
        %1684 = vxpose.xlu0.b32.cont [5/16] 0.0, 128
        %1685 = vxpose.xlu0.b32.cont [6/16] 0.0, 128
        %1686 = vxpose.xlu0.b32.cont [7/16] 0.0, 128
        %1687 = vxpose.xlu0.b32.cont [8/16] 0.0, 128
        %1688 = vxpose.xlu0.b32.cont [9/16] 0.0, 128
        %1689 = vxpose.xlu0.b32.cont [10/16] 0.0, 128
        %1690 = vxpose.xlu0.b32.cont [11/16] 0.0, 128
        %1691 = vxpose.xlu0.b32.cont [12/16] 0.0, 128
        %1692 = vxpose.xlu0.b32.cont [13/16] 0.0, 128
        %1693 = vxpose.xlu0.b32.cont [14/16] 0.0, 128
        %1694 = vxpose.xlu0.b32.cont [15/16] 0.0, 128
        %1695 = vxpose.xlu0.b32.end [16/16] 0.0, 128
        %v1696 = vpop.trf.xlu0
        %v1697 = vpop.trf.xlu0
        %v1698 = vpop.trf.xlu0
        %v1699 = vpop.trf.xlu0
        %v1700 = vpop.trf.xlu0
        %v1701 = vpop.trf.xlu0
        %v1702 = vpop.trf.xlu0
        %v1703 = vpop.trf.xlu0
        %v1704 = vpop.trf.xlu0
        %v1705 = vpop.trf.xlu0
        %v1706 = vpop.trf.xlu0
        %v1707 = vpop.trf.xlu0
        %v1708 = vpop.trf.xlu0
        %v1709 = vpop.trf.xlu0
        %v1710 = vpop.trf.xlu0
        %v1711 = vpop.trf.xlu0
        %1712 = vxpose.xlu0.b32.start [1/16] %v1264, 128
        %1713 = vxpose.xlu0.b32.cont [2/16] %v1265, 128
        %1714 = vxpose.xlu0.b32.cont [3/16] 0.0, 128
        %1715 = vxpose.xlu0.b32.cont [4/16] 0.0, 128
        %1716 = vxpose.xlu0.b32.cont [5/16] 0.0, 128
        %1717 = vxpose.xlu0.b32.cont [6/16] 0.0, 128
        %1718 = vxpose.xlu0.b32.cont [7/16] 0.0, 128
        %1719 = vxpose.xlu0.b32.cont [8/16] 0.0, 128
        %1720 = vxpose.xlu0.b32.cont [9/16] 0.0, 128
        %1721 = vxpose.xlu0.b32.cont [10/16] 0.0, 128
        %1722 = vxpose.xlu0.b32.cont [11/16] 0.0, 128
        %1723 = vxpose.xlu0.b32.cont [12/16] 0.0, 128
        %1724 = vxpose.xlu0.b32.cont [13/16] 0.0, 128
        %1725 = vxpose.xlu0.b32.cont [14/16] 0.0, 128
        %1726 = vxpose.xlu0.b32.cont [15/16] 0.0, 128
        %1727 = vxpose.xlu0.b32.end [16/16] 0.0, 128
        %v1728 = vpop.trf.xlu0
        %v1729 = vpop.trf.xlu0
        %v1730 = vpop.trf.xlu0
        %v1731 = vpop.trf.xlu0
        %v1732 = vpop.trf.xlu0
        %v1733 = vpop.trf.xlu0
        %v1734 = vpop.trf.xlu0
        %v1735 = vpop.trf.xlu0
        %v1736 = vpop.trf.xlu0
        %v1737 = vpop.trf.xlu0
        %v1738 = vpop.trf.xlu0
        %v1739 = vpop.trf.xlu0
        %v1740 = vpop.trf.xlu0
        %v1741 = vpop.trf.xlu0
        %v1742 = vpop.trf.xlu0
        %v1743 = vpop.trf.xlu0
        %1744 = vxpose.xlu0.b32.start [1/16] %v1266, 128
        %1745 = vxpose.xlu0.b32.cont [2/16] %v1267, 128
        %1746 = vxpose.xlu0.b32.cont [3/16] 0.0, 128
        %1747 = vxpose.xlu0.b32.cont [4/16] 0.0, 128
        %1748 = vxpose.xlu0.b32.cont [5/16] 0.0, 128
        %1749 = vxpose.xlu0.b32.cont [6/16] 0.0, 128
        %1750 = vxpose.xlu0.b32.cont [7/16] 0.0, 128
        %1751 = vxpose.xlu0.b32.cont [8/16] 0.0, 128
        %1752 = vxpose.xlu0.b32.cont [9/16] 0.0, 128
        %1753 = vxpose.xlu0.b32.cont [10/16] 0.0, 128
        %1754 = vxpose.xlu0.b32.cont [11/16] 0.0, 128
        %1755 = vxpose.xlu0.b32.cont [12/16] 0.0, 128
        %1756 = vxpose.xlu0.b32.cont [13/16] 0.0, 128
        %1757 = vxpose.xlu0.b32.cont [14/16] 0.0, 128
        %1758 = vxpose.xlu0.b32.cont [15/16] 0.0, 128
        %1759 = vxpose.xlu0.b32.end [16/16] 0.0, 128
        %v1760 = vpop.trf.xlu0
        %v1761 = vpop.trf.xlu0
        %v1762 = vpop.trf.xlu0
        %v1763 = vpop.trf.xlu0
        %v1764 = vpop.trf.xlu0
        %v1765 = vpop.trf.xlu0
        %v1766 = vpop.trf.xlu0
        %v1767 = vpop.trf.xlu0
        %v1768 = vpop.trf.xlu0
        %v1769 = vpop.trf.xlu0
        %v1770 = vpop.trf.xlu0
        %v1771 = vpop.trf.xlu0
        %v1772 = vpop.trf.xlu0
        %v1773 = vpop.trf.xlu0
        %v1774 = vpop.trf.xlu0
        %v1775 = vpop.trf.xlu0
        %1776 = vxpose.xlu0.b32.start [1/16] %v1268, 128
        %1777 = vxpose.xlu0.b32.cont [2/16] %v1269, 128
        %1778 = vxpose.xlu0.b32.cont [3/16] 0.0, 128
        %1779 = vxpose.xlu0.b32.cont [4/16] 0.0, 128
        %1780 = vxpose.xlu0.b32.cont [5/16] 0.0, 128
        %1781 = vxpose.xlu0.b32.cont [6/16] 0.0, 128
        %1782 = vxpose.xlu0.b32.cont [7/16] 0.0, 128
        %1783 = vxpose.xlu0.b32.cont [8/16] 0.0, 128
        %1784 = vxpose.xlu0.b32.cont [9/16] 0.0, 128
        %1785 = vxpose.xlu0.b32.cont [10/16] 0.0, 128
        %1786 = vxpose.xlu0.b32.cont [11/16] 0.0, 128
        %1787 = vxpose.xlu0.b32.cont [12/16] 0.0, 128
        %1788 = vxpose.xlu0.b32.cont [13/16] 0.0, 128
        %1789 = vxpose.xlu0.b32.cont [14/16] 0.0, 128
        %1790 = vxpose.xlu0.b32.cont [15/16] 0.0, 128
        %1791 = vxpose.xlu0.b32.end [16/16] 0.0, 128
        %v1792 = vpop.trf.xlu0
        %v1793 = vpop.trf.xlu0
        %v1794 = vpop.trf.xlu0
        %v1795 = vpop.trf.xlu0
        %v1796 = vpop.trf.xlu0
        %v1797 = vpop.trf.xlu0
        %v1798 = vpop.trf.xlu0
        %v1799 = vpop.trf.xlu0
        %v1800 = vpop.trf.xlu0
        %v1801 = vpop.trf.xlu0
        %v1802 = vpop.trf.xlu0
        %v1803 = vpop.trf.xlu0
        %v1804 = vpop.trf.xlu0
        %v1805 = vpop.trf.xlu0
        %v1806 = vpop.trf.xlu0
        %v1807 = vpop.trf.xlu0
        %v1808 = vpack.c.bf16 %v1696, %v1696
        %v1809 = vpack.c.bf16 %v1728, %v1728
        %v1810 = vpack.c.bf16 %v1760, %v1760
        %v1811 = vpack.c.bf16 %v1792, %v1792
        %v1812 = vpack.c.bf16 %v1319, %v1319
        %v1813 = vpack.c.bf16 %v1368, %v1368
        %v1814 = vpack.c.bf16 %v1417, %v1417
        %v1815 = vpack.c.bf16 %v1466, %v1466
        %v1817 = vrot.slane %v1676, 2
        %v1819 = vsel %vm993, %v1817, 0
        %v1822 = vsel %vm1280, %v1812, 0
        %1824 = vmatprep.subr.bf16.mxu0 0
        %1825 = vmatpush1.bf16.msra.mxu0 0
        %1826 = vmatprep.subr.bf16.mxu0 0
        %1827 = vmatpush1.bf16.msra.mxu0 0
        %1828 = vmatprep.subr.bf16.mxu0 0
        %1829 = vmatpush1.bf16.msra.mxu0 0
        %1830 = vmatprep.subr.bf16.mxu0 0
        %1831 = vmatpush1.bf16.msra.mxu0 0
        %1832 = vmatprep.subr.bf16.mxu0 0
        %1833 = vmatpush1.bf16.msra.mxu0 0
        %1834 = vmatprep.subr.bf16.mxu0 0
        %1835 = vmatpush1.bf16.msra.mxu0 0
        %1836 = vmatprep.subr.bf16.mxu0 0
        %1837 = vmatpush1.bf16.msra.mxu0 0
        %1838 = vmatprep.subr.bf16.mxu0 0
        %1839 = vmatpush1.bf16.msra.mxu0 %v1822
        %1840 = vmatprep.subr.bf16.mxu0 0
        %1841 = vmatpush2.bf16.msra.mxu0 0
        %1842 = vmatprep.subr.bf16.mxu0 0
        %1843 = vmatpush2.bf16.msra.mxu0 0
        %1844 = vmatprep.subr.bf16.mxu0 0
        %1845 = vmatpush2.bf16.msra.mxu0 0
        %1846 = vmatprep.subr.bf16.mxu0 0
        %1847 = vmatpush2.bf16.msra.mxu0 0
        %1848 = vmatprep.subr.bf16.mxu0 0
        %1849 = vmatpush2.bf16.msra.mxu0 0
        %1850 = vmatprep.subr.bf16.mxu0 0
        %1851 = vmatpush2.bf16.msra.mxu0 0
        %1852 = vmatprep.subr.bf16.mxu0 0
        %1853 = vmatpush2.bf16.msra.mxu0 0
        %1854 = vmatprep.subr.bf16.mxu0 0
        %1855 = vmatpush2.bf16.msra.mxu0 0
        %1856 = vmatprep.mubr.bf16.mxu0 0
        %1857 = vmatmul.mubr.bf16.gmra.mxu0 %v1819
        %v1858 = vpop.f32.mrf.mxu0
        %v1859 = vadd.f32 0.0, %v1858
        %v1860 = vpop.f32.mrf.mxu0
        %v1861 = vpop.f32.mrf.mxu0
        %v1862 = vpop.f32.mrf.mxu0
        %1863 = vdwg.mxu0
        %v1865 = vrot.slane %v1677, 2
        %v1867 = vsel %vm993, %v1865, 0
        %v1870 = vsel %vm1280, %v1813, 0
        %1872 = vmatprep.subr.bf16.mxu0 0
        %1873 = vmatpush1.bf16.msra.mxu0 0
        %1874 = vmatprep.subr.bf16.mxu0 0
        %1875 = vmatpush1.bf16.msra.mxu0 0
        %1876 = vmatprep.subr.bf16.mxu0 0
        %1877 = vmatpush1.bf16.msra.mxu0 0
        %1878 = vmatprep.subr.bf16.mxu0 0
        %1879 = vmatpush1.bf16.msra.mxu0 0
        %1880 = vmatprep.subr.bf16.mxu0 0
        %1881 = vmatpush1.bf16.msra.mxu0 0
        %1882 = vmatprep.subr.bf16.mxu0 0
        %1883 = vmatpush1.bf16.msra.mxu0 0
        %1884 = vmatprep.subr.bf16.mxu0 0
        %1885 = vmatpush1.bf16.msra.mxu0 0
        %1886 = vmatprep.subr.bf16.mxu0 0
        %1887 = vmatpush1.bf16.msra.mxu0 %v1870
        %1888 = vmatprep.subr.bf16.mxu0 0
        %1889 = vmatpush2.bf16.msra.mxu0 0
        %1890 = vmatprep.subr.bf16.mxu0 0
        %1891 = vmatpush2.bf16.msra.mxu0 0
        %1892 = vmatprep.subr.bf16.mxu0 0
        %1893 = vmatpush2.bf16.msra.mxu0 0
        %1894 = vmatprep.subr.bf16.mxu0 0
        %1895 = vmatpush2.bf16.msra.mxu0 0
        %1896 = vmatprep.subr.bf16.mxu0 0
        %1897 = vmatpush2.bf16.msra.mxu0 0
        %1898 = vmatprep.subr.bf16.mxu0 0
        %1899 = vmatpush2.bf16.msra.mxu0 0
        %1900 = vmatprep.subr.bf16.mxu0 0
        %1901 = vmatpush2.bf16.msra.mxu0 0
        %1902 = vmatprep.subr.bf16.mxu0 0
        %1903 = vmatpush2.bf16.msra.mxu0 0
        %1904 = vmatprep.mubr.bf16.mxu0 0
        %1905 = vmatmul.mubr.bf16.gmra.mxu0 %v1867
        %v1906 = vpop.f32.mrf.mxu0
        %v1907 = vadd.f32 0.0, %v1906
        %v1908 = vpop.f32.mrf.mxu0
        %v1909 = vpop.f32.mrf.mxu0
        %v1910 = vpop.f32.mrf.mxu0
        %1911 = vdwg.mxu0
        %v1913 = vrot.slane %v1678, 2
        %v1915 = vsel %vm993, %v1913, 0
        %v1918 = vsel %vm1280, %v1814, 0
        %1920 = vmatprep.subr.bf16.mxu0 0
        %1921 = vmatpush1.bf16.msra.mxu0 0
        %1922 = vmatprep.subr.bf16.mxu0 0
        %1923 = vmatpush1.bf16.msra.mxu0 0
        %1924 = vmatprep.subr.bf16.mxu0 0
        %1925 = vmatpush1.bf16.msra.mxu0 0
        %1926 = vmatprep.subr.bf16.mxu0 0
        %1927 = vmatpush1.bf16.msra.mxu0 0
        %1928 = vmatprep.subr.bf16.mxu0 0
        %1929 = vmatpush1.bf16.msra.mxu0 0
        %1930 = vmatprep.subr.bf16.mxu0 0
        %1931 = vmatpush1.bf16.msra.mxu0 0
        %1932 = vmatprep.subr.bf16.mxu0 0
        %1933 = vmatpush1.bf16.msra.mxu0 0
        %1934 = vmatprep.subr.bf16.mxu0 0
        %1935 = vmatpush1.bf16.msra.mxu0 %v1918
        %1936 = vmatprep.subr.bf16.mxu0 0
        %1937 = vmatpush2.bf16.msra.mxu0 0
        %1938 = vmatprep.subr.bf16.mxu0 0
        %1939 = vmatpush2.bf16.msra.mxu0 0
        %1940 = vmatprep.subr.bf16.mxu0 0
        %1941 = vmatpush2.bf16.msra.mxu0 0
        %1942 = vmatprep.subr.bf16.mxu0 0
        %1943 = vmatpush2.bf16.msra.mxu0 0
        %1944 = vmatprep.subr.bf16.mxu0 0
        %1945 = vmatpush2.bf16.msra.mxu0 0
        %1946 = vmatprep.subr.bf16.mxu0 0
        %1947 = vmatpush2.bf16.msra.mxu0 0
        %1948 = vmatprep.subr.bf16.mxu0 0
        %1949 = vmatpush2.bf16.msra.mxu0 0
        %1950 = vmatprep.subr.bf16.mxu0 0
        %1951 = vmatpush2.bf16.msra.mxu0 0
        %1952 = vmatprep.mubr.bf16.mxu0 0
        %1953 = vmatmul.mubr.bf16.gmra.mxu0 %v1915
        %v1954 = vpop.f32.mrf.mxu0
        %v1955 = vadd.f32 0.0, %v1954
        %v1956 = vpop.f32.mrf.mxu0
        %v1957 = vpop.f32.mrf.mxu0
        %v1958 = vpop.f32.mrf.mxu0
        %1959 = vdwg.mxu0
        %v1961 = vrot.slane %v1679, 2
        %v1963 = vsel %vm993, %v1961, 0
        %v1966 = vsel %vm1280, %v1815, 0
        %1968 = vmatprep.subr.bf16.mxu0 0
        %1969 = vmatpush1.bf16.msra.mxu0 0
        %1970 = vmatprep.subr.bf16.mxu0 0
        %1971 = vmatpush1.bf16.msra.mxu0 0
        %1972 = vmatprep.subr.bf16.mxu0 0
        %1973 = vmatpush1.bf16.msra.mxu0 0
        %1974 = vmatprep.subr.bf16.mxu0 0
        %1975 = vmatpush1.bf16.msra.mxu0 0
        %1976 = vmatprep.subr.bf16.mxu0 0
        %1977 = vmatpush1.bf16.msra.mxu0 0
        %1978 = vmatprep.subr.bf16.mxu0 0
        %1979 = vmatpush1.bf16.msra.mxu0 0
        %1980 = vmatprep.subr.bf16.mxu0 0
        %1981 = vmatpush1.bf16.msra.mxu0 0
        %1982 = vmatprep.subr.bf16.mxu0 0
        %1983 = vmatpush1.bf16.msra.mxu0 %v1966
        %1984 = vmatprep.subr.bf16.mxu0 0
        %1985 = vmatpush2.bf16.msra.mxu0 0
        %1986 = vmatprep.subr.bf16.mxu0 0
        %1987 = vmatpush2.bf16.msra.mxu0 0
        %1988 = vmatprep.subr.bf16.mxu0 0
        %1989 = vmatpush2.bf16.msra.mxu0 0
        %1990 = vmatprep.subr.bf16.mxu0 0
        %1991 = vmatpush2.bf16.msra.mxu0 0
        %1992 = vmatprep.subr.bf16.mxu0 0
        %1993 = vmatpush2.bf16.msra.mxu0 0
        %1994 = vmatprep.subr.bf16.mxu0 0
        %1995 = vmatpush2.bf16.msra.mxu0 0
        %1996 = vmatprep.subr.bf16.mxu0 0
        %1997 = vmatpush2.bf16.msra.mxu0 0
        %1998 = vmatprep.subr.bf16.mxu0 0
        %1999 = vmatpush2.bf16.msra.mxu0 0
        %2000 = vmatprep.mubr.bf16.mxu0 0
        %2001 = vmatmul.mubr.bf16.gmra.mxu0 %v1963
        %v2002 = vpop.f32.mrf.mxu0
        %v2003 = vadd.f32 0.0, %v2002
        %v2004 = vpop.f32.mrf.mxu0
        %v2005 = vpop.f32.mrf.mxu0
        %v2006 = vpop.f32.mrf.mxu0
        %2007 = vdwg.mxu0
        %v2008 = vsel %vm619, %v1859, 0.0
        %v2009 = vsel %vm619, %v1907, 0.0
        %v2010 = vadd.f32 %v2008, %v2009
        %v2011 = vsel %vm619, %v1955, 0.0
        %v2012 = vadd.f32 %v2010, %v2011
        %v2013 = vsel %vm619, %v2003, 0.0
        %v2014 = vadd.f32 %v2012, %v2013
        %v2015 = vld [vmem:[%s2 + $0x8] sm:$0x1]
        %v2016 = vlaneseq
        %v2017 = vshrl.u32 %v2016, 7
        %v2018 = vsub.s32 0, %v2017
        %v2019 = vrot.slane %v2015, %v2018
        %v2020 = vadd.f32 %v2014, %v2019
        %v2021 = vpack.c.bf16 %v1523, %v1520
        %v2022 = vpack.c.bf16 %v1573, %v1570
        %v2023 = vpack.c.bf16 %v1623, %v1620
        %v2024 = vpack.c.bf16 %v1673, %v1670
        %vm2025 = vcmask 130048
        %v2027 = vsel %vm2025, %v1808, 0
        %2029 = vmatprep.subr.bf16.mxu0 0
        %2030 = vmatpush1.bf16.msra.mxu0 0
        %2031 = vmatprep.subr.bf16.mxu0 0
        %2032 = vmatpush1.bf16.msra.mxu0 0
        %2033 = vmatprep.subr.bf16.mxu0 0
        %2034 = vmatpush1.bf16.msra.mxu0 0
        %2035 = vmatprep.subr.bf16.mxu0 0
        %2036 = vmatpush1.bf16.msra.mxu0 0
        %2037 = vmatprep.subr.bf16.mxu0 0
        %2038 = vmatpush1.bf16.msra.mxu0 0
        %2039 = vmatprep.subr.bf16.mxu0 0
        %2040 = vmatpush1.bf16.msra.mxu0 0
        %2041 = vmatprep.subr.bf16.mxu0 0
        %2042 = vmatpush1.bf16.msra.mxu0 0
        %2043 = vmatprep.subr.bf16.mxu0 0
        %2044 = vmatpush1.bf16.msra.mxu0 %v2021
        %2045 = vmatprep.subr.bf16.mxu0 0
        %2046 = vmatpush2.bf16.msra.mxu0 0
        %2047 = vmatprep.subr.bf16.mxu0 0
        %2048 = vmatpush2.bf16.msra.mxu0 0
        %2049 = vmatprep.subr.bf16.mxu0 0
        %2050 = vmatpush2.bf16.msra.mxu0 0
        %2051 = vmatprep.subr.bf16.mxu0 0
        %2052 = vmatpush2.bf16.msra.mxu0 0
        %2053 = vmatprep.subr.bf16.mxu0 0
        %2054 = vmatpush2.bf16.msra.mxu0 0
        %2055 = vmatprep.subr.bf16.mxu0 0
        %2056 = vmatpush2.bf16.msra.mxu0 0
        %2057 = vmatprep.subr.bf16.mxu0 0
        %2058 = vmatpush2.bf16.msra.mxu0 0
        %2059 = vmatprep.subr.bf16.mxu0 0
        %2060 = vmatpush2.bf16.msra.mxu0 0
        %2061 = vmatprep.mubr.bf16.mxu0 0
        %2062 = vmatmul.mubr.bf16.gmra.mxu0 %v2027
        %v2063 = vpop.f32.mrf.mxu0
        %v2064 = vadd.f32 0.0, %v2063
        %v2065 = vpop.f32.mrf.mxu0
        %v2066 = vpop.f32.mrf.mxu0
        %v2067 = vpop.f32.mrf.mxu0
        %2068 = vdwg.mxu0
        %v2070 = vsel %vm2025, %v1809, 0
        %2072 = vmatprep.subr.bf16.mxu0 0
        %2073 = vmatpush1.bf16.msra.mxu0 0
        %2074 = vmatprep.subr.bf16.mxu0 0
        %2075 = vmatpush1.bf16.msra.mxu0 0
        %2076 = vmatprep.subr.bf16.mxu0 0
        %2077 = vmatpush1.bf16.msra.mxu0 0
        %2078 = vmatprep.subr.bf16.mxu0 0
        %2079 = vmatpush1.bf16.msra.mxu0 0
        %2080 = vmatprep.subr.bf16.mxu0 0
        %2081 = vmatpush1.bf16.msra.mxu0 0
        %2082 = vmatprep.subr.bf16.mxu0 0
        %2083 = vmatpush1.bf16.msra.mxu0 0
        %2084 = vmatprep.subr.bf16.mxu0 0
        %2085 = vmatpush1.bf16.msra.mxu0 0
        %2086 = vmatprep.subr.bf16.mxu0 0
        %2087 = vmatpush1.bf16.msra.mxu0 %v2022
        %2088 = vmatprep.subr.bf16.mxu0 0
        %2089 = vmatpush2.bf16.msra.mxu0 0
        %2090 = vmatprep.subr.bf16.mxu0 0
        %2091 = vmatpush2.bf16.msra.mxu0 0
        %2092 = vmatprep.subr.bf16.mxu0 0
        %2093 = vmatpush2.bf16.msra.mxu0 0
        %2094 = vmatprep.subr.bf16.mxu0 0
        %2095 = vmatpush2.bf16.msra.mxu0 0
        %2096 = vmatprep.subr.bf16.mxu0 0
        %2097 = vmatpush2.bf16.msra.mxu0 0
        %2098 = vmatprep.subr.bf16.mxu0 0
        %2099 = vmatpush2.bf16.msra.mxu0 0
        %2100 = vmatprep.subr.bf16.mxu0 0
        %2101 = vmatpush2.bf16.msra.mxu0 0
        %2102 = vmatprep.subr.bf16.mxu0 0
        %2103 = vmatpush2.bf16.msra.mxu0 0
        %2104 = vmatprep.mubr.bf16.mxu0 0
        %2105 = vmatmul.mubr.bf16.gmra.mxu0 %v2070
        %v2106 = vpop.f32.mrf.mxu0
        %v2107 = vadd.f32 0.0, %v2106
        %v2108 = vpop.f32.mrf.mxu0
        %v2109 = vpop.f32.mrf.mxu0
        %v2110 = vpop.f32.mrf.mxu0
        %2111 = vdwg.mxu0
        %v2113 = vsel %vm2025, %v1810, 0
        %2115 = vmatprep.subr.bf16.mxu0 0
        %2116 = vmatpush1.bf16.msra.mxu0 0
        %2117 = vmatprep.subr.bf16.mxu0 0
        %2118 = vmatpush1.bf16.msra.mxu0 0
        %2119 = vmatprep.subr.bf16.mxu0 0
        %2120 = vmatpush1.bf16.msra.mxu0 0
        %2121 = vmatprep.subr.bf16.mxu0 0
        %2122 = vmatpush1.bf16.msra.mxu0 0
        %2123 = vmatprep.subr.bf16.mxu0 0
        %2124 = vmatpush1.bf16.msra.mxu0 0
        %2125 = vmatprep.subr.bf16.mxu0 0
        %2126 = vmatpush1.bf16.msra.mxu0 0
        %2127 = vmatprep.subr.bf16.mxu0 0
        %2128 = vmatpush1.bf16.msra.mxu0 0
        %2129 = vmatprep.subr.bf16.mxu0 0
        %2130 = vmatpush1.bf16.msra.mxu0 %v2023
        %2131 = vmatprep.subr.bf16.mxu0 0
        %2132 = vmatpush2.bf16.msra.mxu0 0
        %2133 = vmatprep.subr.bf16.mxu0 0
        %2134 = vmatpush2.bf16.msra.mxu0 0
        %2135 = vmatprep.subr.bf16.mxu0 0
        %2136 = vmatpush2.bf16.msra.mxu0 0
        %2137 = vmatprep.subr.bf16.mxu0 0
        %2138 = vmatpush2.bf16.msra.mxu0 0
        %2139 = vmatprep.subr.bf16.mxu0 0
        %2140 = vmatpush2.bf16.msra.mxu0 0
        %2141 = vmatprep.subr.bf16.mxu0 0
        %2142 = vmatpush2.bf16.msra.mxu0 0
        %2143 = vmatprep.subr.bf16.mxu0 0
        %2144 = vmatpush2.bf16.msra.mxu0 0
        %2145 = vmatprep.subr.bf16.mxu0 0
        %2146 = vmatpush2.bf16.msra.mxu0 0
        %2147 = vmatprep.mubr.bf16.mxu0 0
        %2148 = vmatmul.mubr.bf16.gmra.mxu0 %v2113
        %v2149 = vpop.f32.mrf.mxu0
        %v2150 = vadd.f32 0.0, %v2149
        %v2151 = vpop.f32.mrf.mxu0
        %v2152 = vpop.f32.mrf.mxu0
        %v2153 = vpop.f32.mrf.mxu0
        %2154 = vdwg.mxu0
        %v2156 = vsel %vm2025, %v1811, 0
        %2158 = vmatprep.subr.bf16.mxu0 0
        %2159 = vmatpush1.bf16.msra.mxu0 0
        %2160 = vmatprep.subr.bf16.mxu0 0
        %2161 = vmatpush1.bf16.msra.mxu0 0
        %2162 = vmatprep.subr.bf16.mxu0 0
        %2163 = vmatpush1.bf16.msra.mxu0 0
        %2164 = vmatprep.subr.bf16.mxu0 0
        %2165 = vmatpush1.bf16.msra.mxu0 0
        %2166 = vmatprep.subr.bf16.mxu0 0
        %2167 = vmatpush1.bf16.msra.mxu0 0
        %2168 = vmatprep.subr.bf16.mxu0 0
        %2169 = vmatpush1.bf16.msra.mxu0 0
        %2170 = vmatprep.subr.bf16.mxu0 0
        %2171 = vmatpush1.bf16.msra.mxu0 0
        %2172 = vmatprep.subr.bf16.mxu0 0
        %2173 = vmatpush1.bf16.msra.mxu0 %v2024
        %2174 = vmatprep.subr.bf16.mxu0 0
        %2175 = vmatpush2.bf16.msra.mxu0 0
        %2176 = vmatprep.subr.bf16.mxu0 0
        %2177 = vmatpush2.bf16.msra.mxu0 0
        %2178 = vmatprep.subr.bf16.mxu0 0
        %2179 = vmatpush2.bf16.msra.mxu0 0
        %2180 = vmatprep.subr.bf16.mxu0 0
        %2181 = vmatpush2.bf16.msra.mxu0 0
        %2182 = vmatprep.subr.bf16.mxu0 0
        %2183 = vmatpush2.bf16.msra.mxu0 0
        %2184 = vmatprep.subr.bf16.mxu0 0
        %2185 = vmatpush2.bf16.msra.mxu0 0
        %2186 = vmatprep.subr.bf16.mxu0 0
        %2187 = vmatpush2.bf16.msra.mxu0 0
        %2188 = vmatprep.subr.bf16.mxu0 0
        %2189 = vmatpush2.bf16.msra.mxu0 0
        %2190 = vmatprep.mubr.bf16.mxu0 0
        %2191 = vmatmul.mubr.bf16.gmra.mxu0 %v2156
        %v2192 = vpop.f32.mrf.mxu0
        %v2193 = vadd.f32 0.0, %v2192
        %v2194 = vpop.f32.mrf.mxu0
        %v2195 = vpop.f32.mrf.mxu0
        %v2196 = vpop.f32.mrf.mxu0
        %2197 = vdwg.mxu0
        %v2198 = vsel %vm619, %v2064, 0.0
        %v2199 = vsel %vm619, %v2107, 0.0
        %v2200 = vadd.f32 %v2198, %v2199
        %v2201 = vsel %vm619, %v2150, 0.0
        %v2202 = vadd.f32 %v2200, %v2201
        %v2203 = vsel %vm619, %v2193, 0.0
        %v2204 = vadd.f32 %v2202, %v2203
        %v2205 = vld [vmem:[%s2 + $0x9] sm:$0x1]
        %v2206 = vlaneseq
        %v2207 = vshrl.u32 %v2206, 7
        %v2208 = vsub.s32 0, %v2207
        %v2209 = vrot.slane %v2205, %v2208
        %v2210 = vadd.f32 %v2204, %v2209
        %v2212 = vrot.slane %v2020, 4
        %v2214 = vadd.f32 %v578, %v2212
        %v2215 = vadd.f32 %v579, %v2212
        %v2216 = vadd.f32 %v737, %v2210
        %v2217 = vld [vmem:[%s2 + $0xa] sm:$0x1]
        %v2218 = vld [vmem:[%s2 + $0xb] sm:$0x1]
        %v2219 = vld [vmem:[%s8] sm:$0xf]
        %v2220 = vld [vmem:[%s8 + $0x4] sm:$0xf]
        %v2221 = vld [vmem:[%s8 + $0x8] sm:$0xf]
        %v2222 = vld [vmem:[%s8 + $0xc] sm:$0xf]
        %v2223 = vld [vmem:[%s2 + $0xc] sm:$0x1]
        %v2224 = vld [vmem:[%s9] sm:$0xf]
        %v2225 = vld [vmem:[%s9 + $0x4] sm:$0xf]
        %v2226 = vld [vmem:[%s9 + $0x8] sm:$0xf]
        %v2227 = vld [vmem:[%s9 + $0xc] sm:$0xf]
        %v2228 = vld [vmem:[%s9 + $0x10] sm:$0xf]
        %v2229 = vld [vmem:[%s9 + $0x14] sm:$0xf]
        %v2230 = vld [vmem:[%s9 + $0x18] sm:$0xf]
        %v2231 = vld [vmem:[%s9 + $0x1c] sm:$0xf]
        %v2232 = vld [vmem:[%s2 + $0xd] sm:$0x1]
        %vm2233 = vcmask 261124
        %v2234 = vsel %vm2233, %v2214, 0.0
        %2235 = vadd.xlane.f32.xlu0 %v2234
        %v2236 = vpop.xlane.xlu0 %2235
        %vm2237 = vcmask 257024
        %v2238 = vsel %vm2237, %v2215, 0.0
        %2239 = vadd.xlane.f32.xlu0 %v2238
        %v2240 = vpop.xlane.xlu0 %2239
        %v2241 = vmul.f32 %v2236, %v750
        %v2242 = vmul.f32 %v2240, %v750
        %v2243 = vsub.f32 %v2214, %v2241
        %v2244 = vsub.f32 %v2215, %v2242
        %v2245 = vmul.f32 %v2243, %v2243
        %v2246 = vmul.f32 %v2244, %v2244
        %v2247 = vsel %vm2233, %v2245, 0.0
        %2248 = vadd.xlane.f32.xlu0 %v2247
        %v2249 = vpop.xlane.xlu0 %2248
        %v2250 = vsel %vm2237, %v2246, 0.0
        %2251 = vadd.xlane.f32.xlu0 %v2250
        %v2252 = vpop.xlane.xlu0 %2251
        %v2253 = vmul.f32 %v2249, %v750
        %v2254 = vmul.f32 %v2252, %v750
        %v2255 = vadd.f32 %v2253, 1e-05
        %v2256 = vadd.f32 %v2254, 1e-05
        %v2257 = vrsqrt.pop %v2255
        %v2258 = vrsqrt.pop %v2256
        %v2259 = vmul.f32 %v2243, %v2257
        %v2260 = vmul.f32 %v2244, %v2258
        %v2261 = vlaneseq
        %v2262 = vshrl.u32 %v2261, 7
        %v2263 = vsub.s32 0, %v2262
        %v2264 = vrot.slane %v2217, %v2263
        %v2265 = vmul.f32 %v2259, %v2264
        %v2266 = vmul.f32 %v2260, %v2264
        %v2267 = vlaneseq
        %v2268 = vshrl.u32 %v2267, 7
        %v2269 = vsub.s32 0, %v2268
        %v2270 = vrot.slane %v2218, %v2269
        %v2271 = vadd.f32 %v2265, %v2270
        %v2272 = vadd.f32 %v2266, %v2270
        %v2273 = vpack.c.bf16 %v2272, %v2271
        %v2274 = vlaneseq
        %v2275 = vshrl.u32 %v2274, 7
        %v2276 = vsub.s32 0, %v2275
        %v2277 = vrot.slane %v2223, %v2276
        %v2279 = vrot.slane %v2273, 2
        %v2284 = vunpack.c.l.b16 %v2219
        %v2285 = vunpack.c.l.b16 %v2220
        %v2286 = vunpack.c.l.b16 %v2221
        %v2287 = vunpack.c.l.b16 %v2222
        %v2288 = vpack.c.b16 %v2285, %v2284
        %v2289 = vpack.c.b16 %v2287, %v2286
        %v2293 = vsel %vm619, %v2279, 0
        %2295 = vmatprep.subr.bf16.mxu0 0
        %2296 = vmatpush1.bf16.msra.mxu0 0
        %2297 = vmatprep.subr.bf16.mxu0 0
        %2298 = vmatpush1.bf16.msra.mxu0 0
        %2299 = vmatprep.subr.bf16.mxu0 0
        %2300 = vmatpush1.bf16.msra.mxu0 0
        %2301 = vmatprep.subr.bf16.mxu0 0
        %2302 = vmatpush1.bf16.msra.mxu0 0
        %2303 = vmatprep.subr.bf16.mxu0 0
        %2304 = vmatpush1.bf16.msra.mxu0 0
        %2305 = vmatprep.subr.bf16.mxu0 0
        %2306 = vmatpush1.bf16.msra.mxu0 0
        %2307 = vmatprep.subr.bf16.mxu0 0
        %2308 = vmatpush1.bf16.msra.mxu0 %v2289
        %2309 = vmatprep.subr.bf16.mxu0 0
        %2310 = vmatpush1.bf16.msra.mxu0 %v2288
        %2311 = vmatprep.subr.bf16.mxu0 0
        %2312 = vmatpush2.bf16.msra.mxu0 0
        %2313 = vmatprep.subr.bf16.mxu0 0
        %2314 = vmatpush2.bf16.msra.mxu0 0
        %2315 = vmatprep.subr.bf16.mxu0 0
        %2316 = vmatpush2.bf16.msra.mxu0 0
        %2317 = vmatprep.subr.bf16.mxu0 0
        %2318 = vmatpush2.bf16.msra.mxu0 0
        %2319 = vmatprep.subr.bf16.mxu0 0
        %2320 = vmatpush2.bf16.msra.mxu0 0
        %2321 = vmatprep.subr.bf16.mxu0 0
        %2322 = vmatpush2.bf16.msra.mxu0 0
        %2323 = vmatprep.subr.bf16.mxu0 0
        %2324 = vmatpush2.bf16.msra.mxu0 0
        %2325 = vmatprep.subr.bf16.mxu0 0
        %2326 = vmatpush2.bf16.msra.mxu0 0
        %2327 = vmatprep.mubr.bf16.mxu0 0
        %2328 = vmatmul.mubr.bf16.gmra.mxu0 %v2293
        %v2329 = vpop.f32.mrf.mxu0
        %v2330 = vadd.f32 %v2277, %v2329
        %v2331 = vpop.f32.mrf.mxu0
        %v2332 = vpop.f32.mrf.mxu0
        %v2333 = vpop.f32.mrf.mxu0
        %2334 = vdwg.mxu0
        %v2335 = vmax.f32 %v2330, 0.0
        %v2336 = vpack.c.bf16 %v2335, %v2335
        %v2337 = vlaneseq
        %v2338 = vshrl.u32 %v2337, 7
        %v2339 = vsub.s32 0, %v2338
        %v2340 = vrot.slane %v2232, %v2339
        %v2349 = vunpack.c.l.b16 %v2224
        %v2350 = vunpack.c.l.b16 %v2225
        %v2351 = vunpack.c.l.b16 %v2226
        %v2352 = vunpack.c.l.b16 %v2227
        %v2353 = vunpack.c.l.b16 %v2228
        %v2354 = vunpack.c.l.b16 %v2229
        %v2355 = vunpack.c.l.b16 %v2230
        %v2356 = vunpack.c.l.b16 %v2231
        %v2357 = vpack.c.b16 %v2350, %v2349
        %v2358 = vpack.c.b16 %v2352, %v2351
        %v2359 = vpack.c.b16 %v2354, %v2353
        %v2360 = vpack.c.b16 %v2356, %v2355
        %vm2365 = vcmask 523264
        %v2367 = vsel %vm2365, %v2336, 0
        %2369 = vmatprep.subr.bf16.mxu0 0
        %2370 = vmatpush1.bf16.msra.mxu0 0
        %2371 = vmatprep.subr.bf16.mxu0 0
        %2372 = vmatpush1.bf16.msra.mxu0 0
        %2373 = vmatprep.subr.bf16.mxu0 0
        %2374 = vmatpush1.bf16.msra.mxu0 0
        %2375 = vmatprep.subr.bf16.mxu0 0
        %2376 = vmatpush1.bf16.msra.mxu0 0
        %2377 = vmatprep.subr.bf16.mxu0 0
        %2378 = vmatpush1.bf16.msra.mxu0 %v2360
        %2379 = vmatprep.subr.bf16.mxu0 0
        %2380 = vmatpush1.bf16.msra.mxu0 %v2359
        %2381 = vmatprep.subr.bf16.mxu0 0
        %2382 = vmatpush1.bf16.msra.mxu0 %v2358
        %2383 = vmatprep.subr.bf16.mxu0 0
        %2384 = vmatpush1.bf16.msra.mxu0 %v2357
        %2385 = vmatprep.subr.bf16.mxu0 0
        %2386 = vmatpush2.bf16.msra.mxu0 0
        %2387 = vmatprep.subr.bf16.mxu0 0
        %2388 = vmatpush2.bf16.msra.mxu0 0
        %2389 = vmatprep.subr.bf16.mxu0 0
        %2390 = vmatpush2.bf16.msra.mxu0 0
        %2391 = vmatprep.subr.bf16.mxu0 0
        %2392 = vmatpush2.bf16.msra.mxu0 0
        %2393 = vmatprep.subr.bf16.mxu0 0
        %2394 = vmatpush2.bf16.msra.mxu0 0
        %2395 = vmatprep.subr.bf16.mxu0 0
        %2396 = vmatpush2.bf16.msra.mxu0 0
        %2397 = vmatprep.subr.bf16.mxu0 0
        %2398 = vmatpush2.bf16.msra.mxu0 0
        %2399 = vmatprep.subr.bf16.mxu0 0
        %2400 = vmatpush2.bf16.msra.mxu0 0
        %2401 = vmatprep.mubr.bf16.mxu0 0
        %2402 = vmatmul.mubr.bf16.gmra.mxu0 %v2367
        %v2403 = vpop.f32.mrf.mxu0
        %v2404 = vadd.f32 %v2340, %v2403
        %v2405 = vpop.f32.mrf.mxu0
        %v2406 = vpop.f32.mrf.mxu0
        %v2407 = vpop.f32.mrf.mxu0
        %2408 = vdwg.mxu0
        %v2410 = vrot.slane %v2404, 4
        %v2412 = vadd.f32 %v2214, %v2410
        %v2413 = vadd.f32 %v2215, %v2410
        %v2414 = vld [vmem:[%s2 + $0xe] sm:$0x1]
        %v2415 = vld [vmem:[%s2 + $0xf] sm:$0x1]
        %s2416 = scalar_lea.vmem %s8, 16
        %v2417 = vld [vmem:[%s2416] sm:$0xf]
        %v2418 = vld [vmem:[%s2416 + $0x4] sm:$0xf]
        %v2419 = vld [vmem:[%s2416 + $0x8] sm:$0xf]
        %v2420 = vld [vmem:[%s2416 + $0xc] sm:$0xf]
        %v2421 = vld [vmem:[%s2 + $0x10] sm:$0x1]
        %s2422 = scalar_lea.vmem %s9, 32
        %v2423 = vld [vmem:[%s2422] sm:$0xf]
        %v2424 = vld [vmem:[%s2422 + $0x4] sm:$0xf]
        %v2425 = vld [vmem:[%s2422 + $0x8] sm:$0xf]
        %v2426 = vld [vmem:[%s2422 + $0xc] sm:$0xf]
        %v2427 = vld [vmem:[%s2422 + $0x10] sm:$0xf]
        %v2428 = vld [vmem:[%s2422 + $0x14] sm:$0xf]
        %v2429 = vld [vmem:[%s2422 + $0x18] sm:$0xf]
        %v2430 = vld [vmem:[%s2422 + $0x1c] sm:$0xf]
        %v2431 = vld [vmem:[%s2 + $0x11] sm:$0x1]
        %v2432 = vsel %vm619, %v2216, 0.0
        %2433 = vadd.xlane.f32.xlu0 %v2432
        %v2434 = vpop.xlane.xlu0 %2433
        %v2435 = vmul.f32 %v2434, %v750
        %v2436 = vsub.f32 %v2216, %v2435
        %v2437 = vmul.f32 %v2436, %v2436
        %v2438 = vsel %vm619, %v2437, 0.0
        %2439 = vadd.xlane.f32.xlu0 %v2438
        %v2440 = vpop.xlane.xlu0 %2439
        %v2441 = vmul.f32 %v2440, %v750
        %v2442 = vadd.f32 %v2441, 1e-05
        %v2443 = vrsqrt.pop %v2442
        %v2444 = vmul.f32 %v2436, %v2443
        %v2445 = vlaneseq
        %v2446 = vshrl.u32 %v2445, 7
        %v2447 = vsub.s32 0, %v2446
        %v2448 = vrot.slane %v2414, %v2447
        %v2449 = vmul.f32 %v2444, %v2448
        %v2450 = vlaneseq
        %v2451 = vshrl.u32 %v2450, 7
        %v2452 = vsub.s32 0, %v2451
        %v2453 = vrot.slane %v2415, %v2452
        %v2454 = vadd.f32 %v2449, %v2453
        %v2455 = vpack.c.bf16 %v2454, %v2454
        %v2456 = vlaneseq
        %v2457 = vshrl.u32 %v2456, 7
        %v2458 = vsub.s32 0, %v2457
        %v2459 = vrot.slane %v2421, %v2458
        %v2464 = vunpack.c.l.b16 %v2417
        %v2465 = vunpack.c.l.b16 %v2418
        %v2466 = vunpack.c.l.b16 %v2419
        %v2467 = vunpack.c.l.b16 %v2420
        %v2468 = vpack.c.b16 %v2465, %v2464
        %v2469 = vpack.c.b16 %v2467, %v2466
        %v2473 = vsel %vm619, %v2455, 0
        %2475 = vmatprep.subr.bf16.mxu0 0
        %2476 = vmatpush1.bf16.msra.mxu0 0
        %2477 = vmatprep.subr.bf16.mxu0 0
        %2478 = vmatpush1.bf16.msra.mxu0 0
        %2479 = vmatprep.subr.bf16.mxu0 0
        %2480 = vmatpush1.bf16.msra.mxu0 0
        %2481 = vmatprep.subr.bf16.mxu0 0
        %2482 = vmatpush1.bf16.msra.mxu0 0
        %2483 = vmatprep.subr.bf16.mxu0 0
        %2484 = vmatpush1.bf16.msra.mxu0 0
        %2485 = vmatprep.subr.bf16.mxu0 0
        %2486 = vmatpush1.bf16.msra.mxu0 0
        %2487 = vmatprep.subr.bf16.mxu0 0
        %2488 = vmatpush1.bf16.msra.mxu0 %v2469
        %2489 = vmatprep.subr.bf16.mxu0 0
        %2490 = vmatpush1.bf16.msra.mxu0 %v2468
        %2491 = vmatprep.subr.bf16.mxu0 0
        %2492 = vmatpush2.bf16.msra.mxu0 0
        %2493 = vmatprep.subr.bf16.mxu0 0
        %2494 = vmatpush2.bf16.msra.mxu0 0
        %2495 = vmatprep.subr.bf16.mxu0 0
        %2496 = vmatpush2.bf16.msra.mxu0 0
        %2497 = vmatprep.subr.bf16.mxu0 0
        %2498 = vmatpush2.bf16.msra.mxu0 0
        %2499 = vmatprep.subr.bf16.mxu0 0
        %2500 = vmatpush2.bf16.msra.mxu0 0
        %2501 = vmatprep.subr.bf16.mxu0 0
        %2502 = vmatpush2.bf16.msra.mxu0 0
        %2503 = vmatprep.subr.bf16.mxu0 0
        %2504 = vmatpush2.bf16.msra.mxu0 0
        %2505 = vmatprep.subr.bf16.mxu0 0
        %2506 = vmatpush2.bf16.msra.mxu0 0
        %2507 = vmatprep.mubr.bf16.mxu0 0
        %2508 = vmatmul.mubr.bf16.gmra.mxu0 %v2473
        %v2509 = vpop.f32.mrf.mxu0
        %v2510 = vadd.f32 %v2459, %v2509
        %v2511 = vpop.f32.mrf.mxu0
        %v2512 = vpop.f32.mrf.mxu0
        %v2513 = vpop.f32.mrf.mxu0
        %2514 = vdwg.mxu0
        %v2515 = vmax.f32 %v2510, 0.0
        %v2516 = vpack.c.bf16 %v2515, %v2515
        %v2517 = vlaneseq
        %v2518 = vshrl.u32 %v2517, 7
        %v2519 = vsub.s32 0, %v2518
        %v2520 = vrot.slane %v2431, %v2519
        %v2529 = vunpack.c.l.b16 %v2423
        %v2530 = vunpack.c.l.b16 %v2424
        %v2531 = vunpack.c.l.b16 %v2425
        %v2532 = vunpack.c.l.b16 %v2426
        %v2533 = vunpack.c.l.b16 %v2427
        %v2534 = vunpack.c.l.b16 %v2428
        %v2535 = vunpack.c.l.b16 %v2429
        %v2536 = vunpack.c.l.b16 %v2430
        %v2537 = vpack.c.b16 %v2530, %v2529
        %v2538 = vpack.c.b16 %v2532, %v2531
        %v2539 = vpack.c.b16 %v2534, %v2533
        %v2540 = vpack.c.b16 %v2536, %v2535
        %v2546 = vsel %vm2365, %v2516, 0
        %2548 = vmatprep.subr.bf16.mxu0 0
        %2549 = vmatpush1.bf16.msra.mxu0 0
        %2550 = vmatprep.subr.bf16.mxu0 0
        %2551 = vmatpush1.bf16.msra.mxu0 0
        %2552 = vmatprep.subr.bf16.mxu0 0
        %2553 = vmatpush1.bf16.msra.mxu0 0
        %2554 = vmatprep.subr.bf16.mxu0 0
        %2555 = vmatpush1.bf16.msra.mxu0 0
        %2556 = vmatprep.subr.bf16.mxu0 0
        %2557 = vmatpush1.bf16.msra.mxu0 %v2540
        %2558 = vmatprep.subr.bf16.mxu0 0
        %2559 = vmatpush1.bf16.msra.mxu0 %v2539
        %2560 = vmatprep.subr.bf16.mxu0 0
        %2561 = vmatpush1.bf16.msra.mxu0 %v2538
        %2562 = vmatprep.subr.bf16.mxu0 0
        %2563 = vmatpush1.bf16.msra.mxu0 %v2537
        %2564 = vmatprep.subr.bf16.mxu0 0
        %2565 = vmatpush2.bf16.msra.mxu0 0
        %2566 = vmatprep.subr.bf16.mxu0 0
        %2567 = vmatpush2.bf16.msra.mxu0 0
        %2568 = vmatprep.subr.bf16.mxu0 0
        %2569 = vmatpush2.bf16.msra.mxu0 0
        %2570 = vmatprep.subr.bf16.mxu0 0
        %2571 = vmatpush2.bf16.msra.mxu0 0
        %2572 = vmatprep.subr.bf16.mxu0 0
        %2573 = vmatpush2.bf16.msra.mxu0 0
        %2574 = vmatprep.subr.bf16.mxu0 0
        %2575 = vmatpush2.bf16.msra.mxu0 0
        %2576 = vmatprep.subr.bf16.mxu0 0
        %2577 = vmatpush2.bf16.msra.mxu0 0
        %2578 = vmatprep.subr.bf16.mxu0 0
        %2579 = vmatpush2.bf16.msra.mxu0 0
        %2580 = vmatprep.mubr.bf16.mxu0 0
        %2581 = vmatmul.mubr.bf16.gmra.mxu0 %v2546
        %v2582 = vpop.f32.mrf.mxu0
        %v2583 = vadd.f32 %v2520, %v2582
        %v2584 = vpop.f32.mrf.mxu0
        %v2585 = vpop.f32.mrf.mxu0
        %v2586 = vpop.f32.mrf.mxu0
        %2587 = vdwg.mxu0
        %v2588 = vadd.f32 %v2216, %v2583
        %v2589 = vld [vmem:[%s2 + $0x12] sm:$0x1]
        %v2590 = vlaneseq
        %v2591 = vshrl.u32 %v2590, 7
        %v2592 = vsub.s32 0, %v2591
        %v2593 = vrot.slane %v2589, %v2592
        %v2594 = vmul.f32 %v2412, %v2593
        %v2595 = vmul.f32 %v2413, %v2593
        %v2596 = vld [vmem:[%s2 + $0x13] sm:$0x1]
        %v2597 = vlaneseq
        %v2598 = vshrl.u32 %v2597, 7
        %v2599 = vsub.s32 0, %v2598
        %v2600 = vrot.slane %v2596, %v2599
        %v2601 = vadd.f32 %v2594, %v2600
        %v2602 = vadd.f32 %v2595, %v2600
        %v2603 = vmul.f32 %v2601, 1.702
        %v2604 = vmul.f32 %v2602, 1.702
        %v2605 = vxor.u32 %v2603, 2147483648
        %v2606 = vxor.u32 %v2604, 2147483648
        %v2607 = vmul.f32 %v2605, 1.442695
        %v2608 = vpow.pop %v2607
        %v2609 = vmul.f32 %v2606, 1.442695
        %v2610 = vpow.pop %v2609
        %v2611 = vadd.f32 %v2608, 1.0
        %v2612 = vadd.f32 %v2610, 1.0
        %v2613 = vrcp.pop %v2611
        %v2614 = vmul.f32 1.0, %v2613
        %v2615 = vrcp.pop %v2612
        %v2616 = vmul.f32 1.0, %v2615
        %v2617 = vmul.f32 %v2601, %v2614
        %v2618 = vmul.f32 %v2602, %v2616
        %v2619 = vpack.c.bf16 %v2618, %v2617
        %s2620 = scalar_lea.vmem %s8, 32
        %v2621 = vld [vmem:[%s2620] sm:$0xf]
        %v2622 = vld [vmem:[%s2620 + $0x4] sm:$0xf]
        %v2623 = vld [vmem:[%s2620 + $0x8] sm:$0xf]
        %v2624 = vld [vmem:[%s2620 + $0xc] sm:$0xf]
        %v2625 = vld [vmem:[%s2 + $0x14] sm:$0x1]
        %v2626 = vlaneseq
        %v2627 = vshrl.u32 %v2626, 7
        %v2628 = vsub.s32 0, %v2627
        %v2629 = vrot.slane %v2625, %v2628
        %v2631 = vrot.slane %v2619, 2
        %v2636 = vunpack.c.l.b16 %v2621
        %v2637 = vunpack.c.l.b16 %v2622
        %v2638 = vunpack.c.l.b16 %v2623
        %v2639 = vunpack.c.l.b16 %v2624
        %v2640 = vpack.c.b16 %v2637, %v2636
        %v2641 = vpack.c.b16 %v2639, %v2638
        %v2645 = vsel %vm619, %v2631, 0
        %2647 = vmatprep.subr.bf16.mxu0 0
        %2648 = vmatpush1.bf16.msra.mxu0 0
        %2649 = vmatprep.subr.bf16.mxu0 0
        %2650 = vmatpush1.bf16.msra.mxu0 0
        %2651 = vmatprep.subr.bf16.mxu0 0
        %2652 = vmatpush1.bf16.msra.mxu0 0
        %2653 = vmatprep.subr.bf16.mxu0 0
        %2654 = vmatpush1.bf16.msra.mxu0 0
        %2655 = vmatprep.subr.bf16.mxu0 0
        %2656 = vmatpush1.bf16.msra.mxu0 0
        %2657 = vmatprep.subr.bf16.mxu0 0
        %2658 = vmatpush1.bf16.msra.mxu0 0
        %2659 = vmatprep.subr.bf16.mxu0 0
        %2660 = vmatpush1.bf16.msra.mxu0 %v2641
        %2661 = vmatprep.subr.bf16.mxu0 0
        %2662 = vmatpush1.bf16.msra.mxu0 %v2640
        %2663 = vmatprep.subr.bf16.mxu0 0
        %2664 = vmatpush2.bf16.msra.mxu0 0
        %2665 = vmatprep.subr.bf16.mxu0 0
        %2666 = vmatpush2.bf16.msra.mxu0 0
        %2667 = vmatprep.subr.bf16.mxu0 0
        %2668 = vmatpush2.bf16.msra.mxu0 0
        %2669 = vmatprep.subr.bf16.mxu0 0
        %2670 = vmatpush2.bf16.msra.mxu0 0
        %2671 = vmatprep.subr.bf16.mxu0 0
        %2672 = vmatpush2.bf16.msra.mxu0 0
        %2673 = vmatprep.subr.bf16.mxu0 0
        %2674 = vmatpush2.bf16.msra.mxu0 0
        %2675 = vmatprep.subr.bf16.mxu0 0
        %2676 = vmatpush2.bf16.msra.mxu0 0
        %2677 = vmatprep.subr.bf16.mxu0 0
        %2678 = vmatpush2.bf16.msra.mxu0 0
        %2679 = vmatprep.mubr.bf16.mxu0 0
        %2680 = vmatmul.mubr.bf16.gmra.mxu0 %v2645
        %v2681 = vpop.f32.mrf.mxu0
        %v2682 = vadd.f32 %v2629, %v2681
        %v2683 = vpop.f32.mrf.mxu0
        %v2684 = vpop.f32.mrf.mxu0
        %v2685 = vpop.f32.mrf.mxu0
        %2686 = vdwg.mxu0
        %v2687 = vmul.f32 %v2682, 1.702
        %v2688 = vxor.u32 %v2687, 2147483648
        %v2689 = vmul.f32 %v2688, 1.442695
        %v2690 = vpow.pop %v2689
        %v2691 = vadd.f32 %v2690, 1.0
        %v2692 = vrcp.pop %v2691
        %v2693 = vmul.f32 1.0, %v2692
        %v2694 = vmul.f32 %v2682, %v2693
        %v2695 = vpack.c.bf16 %v2694, %v2694
        %s2696 = scalar_lea.vmem %s9, 64
        %v2697 = vld [vmem:[%s2696] sm:$0xf]
        %v2698 = vld [vmem:[%s2696 + $0x4] sm:$0xf]
        %v2699 = vld [vmem:[%s2696 + $0x8] sm:$0xf]
        %v2700 = vld [vmem:[%s2696 + $0xc] sm:$0xf]
        %v2701 = vld [vmem:[%s2696 + $0x10] sm:$0xf]
        %v2702 = vld [vmem:[%s2696 + $0x14] sm:$0xf]
        %v2703 = vld [vmem:[%s2696 + $0x18] sm:$0xf]
        %v2704 = vld [vmem:[%s2696 + $0x1c] sm:$0xf]
        %v2705 = vld [vmem:[%s2 + $0x15] sm:$0x1]
        %v2706 = vlaneseq
        %v2707 = vshrl.u32 %v2706, 7
        %v2708 = vsub.s32 0, %v2707
        %v2709 = vrot.slane %v2705, %v2708
        %v2718 = vunpack.c.l.b16 %v2697
        %v2719 = vunpack.c.l.b16 %v2698
        %v2720 = vunpack.c.l.b16 %v2699
        %v2721 = vunpack.c.l.b16 %v2700
        %v2722 = vunpack.c.l.b16 %v2701
        %v2723 = vunpack.c.l.b16 %v2702
        %v2724 = vunpack.c.l.b16 %v2703
        %v2725 = vunpack.c.l.b16 %v2704
        %v2726 = vpack.c.b16 %v2719, %v2718
        %v2727 = vpack.c.b16 %v2721, %v2720
        %v2728 = vpack.c.b16 %v2723, %v2722
        %v2729 = vpack.c.b16 %v2725, %v2724
        %v2735 = vsel %vm2365, %v2695, 0
        %2737 = vmatprep.subr.bf16.mxu0 0
        %2738 = vmatpush1.bf16.msra.mxu0 0
        %2739 = vmatprep.subr.bf16.mxu0 0
        %2740 = vmatpush1.bf16.msra.mxu0 0
        %2741 = vmatprep.subr.bf16.mxu0 0
        %2742 = vmatpush1.bf16.msra.mxu0 0
        %2743 = vmatprep.subr.bf16.mxu0 0
        %2744 = vmatpush1.bf16.msra.mxu0 0
        %2745 = vmatprep.subr.bf16.mxu0 0
        %2746 = vmatpush1.bf16.msra.mxu0 %v2729
        %2747 = vmatprep.subr.bf16.mxu0 0
        %2748 = vmatpush1.bf16.msra.mxu0 %v2728
        %2749 = vmatprep.subr.bf16.mxu0 0
        %2750 = vmatpush1.bf16.msra.mxu0 %v2727
        %2751 = vmatprep.subr.bf16.mxu0 0
        %2752 = vmatpush1.bf16.msra.mxu0 %v2726
        %2753 = vmatprep.subr.bf16.mxu0 0
        %2754 = vmatpush2.bf16.msra.mxu0 0
        %2755 = vmatprep.subr.bf16.mxu0 0
        %2756 = vmatpush2.bf16.msra.mxu0 0
        %2757 = vmatprep.subr.bf16.mxu0 0
        %2758 = vmatpush2.bf16.msra.mxu0 0
        %2759 = vmatprep.subr.bf16.mxu0 0
        %2760 = vmatpush2.bf16.msra.mxu0 0
        %2761 = vmatprep.subr.bf16.mxu0 0
        %2762 = vmatpush2.bf16.msra.mxu0 0
        %2763 = vmatprep.subr.bf16.mxu0 0
        %2764 = vmatpush2.bf16.msra.mxu0 0
        %2765 = vmatprep.subr.bf16.mxu0 0
        %2766 = vmatpush2.bf16.msra.mxu0 0
        %2767 = vmatprep.subr.bf16.mxu0 0
        %2768 = vmatpush2.bf16.msra.mxu0 0
        %2769 = vmatprep.mubr.bf16.mxu0 0
        %2770 = vmatmul.mubr.bf16.gmra.mxu0 %v2735
        %v2771 = vpop.f32.mrf.mxu0
        %v2772 = vadd.f32 %v2709, %v2771
        %v2773 = vpop.f32.mrf.mxu0
        %v2774 = vpop.f32.mrf.mxu0
        %v2775 = vpop.f32.mrf.mxu0
        %2776 = vdwg.mxu0
        %v2777 = vmul.f32 %v2772, 0.5
        %v2778 = vmul.f32 %v2772, 0.044715
        %v2779 = vmul.f32 %v2778, %v2772
        %v2780 = vmul.f32 %v2779, %v2772
        %v2781 = vadd.f32 %v2772, %v2780
        %v2782 = vmul.f32 %v2781, 0.7978846
        %v2783 = vtanh.pop %v2782
        %v2784 = vadd.f32 %v2783, 1.0
        %v2785 = vmul.f32 %v2777, %v2784
        %v2786 = vpack.c.bf16 %v2785, %v2785
        %s2787 = scalar_lea.vmem %s10, 32
        %v2788 = vld [vmem:[%s2787] sm:$0xff]
        %v2789 = vld [vmem:[%s2787 + $0x8] sm:$0xff]
        %v2790 = vld [vmem:[%s2787 + $0x10] sm:$0xff]
        %v2791 = vld [vmem:[%s2787 + $0x18] sm:$0xff]
        %s2792 = scalar_lea.vmem %s3, 1
        %v2793 = vld [vmem:[%s2792] ss:$4 sm:$0x3]
        %v2795 = vlaneseq
        %v2796 = vshrl.u32 %v2795, 7
        %v2797 = vsub.s32 0, %v2796
        %v2798 = vrot.slane %v2793, %v2797
        %v2799 = vlaneseq
        %v2800 = vshrl.u32 %v2799, 7
        %v2801 = vsub.s32 1, %v2800
        %v2802 = vrot.slane %v2793, %v2801
        %v2809 = vunpack.c.l.b16 %v2788
        %v2810 = vunpack.c.h.b16 %v2788
        %v2811 = vunpack.c.l.b16 %v2789
        %v2812 = vunpack.c.h.b16 %v2789
        %v2813 = vunpack.c.l.b16 %v2790
        %v2814 = vunpack.c.h.b16 %v2790
        %v2815 = vunpack.c.l.b16 %v2791
        %v2816 = vunpack.c.h.b16 %v2791
        %v2817 = vpack.c.b16 %v2811, %v2809
        %v2818 = vpack.c.b16 %v2812, %v2810
        %v2819 = vpack.c.b16 %v2815, %v2813
        %v2820 = vpack.c.b16 %v2816, %v2814
        %v2826 = vsel %vm619, %v2786, 0
        %2828 = vmatprep.subr.bf16.mxu0 0
        %2829 = vmatpush1.bf16.msra.mxu0 0
        %2830 = vmatprep.subr.bf16.mxu0 0
        %2831 = vmatpush1.bf16.msra.mxu0 0
        %2832 = vmatprep.subr.bf16.mxu0 0
        %2833 = vmatpush1.bf16.msra.mxu0 0
        %2834 = vmatprep.subr.bf16.mxu0 0
        %2835 = vmatpush1.bf16.msra.mxu0 0
        %2836 = vmatprep.subr.bf16.mxu0 0
        %2837 = vmatpush1.bf16.msra.mxu0 0
        %2838 = vmatprep.subr.bf16.mxu0 0
        %2839 = vmatpush1.bf16.msra.mxu0 0
        %2840 = vmatprep.subr.bf16.mxu0 %v2820
        %2841 = vmatpush1.bf16.msra.mxu0 %v2819
        %2842 = vmatprep.subr.bf16.mxu0 %v2818
        %2843 = vmatpush1.bf16.msra.mxu0 %v2817
        %2844 = vmatprep.subr.bf16.mxu0 0
        %2845 = vmatpush2.bf16.msra.mxu0 0
        %2846 = vmatprep.subr.bf16.mxu0 0
        %2847 = vmatpush2.bf16.msra.mxu0 0
        %2848 = vmatprep.subr.bf16.mxu0 0
        %2849 = vmatpush2.bf16.msra.mxu0 0
        %2850 = vmatprep.subr.bf16.mxu0 0
        %2851 = vmatpush2.bf16.msra.mxu0 0
        %2852 = vmatprep.subr.bf16.mxu0 0
        %2853 = vmatpush2.bf16.msra.mxu0 0
        %2854 = vmatprep.subr.bf16.mxu0 0
        %2855 = vmatpush2.bf16.msra.mxu0 0
        %2856 = vmatprep.subr.bf16.mxu0 0
        %2857 = vmatpush2.bf16.msra.mxu0 0
        %2858 = vmatprep.subr.bf16.mxu0 0
        %2859 = vmatpush2.bf16.msra.mxu0 0
        %2860 = vmatprep.mubr.bf16.mxu0 0
        %2861 = vmatmul.mubr.bf16.gmra.mxu0 %v2826
        %v2862 = vpop.f32.mrf.mxu0
        %v2863 = vadd.f32 %v2798, %v2862
        %v2864 = vpop.f32.mrf.mxu0
        %v2865 = vadd.f32 %v2802, %v2864
        %v2866 = vpop.f32.mrf.mxu0
        %v2867 = vpop.f32.mrf.mxu0
        %2868 = vdwg.mxu0
        %v2869 = vpack.c.bf16 %v680, %v680
        %v2870 = vpack.c.bf16 %v681, %v681
        %v2871 = vld [vmem:[#allocation2] sm:$0xff]
        %v2872 = vld [vmem:[#allocation2 + $0x8] sm:$0xff]
        %v2873 = vld [vmem:[#allocation2 + $0x10] sm:$0xff]
        %v2874 = vld [vmem:[#allocation2 + $0x18] sm:$0xff]
        %v2875 = vld [vmem:[#allocation2 + $0x20] sm:$0xff]
        %v2876 = vld [vmem:[#allocation2 + $0x28] sm:$0xff]
        %v2877 = vld [vmem:[#allocation2 + $0x30] sm:$0xff]
        %v2878 = vld [vmem:[#allocation2 + $0x38] sm:$0xff]
        %v2879 = vld [vmem:[#allocation2 + $0x40] sm:$0xff]
        %v2880 = vld [vmem:[#allocation2 + $0x48] sm:$0xff]
        %v2881 = vld [vmem:[#allocation2 + $0x50] sm:$0xff]
        %v2882 = vld [vmem:[#allocation2 + $0x58] sm:$0xff]
        %v2883 = vld [vmem:[#allocation2 + $0x60] sm:$0xff]
        %v2884 = vld [vmem:[#allocation2 + $0x68] sm:$0xff]
        %v2885 = vld [vmem:[#allocation2 + $0x70] sm:$0xff]
        %v2886 = vld [vmem:[#allocation2 + $0x78] sm:$0xff]
        %v2887 = vld [vmem:[#allocation2 + $0x80] sm:$0xff]
        %v2888 = vld [vmem:[#allocation2 + $0x88] sm:$0xff]
        %v2889 = vld [vmem:[#allocation2 + $0x90] sm:$0xff]
        %v2890 = vld [vmem:[#allocation2 + $0x98] sm:$0xff]
        %v2891 = vld [vmem:[#allocation2 + $0xa0] sm:$0xff]
        %v2892 = vld [vmem:[#allocation2 + $0xa8] sm:$0xff]
        %v2893 = vld [vmem:[#allocation2 + $0xb0] sm:$0xff]
        %v2894 = vld [vmem:[#allocation2 + $0xb8] sm:$0xff]
        %v2895 = vld [vmem:[#allocation2 + $0xc0] sm:$0xff]
        %v2896 = vld [vmem:[#allocation2 + $0xc8] sm:$0xff]
        %v2897 = vld [vmem:[#allocation2 + $0xd0] sm:$0xff]
        %v2898 = vld [vmem:[#allocation2 + $0xd8] sm:$0xff]
        %v2899 = vld [vmem:[#allocation2 + $0xe0] sm:$0xff]
        %v2900 = vld [vmem:[#allocation2 + $0xe8] sm:$0xff]
        %v2901 = vld [vmem:[#allocation2 + $0xf0] sm:$0xff]
        %v2902 = vld [vmem:[#allocation2 + $0xf8] sm:$0xff]
        %v2903 = vpack.c.bf16 %v2863, %v2863
        %v2904 = vpack.c.bf16 %v2865, %v2865
        %s2905 = scalar_lea.vmem [#allocation2], 256
        %v2906 = vld [vmem:[%s2905] sm:$0xff]
        %v2907 = vld [vmem:[%s2905 + $0x8] sm:$0xff]
        %v2908 = vld [vmem:[%s2905 + $0x10] sm:$0xff]
        %v2909 = vld [vmem:[%s2905 + $0x18] sm:$0xff]
        %v2910 = vld [vmem:[%s2905 + $0x20] sm:$0xff]
        %v2911 = vld [vmem:[%s2905 + $0x28] sm:$0xff]
        %v2912 = vld [vmem:[%s2905 + $0x30] sm:$0xff]
        %v2913 = vld [vmem:[%s2905 + $0x38] sm:$0xff]
        %v2914 = vld [vmem:[%s2905 + $0x40] sm:$0xff]
        %v2915 = vld [vmem:[%s2905 + $0x48] sm:$0xff]
        %v2916 = vld [vmem:[%s2905 + $0x50] sm:$0xff]
        %v2917 = vld [vmem:[%s2905 + $0x58] sm:$0xff]
        %v2918 = vld [vmem:[%s2905 + $0x60] sm:$0xff]
        %v2919 = vld [vmem:[%s2905 + $0x68] sm:$0xff]
        %v2920 = vld [vmem:[%s2905 + $0x70] sm:$0xff]
        %v2921 = vld [vmem:[%s2905 + $0x78] sm:$0xff]
        %v2922 = vld [vmem:[%s2905 + $0x80] sm:$0xff]
        %v2923 = vld [vmem:[%s2905 + $0x88] sm:$0xff]
        %v2924 = vld [vmem:[%s2905 + $0x90] sm:$0xff]
        %v2925 = vld [vmem:[%s2905 + $0x98] sm:$0xff]
        %v2926 = vld [vmem:[%s2905 + $0xa0] sm:$0xff]
        %v2927 = vld [vmem:[%s2905 + $0xa8] sm:$0xff]
        %v2928 = vld [vmem:[%s2905 + $0xb0] sm:$0xff]
        %v2929 = vld [vmem:[%s2905 + $0xb8] sm:$0xff]
        %v2930 = vld [vmem:[%s2905 + $0xc0] sm:$0xff]
        %v2931 = vld [vmem:[%s2905 + $0xc8] sm:$0xff]
        %v2932 = vld [vmem:[%s2905 + $0xd0] sm:$0xff]
        %v2933 = vld [vmem:[%s2905 + $0xd8] sm:$0xff]
        %v2934 = vld [vmem:[%s2905 + $0xe0] sm:$0xff]
        %v2935 = vld [vmem:[%s2905 + $0xe8] sm:$0xff]
        %v2936 = vld [vmem:[%s2905 + $0xf0] sm:$0xff]
        %v2937 = vld [vmem:[%s2905 + $0xf8] sm:$0xff]
        %v2970 = vunpack.c.l.b16 %v2906
        %v2971 = vunpack.c.h.b16 %v2906
        %v2972 = vunpack.c.l.b16 %v2907
        %v2973 = vunpack.c.h.b16 %v2907
        %v2974 = vunpack.c.l.b16 %v2908
        %v2975 = vunpack.c.h.b16 %v2908
        %v2976 = vunpack.c.l.b16 %v2909
        %v2977 = vunpack.c.h.b16 %v2909
        %v2978 = vunpack.c.l.b16 %v2910
        %v2979 = vunpack.c.h.b16 %v2910
        %v2980 = vunpack.c.l.b16 %v2911
        %v2981 = vunpack.c.h.b16 %v2911
        %v2982 = vunpack.c.l.b16 %v2912
        %v2983 = vunpack.c.h.b16 %v2912
        %v2984 = vunpack.c.l.b16 %v2913
        %v2985 = vunpack.c.h.b16 %v2913
        %v2986 = vunpack.c.l.b16 %v2914
        %v2987 = vunpack.c.h.b16 %v2914
        %v2988 = vunpack.c.l.b16 %v2915
        %v2989 = vunpack.c.h.b16 %v2915
        %v2990 = vunpack.c.l.b16 %v2916
        %v2991 = vunpack.c.h.b16 %v2916
        %v2992 = vunpack.c.l.b16 %v2917
        %v2993 = vunpack.c.h.b16 %v2917
        %v2994 = vunpack.c.l.b16 %v2918
        %v2995 = vunpack.c.h.b16 %v2918
        %v2996 = vunpack.c.l.b16 %v2919
        %v2997 = vunpack.c.h.b16 %v2919
        %v2998 = vunpack.c.l.b16 %v2920
        %v2999 = vunpack.c.h.b16 %v2920
        %v3000 = vunpack.c.l.b16 %v2921
        %v3001 = vunpack.c.h.b16 %v2921
        %v3002 = vunpack.c.l.b16 %v2922
        %v3003 = vunpack.c.h.b16 %v2922
        %v3004 = vunpack.c.l.b16 %v2923
        %v3005 = vunpack.c.h.b16 %v2923
        %v3006 = vunpack.c.l.b16 %v2924
        %v3007 = vunpack.c.h.b16 %v2924
        %v3008 = vunpack.c.l.b16 %v2925
        %v3009 = vunpack.c.h.b16 %v2925
        %v3010 = vunpack.c.l.b16 %v2926
        %v3011 = vunpack.c.h.b16 %v2926
        %v3012 = vunpack.c.l.b16 %v2927
        %v3013 = vunpack.c.h.b16 %v2927
        %v3014 = vunpack.c.l.b16 %v2928
        %v3015 = vunpack.c.h.b16 %v2928
        %v3016 = vunpack.c.l.b16 %v2929
        %v3017 = vunpack.c.h.b16 %v2929
        %v3018 = vunpack.c.l.b16 %v2930
        %v3019 = vunpack.c.h.b16 %v2930
        %v3020 = vunpack.c.l.b16 %v2931
        %v3021 = vunpack.c.h.b16 %v2931
        %v3022 = vunpack.c.l.b16 %v2932
        %v3023 = vunpack.c.h.b16 %v2932
        %v3024 = vunpack.c.l.b16 %v2933
        %v3025 = vunpack.c.h.b16 %v2933
        %v3026 = vunpack.c.l.b16 %v2934
        %v3027 = vunpack.c.h.b16 %v2934
        %v3028 = vunpack.c.l.b16 %v2935
        %v3029 = vunpack.c.h.b16 %v2935
        %v3030 = vunpack.c.l.b16 %v2936
        %v3031 = vunpack.c.h.b16 %v2936
        %v3032 = vunpack.c.l.b16 %v2937
        %v3033 = vunpack.c.h.b16 %v2937
        %v3034 = vpack.c.b16 %v2972, %v2970
        %v3035 = vpack.c.b16 %v2973, %v2971
        %v3036 = vpack.c.b16 %v2976, %v2974
        %v3037 = vpack.c.b16 %v2977, %v2975
        %v3038 = vpack.c.b16 %v2980, %v2978
        %v3039 = vpack.c.b16 %v2981, %v2979
        %v3040 = vpack.c.b16 %v2984, %v2982
        %v3041 = vpack.c.b16 %v2985, %v2983
        %v3042 = vpack.c.b16 %v2988, %v2986
        %v3043 = vpack.c.b16 %v2989, %v2987
        %v3044 = vpack.c.b16 %v2992, %v2990
        %v3045 = vpack.c.b16 %v2993, %v2991
        %v3046 = vpack.c.b16 %v2996, %v2994
        %v3047 = vpack.c.b16 %v2997, %v2995
        %v3048 = vpack.c.b16 %v3000, %v2998
        %v3049 = vpack.c.b16 %v3001, %v2999
        %v3050 = vpack.c.b16 %v3004, %v3002
        %v3051 = vpack.c.b16 %v3005, %v3003
        %v3052 = vpack.c.b16 %v3008, %v3006
        %v3053 = vpack.c.b16 %v3009, %v3007
        %v3054 = vpack.c.b16 %v3012, %v3010
        %v3055 = vpack.c.b16 %v3013, %v3011
        %v3056 = vpack.c.b16 %v3016, %v3014
        %v3057 = vpack.c.b16 %v3017, %v3015
        %v3058 = vpack.c.b16 %v3020, %v3018
        %v3059 = vpack.c.b16 %v3021, %v3019
        %v3060 = vpack.c.b16 %v3024, %v3022
        %v3061 = vpack.c.b16 %v3025, %v3023
        %v3062 = vpack.c.b16 %v3028, %v3026
        %v3063 = vpack.c.b16 %v3029, %v3027
        %v3064 = vpack.c.b16 %v3032, %v3030
        %v3065 = vpack.c.b16 %v3033, %v3031
        %3098 = vmatprep.subr.bf16.mxu0 %v3049
        %3099 = vmatpush1.bf16.msra.mxu0 %v3048
        %3100 = vmatprep.subr.bf16.mxu0 %v3047
        %3101 = vmatpush1.bf16.msra.mxu0 %v3046
        %3102 = vmatprep.subr.bf16.mxu0 %v3045
        %3103 = vmatpush1.bf16.msra.mxu0 %v3044
        %3104 = vmatprep.subr.bf16.mxu0 %v3043
        %3105 = vmatpush1.bf16.msra.mxu0 %v3042
        %3106 = vmatprep.subr.bf16.mxu0 %v3041
        %3107 = vmatpush1.bf16.msra.mxu0 %v3040
        %3108 = vmatprep.subr.bf16.mxu0 %v3039
        %3109 = vmatpush1.bf16.msra.mxu0 %v3038
        %3110 = vmatprep.subr.bf16.mxu0 %v3037
        %3111 = vmatpush1.bf16.msra.mxu0 %v3036
        %3112 = vmatprep.subr.bf16.mxu0 %v3035
        %3113 = vmatpush1.bf16.msra.mxu0 %v3034
        %3114 = vmatprep.subr.bf16.mxu0 %v3065
        %3115 = vmatpush2.bf16.msra.mxu0 %v3064
        %3116 = vmatprep.subr.bf16.mxu0 %v3063
        %3117 = vmatpush2.bf16.msra.mxu0 %v3062
        %3118 = vmatprep.subr.bf16.mxu0 %v3061
        %3119 = vmatpush2.bf16.msra.mxu0 %v3060
        %3120 = vmatprep.subr.bf16.mxu0 %v3059
        %3121 = vmatpush2.bf16.msra.mxu0 %v3058
        %3122 = vmatprep.subr.bf16.mxu0 %v3057
        %3123 = vmatpush2.bf16.msra.mxu0 %v3056
        %3124 = vmatprep.subr.bf16.mxu0 %v3055
        %3125 = vmatpush2.bf16.msra.mxu0 %v3054
        %3126 = vmatprep.subr.bf16.mxu0 %v3053
        %3127 = vmatpush2.bf16.msra.mxu0 %v3052
        %3128 = vmatprep.subr.bf16.mxu0 %v3051
        %3129 = vmatpush2.bf16.msra.mxu0 %v3050
        %3130 = vmatprep.mubr.bf16.mxu0 %v2904
        %3131 = vmatmul.mubr.bf16.gmra.mxu0 %v2903
        %v3132 = vpop.f32.mrf.mxu0
        %v3133 = vadd.f32 0.0, %v3132
        %v3134 = vpop.f32.mrf.mxu0
        %v3135 = vadd.f32 0.0, %v3134
        %v3136 = vpop.f32.mrf.mxu0
        %v3137 = vpop.f32.mrf.mxu0
        %3138 = vdwg.mxu0
        %v3171 = vunpack.c.l.b16 %v2871
        %v3172 = vunpack.c.h.b16 %v2871
        %v3173 = vunpack.c.l.b16 %v2872
        %v3174 = vunpack.c.h.b16 %v2872
        %v3175 = vunpack.c.l.b16 %v2873
        %v3176 = vunpack.c.h.b16 %v2873
        %v3177 = vunpack.c.l.b16 %v2874
        %v3178 = vunpack.c.h.b16 %v2874
        %v3179 = vunpack.c.l.b16 %v2875
        %v3180 = vunpack.c.h.b16 %v2875
        %v3181 = vunpack.c.l.b16 %v2876
        %v3182 = vunpack.c.h.b16 %v2876
        %v3183 = vunpack.c.l.b16 %v2877
        %v3184 = vunpack.c.h.b16 %v2877
        %v3185 = vunpack.c.l.b16 %v2878
        %v3186 = vunpack.c.h.b16 %v2878
        %v3187 = vunpack.c.l.b16 %v2879
        %v3188 = vunpack.c.h.b16 %v2879
        %v3189 = vunpack.c.l.b16 %v2880
        %v3190 = vunpack.c.h.b16 %v2880
        %v3191 = vunpack.c.l.b16 %v2881
        %v3192 = vunpack.c.h.b16 %v2881
        %v3193 = vunpack.c.l.b16 %v2882
        %v3194 = vunpack.c.h.b16 %v2882
        %v3195 = vunpack.c.l.b16 %v2883
        %v3196 = vunpack.c.h.b16 %v2883
        %v3197 = vunpack.c.l.b16 %v2884
        %v3198 = vunpack.c.h.b16 %v2884
        %v3199 = vunpack.c.l.b16 %v2885
        %v3200 = vunpack.c.h.b16 %v2885
        %v3201 = vunpack.c.l.b16 %v2886
        %v3202 = vunpack.c.h.b16 %v2886
        %v3203 = vunpack.c.l.b16 %v2887
        %v3204 = vunpack.c.h.b16 %v2887
        %v3205 = vunpack.c.l.b16 %v2888
        %v3206 = vunpack.c.h.b16 %v2888
        %v3207 = vunpack.c.l.b16 %v2889
        %v3208 = vunpack.c.h.b16 %v2889
        %v3209 = vunpack.c.l.b16 %v2890
        %v3210 = vunpack.c.h.b16 %v2890
        %v3211 = vunpack.c.l.b16 %v2891
        %v3212 = vunpack.c.h.b16 %v2891
        %v3213 = vunpack.c.l.b16 %v2892
        %v3214 = vunpack.c.h.b16 %v2892
        %v3215 = vunpack.c.l.b16 %v2893
        %v3216 = vunpack.c.h.b16 %v2893
        %v3217 = vunpack.c.l.b16 %v2894
        %v3218 = vunpack.c.h.b16 %v2894
        %v3219 = vunpack.c.l.b16 %v2895
        %v3220 = vunpack.c.h.b16 %v2895
        %v3221 = vunpack.c.l.b16 %v2896
        %v3222 = vunpack.c.h.b16 %v2896
        %v3223 = vunpack.c.l.b16 %v2897
        %v3224 = vunpack.c.h.b16 %v2897
        %v3225 = vunpack.c.l.b16 %v2898
        %v3226 = vunpack.c.h.b16 %v2898
        %v3227 = vunpack.c.l.b16 %v2899
        %v3228 = vunpack.c.h.b16 %v2899
        %v3229 = vunpack.c.l.b16 %v2900
        %v3230 = vunpack.c.h.b16 %v2900
        %v3231 = vunpack.c.l.b16 %v2901
        %v3232 = vunpack.c.h.b16 %v2901
        %v3233 = vunpack.c.l.b16 %v2902
        %v3234 = vunpack.c.h.b16 %v2902
        %v3235 = vpack.c.b16 %v3173, %v3171
        %v3236 = vpack.c.b16 %v3174, %v3172
        %v3237 = vpack.c.b16 %v3177, %v3175
        %v3238 = vpack.c.b16 %v3178, %v3176
        %v3239 = vpack.c.b16 %v3181, %v3179
        %v3240 = vpack.c.b16 %v3182, %v3180
        %v3241 = vpack.c.b16 %v3185, %v3183
        %v3242 = vpack.c.b16 %v3186, %v3184
        %v3243 = vpack.c.b16 %v3189, %v3187
        %v3244 = vpack.c.b16 %v3190, %v3188
        %v3245 = vpack.c.b16 %v3193, %v3191
        %v3246 = vpack.c.b16 %v3194, %v3192
        %v3247 = vpack.c.b16 %v3197, %v3195
        %v3248 = vpack.c.b16 %v3198, %v3196
        %v3249 = vpack.c.b16 %v3201, %v3199
        %v3250 = vpack.c.b16 %v3202, %v3200
        %v3251 = vpack.c.b16 %v3205, %v3203
        %v3252 = vpack.c.b16 %v3206, %v3204
        %v3253 = vpack.c.b16 %v3209, %v3207
        %v3254 = vpack.c.b16 %v3210, %v3208
        %v3255 = vpack.c.b16 %v3213, %v3211
        %v3256 = vpack.c.b16 %v3214, %v3212
        %v3257 = vpack.c.b16 %v3217, %v3215
        %v3258 = vpack.c.b16 %v3218, %v3216
        %v3259 = vpack.c.b16 %v3221, %v3219
        %v3260 = vpack.c.b16 %v3222, %v3220
        %v3261 = vpack.c.b16 %v3225, %v3223
        %v3262 = vpack.c.b16 %v3226, %v3224
        %v3263 = vpack.c.b16 %v3229, %v3227
        %v3264 = vpack.c.b16 %v3230, %v3228
        %v3265 = vpack.c.b16 %v3233, %v3231
        %v3266 = vpack.c.b16 %v3234, %v3232
        %3299 = vmatprep.subr.bf16.mxu0 %v3250
        %3300 = vmatpush1.bf16.msra.mxu0 %v3249
        %3301 = vmatprep.subr.bf16.mxu0 %v3248
        %3302 = vmatpush1.bf16.msra.mxu0 %v3247
        %3303 = vmatprep.subr.bf16.mxu0 %v3246
        %3304 = vmatpush1.bf16.msra.mxu0 %v3245
        %3305 = vmatprep.subr.bf16.mxu0 %v3244
        %3306 = vmatpush1.bf16.msra.mxu0 %v3243
        %3307 = vmatprep.subr.bf16.mxu0 %v3242
        %3308 = vmatpush1.bf16.msra.mxu0 %v3241
        %3309 = vmatprep.subr.bf16.mxu0 %v3240
        %3310 = vmatpush1.bf16.msra.mxu0 %v3239
        %3311 = vmatprep.subr.bf16.mxu0 %v3238
        %3312 = vmatpush1.bf16.msra.mxu0 %v3237
        %3313 = vmatprep.subr.bf16.mxu0 %v3236
        %3314 = vmatpush1.bf16.msra.mxu0 %v3235
        %3315 = vmatprep.subr.bf16.mxu0 %v3266
        %3316 = vmatpush2.bf16.msra.mxu0 %v3265
        %3317 = vmatprep.subr.bf16.mxu0 %v3264
        %3318 = vmatpush2.bf16.msra.mxu0 %v3263
        %3319 = vmatprep.subr.bf16.mxu0 %v3262
        %3320 = vmatpush2.bf16.msra.mxu0 %v3261
        %3321 = vmatprep.subr.bf16.mxu0 %v3260
        %3322 = vmatpush2.bf16.msra.mxu0 %v3259
        %3323 = vmatprep.subr.bf16.mxu0 %v3258
        %3324 = vmatpush2.bf16.msra.mxu0 %v3257
        %3325 = vmatprep.subr.bf16.mxu0 %v3256
        %3326 = vmatpush2.bf16.msra.mxu0 %v3255
        %3327 = vmatprep.subr.bf16.mxu0 %v3254
        %3328 = vmatpush2.bf16.msra.mxu0 %v3253
        %3329 = vmatprep.subr.bf16.mxu0 %v3252
        %3330 = vmatpush2.bf16.msra.mxu0 %v3251
        %3331 = vmatprep.mubr.bf16.mxu0 %v2870
        %3332 = vmatmul.mubr.bf16.gmra.mxu0 %v2869
        %v3333 = vpop.f32.mrf.mxu0
        %v3334 = vadd.f32 %v3133, %v3333
        %v3335 = vpop.f32.mrf.mxu0
        %v3336 = vadd.f32 %v3135, %v3335
        %v3337 = vpop.f32.mrf.mxu0
        %v3338 = vpop.f32.mrf.mxu0
        %3339 = vdwg.mxu0
        %s3340 = scalar_lea.vmem %s3, 2
        %v3341 = vld [vmem:[%s3340] ss:$4 sm:$0x3]
        %v3343 = vlaneseq
        %v3344 = vshrl.u32 %v3343, 7
        %v3345 = vsub.s32 0, %v3344
        %v3346 = vrot.slane %v3341, %v3345
        %v3347 = vlaneseq
        %v3348 = vshrl.u32 %v3347, 7
        %v3349 = vsub.s32 1, %v3348
        %v3350 = vrot.slane %v3341, %v3349
        %v3353 = vadd.f32 %v3334, %v3346
        %v3354 = vadd.f32 %v3336, %v3350
        %v3355 = vxor.u32 %v3353, 2147483648
        %v3356 = vxor.u32 %v3354, 2147483648
        %v3357 = vmul.f32 %v3355, 1.442695
        %v3358 = vpow.pop %v3357
        %v3359 = vmul.f32 %v3356, 1.442695
        %v3360 = vpow.pop %v3359
        %v3361 = vadd.f32 %v3358, 1.0
        %v3362 = vadd.f32 %v3360, 1.0
        %v3363 = vrcp.pop %v3361
        %v3364 = vmul.f32 1.0, %v3363
        %v3365 = vrcp.pop %v3362
        %v3366 = vmul.f32 1.0, %v3365
        %v3367 = vmul.f32 %v3364, %v680
        %v3368 = vmul.f32 %v3366, %v681
        %v3369 = vsub.f32 1.0, %v3364
        %v3370 = vsub.f32 1.0, %v3366
        %v3371 = vmul.f32 %v3369, %v2863
        %v3372 = vmul.f32 %v3370, %v2865
        %v3373 = vadd.f32 %v3367, %v3371
        %v3374 = vadd.f32 %v3368, %v3372
        %3375 = vst [vmem:[%s492] sm:$0xff] %v3373
        %3376 = vst [vmem:[%s492 + $0x8] sm:$0xff] %v3374
        %v3377 = vpack.c.bf16 %v2588, %v2588
        %v3378 = vld [vmem:[%s12] sm:$0xf]
        %v3379 = vld [vmem:[%s12 + $0x4] sm:$0xf]
        %v3380 = vld [vmem:[%s12 + $0x8] sm:$0xf]
        %v3381 = vld [vmem:[%s12 + $0xc] sm:$0xf]
        %v3382 = vld [vmem:[%s2 + $0x16] sm:$0x1]
        %v3383 = vlaneseq
        %v3384 = vshrl.u32 %v3383, 7
        %v3385 = vsub.s32 0, %v3384
        %v3386 = vrot.slane %v3382, %v3385
        %v3391 = vunpack.c.l.b16 %v3378
        %v3392 = vunpack.c.l.b16 %v3379
        %v3393 = vunpack.c.l.b16 %v3380
        %v3394 = vunpack.c.l.b16 %v3381
        %v3395 = vpack.c.b16 %v3392, %v3391
        %v3396 = vpack.c.b16 %v3394, %v3393
        %v3400 = vsel %vm619, %v3377, 0
        %3402 = vmatprep.subr.bf16.mxu0 0
        %3403 = vmatpush1.bf16.msra.mxu0 0
        %3404 = vmatprep.subr.bf16.mxu0 0
        %3405 = vmatpush1.bf16.msra.mxu0 0
        %3406 = vmatprep.subr.bf16.mxu0 0
        %3407 = vmatpush1.bf16.msra.mxu0 0
        %3408 = vmatprep.subr.bf16.mxu0 0
        %3409 = vmatpush1.bf16.msra.mxu0 0
        %3410 = vmatprep.subr.bf16.mxu0 0
        %3411 = vmatpush1.bf16.msra.mxu0 0
        %3412 = vmatprep.subr.bf16.mxu0 0
        %3413 = vmatpush1.bf16.msra.mxu0 0
        %3414 = vmatprep.subr.bf16.mxu0 0
        %3415 = vmatpush1.bf16.msra.mxu0 %v3396
        %3416 = vmatprep.subr.bf16.mxu0 0
        %3417 = vmatpush1.bf16.msra.mxu0 %v3395
        %3418 = vmatprep.subr.bf16.mxu0 0
        %3419 = vmatpush2.bf16.msra.mxu0 0
        %3420 = vmatprep.subr.bf16.mxu0 0
        %3421 = vmatpush2.bf16.msra.mxu0 0
        %3422 = vmatprep.subr.bf16.mxu0 0
        %3423 = vmatpush2.bf16.msra.mxu0 0
        %3424 = vmatprep.subr.bf16.mxu0 0
        %3425 = vmatpush2.bf16.msra.mxu0 0
        %3426 = vmatprep.subr.bf16.mxu0 0
        %3427 = vmatpush2.bf16.msra.mxu0 0
        %3428 = vmatprep.subr.bf16.mxu0 0
        %3429 = vmatpush2.bf16.msra.mxu0 0
        %3430 = vmatprep.subr.bf16.mxu0 0
        %3431 = vmatpush2.bf16.msra.mxu0 0
        %3432 = vmatprep.subr.bf16.mxu0 0
        %3433 = vmatpush2.bf16.msra.mxu0 0
        %3434 = vmatprep.mubr.bf16.mxu0 0
        %3435 = vmatmul.mubr.bf16.gmra.mxu0 %v3400
        %v3436 = vpop.f32.mrf.mxu0
        %v3437 = vadd.f32 %v3386, %v3436
        %v3438 = vpop.f32.mrf.mxu0
        %v3439 = vpop.f32.mrf.mxu0
        %v3440 = vpop.f32.mrf.mxu0
        %3441 = vdwg.mxu0
        %v3442 = vmul.f32 %v3437, 0.5
        %v3443 = vmul.f32 %v3437, 0.044715
        %v3444 = vmul.f32 %v3443, %v3437
        %v3445 = vmul.f32 %v3444, %v3437
        %v3446 = vadd.f32 %v3437, %v3445
        %v3447 = vmul.f32 %v3446, 0.7978846
        %v3448 = vtanh.pop %v3447
        %v3449 = vadd.f32 %v3448, 1.0
        %v3450 = vmul.f32 %v3442, %v3449
        %v3451 = vld [vmem:[%s2 + $0x17] sm:$0x1]
        %v3452 = vlaneseq
        %v3453 = vshrl.u32 %v3452, 7
        %v3454 = vsub.s32 0, %v3453
        %v3455 = vrot.slane %v3451, %v3454
        %v3456 = vmul.f32 %v3450, %v3455
        %v3457 = vsel %vm2025, %v3456, 0.0
        %3458 = vadd.xlane.f32.xlu0 %v3457
        %v3459 = vpop.xlane.xlu0 %3458
        %v3460 = vld [vmem:[%s2 + $0x18] sm:$0x1]
        %3462 = vset.pattern.permute.xlu0 0
        %3463 = vperm.xlu0 %3462, %v3460
        %v3464 = vpop.permute.xlu0 %3463
        %v3465 = vlaneseq
        %v3466 = vshrl.u32 %v3465, 7
        %v3467 = vsub.s32 0, %v3466
        %v3468 = vrot.slane %v3464, %v3467
        %v3470 = vadd.f32 %v3459, %v3468
        %3472 = vset.pattern.permute.xlu0 0
        %3473 = vperm.xlu0 %3472, %v3470
        %v3474 = vpop.permute.xlu0 %3473
        %v3475 = vlaneseq
        %v3476 = vand.u32 %v3475, 127
        %v3477 = vlaneseq
        %v3478 = vshrl.u32 %v3477, 7
        %v3479 = vsub.s32 %v3476, %v3478
        %v3480 = vrot.slane %v3474, %v3479
        %vm3482 = vcmask 57344
        %3483 = vst.msk [vmem:[%s498] sm:$0x1] %vm3482, %v3480
        %s3484 = sand.u32 %s324, 1
        %s3485 = scalar_lea.sflag [#allocation4], %s3484
        %s3486 = sand.u32 %s324, 1
        %s3487 = smul.addr %s3486, 16
        %s3488 = scalar_lea.vmem [#allocation5], %s3487
        %s3489 = sand.u32 %s350, 1
        %s3490 = scalar_lea.sflag [#allocation7], %s3489
        %s3491 = sand.u32 %s350, 1
        %s3492 = scalar_lea.vmem [#allocation6], %s3491
        // Predicated region
        $region77: #{rbp_xformer_forward.1} parent=71 // pred_check
          %p3493 = pneg %p334
        $region78: #{rbp_xformer_forward.1} parent=71 // pred_check_branch
          %3495 = sbr.rel (%p3493) target = $region80
        $region79: #{rbp_xformer_forward.1} parent=71 // pred_region
          %s3497 = ssub.s32 256, 256
          %3498 = vsyncadd %s3485, %s3497
          %s3499 = smul.addr %s33, 2
          %s3500 = smul.addr %s3499, 128
          %s3501 = scalar_lea.hbm %s13, %s3500
          %s3503 = sshll.u32 %s3488, 4
          %s3504 = int_to_ptr.vmem [resolvable:$true] %s3503
          %3506 = dma.vmem_to_hbm [thread:$0]  %s3504, 256, %s3501, %s3485
        $region80: #{rbp_xformer_forward.1} parent=71 // pred_fallthru
          _
        // Predicated region
        $region81: #{rbp_xformer_forward.1} parent=71 // pred_check
          %p3507 = pneg %p360
        $region82: #{rbp_xformer_forward.1} parent=71 // pred_check_branch
          %3509 = sbr.rel (%p3507) target = $region84
        $region83: #{rbp_xformer_forward.1} parent=71 // pred_region
          %s3511 = ssub.s32 16, 16
          %3512 = vsyncadd %s3490, %s3511
          %s3513 = smul.addr %s33, 16
          %s3514 = scalar_lea.hbm %s14, %s3513
          %s3516 = sshll.u32 %s3492, 4
          %s3517 = int_to_ptr.vmem [resolvable:$true] %s3516
          %3519 = dma.vmem_to_hbm [thread:$0]  %s3517, 16, %s3514, %s3490
        $region84: #{rbp_xformer_forward.1} parent=71 // pred_fallthru
          _
      $region72: #{rbp_xformer_forward.1} parent=5 // pred_fallthru
        _
      %p3520 = scmp.le.s32.totalorder 2, %s28
      // Predicated region
      $region85: #{rbp_xformer_forward.1} parent=5 // pred_check
        %p3521 = pneg %p3520
      $region86: #{rbp_xformer_forward.1} parent=5 // pred_check_branch
        %3523 = sbr.rel (%p3521) target = $region88
      $region87: #{rbp_xformer_forward.1} parent=5 // pred_region
        %s3524 = ssub.s32 %s28, 2
        // Predicated region
        $region89: #{rbp_xformer_forward.1} parent=87 // pred_check
          %p3525 = pneg %p340
        $region90: #{rbp_xformer_forward.1} parent=87 // pred_check_branch
          %3527 = sbr.rel (%p3525) target = $region92
        $region91: #{rbp_xformer_forward.1} parent=87 // pred_region
          %s3528 = sand.u32 %s325, 1
          %s3529 = scalar_lea.sflag [#allocation4], %s3528
          %s3530 = sand.u32 %s325, 1
          %s3531 = smul.addr %s3530, 16
          %s3532 = scalar_lea.vmem [#allocation5], %s3531
          %3533 = dma.done %s3529, 256
        $region92: #{rbp_xformer_forward.1} parent=87 // pred_fallthru
          _
        // Predicated region
        $region93: #{rbp_xformer_forward.1} parent=87 // pred_check
          %p3534 = pneg %p366
        $region94: #{rbp_xformer_forward.1} parent=87 // pred_check_branch
          %3536 = sbr.rel (%p3534) target = $region96
        $region95: #{rbp_xformer_forward.1} parent=87 // pred_region
          %s3537 = sand.u32 %s351, 1
          %s3538 = scalar_lea.sflag [#allocation7], %s3537
          %s3539 = sand.u32 %s351, 1
          %s3540 = scalar_lea.vmem [#allocation6], %s3539
          %3541 = dma.done %s3538, 16
        $region96: #{rbp_xformer_forward.1} parent=87 // pred_fallthru
          _
      $region88: #{rbp_xformer_forward.1} parent=5 // pred_fallthru
        _
    $region6: #{rbp_xformer_forward.1} parent=1 // loop_footer
      %s32 = sadd.s32 1, %s28
    $region7: #{rbp_xformer_forward.1} parent=1 // loop_footer_branch
      %27 = sbr.rel target = $region3
    $region8: #{rbp_xformer_forward.1} parent=1 // loop_exit
      _
    %3542 = vsyncpa [#allocation3], 1
    %s3543 = scalar_lea.sflag [#allocation3], 1
    %3544 = vsyncpa %s3543, 1
    %3545 = vsyncpa [#allocation4], 1
    %s3546 = scalar_lea.sflag [#allocation4], 1
    %3547 = vsyncpa %s3546, 1
    %3548 = vsyncpa [#allocation7], 1
    %s3549 = scalar_lea.sflag [#allocation7], 1
    %3550 = vsyncpa %s3549, 1

</llo_original>
